<compile_context>
chip_gen: v7x
topology: tpu7x:2x2x1
jax: 0.10.0
libtpu: 0.0.40
codegen_flags: <defaults>
</compile_context>

<pallas_src>
import functools

import jax
import jax.numpy as jnp
from jax.experimental import pallas as pl
from jax.experimental.pallas import tpu as pltpu


LANE = 128


def _round_up(x, m):
    return (x + m - 1) // m * m


def _pad_last(a, target):
    pad = target - a.shape[-1]
    if pad == 0:
        return a
    cfg = [(0, 0)] * (a.ndim - 1) + [(0, pad)]
    return jnp.pad(a, cfg)


# ----------------------------------------------------------------------------
# one-time parameter preparation: BN folding, channel padding, weight reshape
# ----------------------------------------------------------------------------
def prepare_block_params(params, *, compute_dtype=None, lane_multiple=LANE,
                         eps=1e-5):
    """Fold eval-mode BatchNorm into (scale, shift), zero-pad all channel dims
    to a multiple of `lane_multiple`, fold kw into the matmul K dimension and
    cast to the MXU compute dtype.  Done ONCE, outside the per-step forward."""
    w1 = params["w1_hwio"]                       # (3, 3, Cin,    planes)
    w2 = params["w2_hwio"]                       # (3, 3, planes, planes)
    cin, planes = w1.shape[2], w1.shape[3]
    cdt = jnp.dtype(compute_dtype) if compute_dtype is not None else w1.dtype
    cin_p = _round_up(cin, lane_multiple)
    planes_p = _round_up(planes, lane_multiple)

    def fold_bn(bn, c_p):
        gamma, beta, mean, var = bn
        scale = gamma.astype(jnp.float32) / jnp.sqrt(var.astype(jnp.float32) + eps)
        shift = beta.astype(jnp.float32) - mean.astype(jnp.float32) * scale
        scale = _pad_last(scale, c_p).reshape(1, c_p).astype(cdt)
        shift = _pad_last(shift, c_p).reshape(1, c_p).astype(cdt)
        return scale, shift

    def fold_w3x3(w, ci_p, co_p):
        ci, co = w.shape[2], w.shape[3]
        w = jnp.pad(w, ((0, 0), (0, 0), (0, ci_p - ci), (0, co_p - co)))
        # (3, 3, ci_p, co_p) -> (3, 3*ci_p, co_p): kw folded into K.
        return w.reshape(3, 3 * ci_p, co_p).astype(cdt)

    prepped = {
        "bn1": fold_bn(params["bn1"], cin_p),
        "bn2": fold_bn(params["bn2"], planes_p),
        "w1": fold_w3x3(w1, cin_p, planes_p),
        "w2": fold_w3x3(w2, planes_p, planes_p),
    }
    if "ws_io" in params:
        ws = params["ws_io"]                                   # (Cin, planes)
        ws = jnp.pad(ws, ((0, cin_p - cin), (0, planes_p - planes)))
        prepped["ws"] = ws.astype(cdt)
    return prepped


# ----------------------------------------------------------------------------
# fused kernel: BN(eval) + ReLU + 3x3 conv (pad 1, stride s)
#               [+ fused identity / strided 1x1-projection shortcut add]
# ----------------------------------------------------------------------------
def _make_bn_relu_conv3x3_kernel(H, W, Cin, tco, s, shortcut, cdt, out_dtype):
    Ho, Wo = H // s, W // s
    K3 = 3 * Cin

    def kernel(*refs):
        if shortcut is None:
            x_ref, scale_ref, shift_ref, w_ref, o_ref = refs
            res_ref = ws_ref = None
        elif shortcut == "identity":
            x_ref, scale_ref, shift_ref, w_ref, res_ref, o_ref = refs
            ws_ref = None
        else:                                    # "project"
            x_ref, scale_ref, shift_ref, w_ref, res_ref, ws_ref, o_ref = refs

        # ---- fused BatchNorm(eval) + ReLU in the MXU compute dtype ----------
        a = jnp.maximum(x_ref[0].astype(cdt) * scale_ref[...] + shift_ref[...],
                        0.0)                                   # (H, W, Cin)

        # ---- fold the 3 kw taps into K, at the strided output columns only --
        # slab[h, wo, kw*Cin:(kw+1)*Cin] == x_pad[h + 1, wo*s + kw]   (pad = 1)
        zcol = jnp.zeros((H, 1, Cin), cdt)
        if s == 1:
            left = jnp.concatenate([zcol, a[:, :W - 1, :]], axis=1)     # kw = 0
            right = jnp.concatenate([a[:, 1:, :], zcol], axis=1)        # kw = 2
            slab = jnp.concatenate([left, a, right], axis=-1)           # (H, W, 3Cin)
        else:
            a4 = a.reshape(H, Wo, s, Cin)        # single reshape-based subsample
            center = a4[:, :, 0, :]              # cols wo*s
            right = a4[:, :, 1, :]               # cols wo*s + 1
            lm1 = a4[:, :, s - 1, :]             # cols wo*s + (s - 1)
            left = jnp.concatenate([zcol, lm1[:, :Wo - 1, :]], axis=1)  # cols wo*s - 1
            slab = jnp.concatenate([left, center, right], axis=-1)      # (H, Wo, 3Cin)

        # ---- three fat MXU matmuls (one per kh), K = 3*Cin, M = Ho*Wo --------
        zrow = jnp.zeros((1, Wo, K3), cdt)
        acc = None
        for kh in range(3):
            if kh == 0:                          # lhs[h] = slab[h - 1]
                g = jnp.concatenate([zrow, slab[:H - 1]], axis=0)
            elif kh == 1:                        # lhs[h] = slab[h]
                g = slab
            else:                                # lhs[h] = slab[h + 1]
                g = jnp.concatenate([slab[1:], zrow], axis=0)
            if s > 1:                            # keep rows ho*s (leading-dim split)
                g = g.reshape(Ho, s, Wo, K3)[:, 0]
            term = jnp.dot(g.reshape(Ho * Wo, K3), w_ref[kh],
                           preferred_element_type=jnp.float32)
            acc = term if acc is None else acc + term     # init from 1st matmul
        out = acc.reshape(Ho, Wo, tco)

        # ---- fused shortcut / residual add -----------------------------------
        if shortcut == "identity":
            out = out + res_ref[0].astype(jnp.float32)
        elif shortcut == "project":
            cres = ws_ref.shape[0]
            if s > 1:
                # residual was DMA'd row-strided; picking column offset 0 is a
                # free lane slice because cres is 128-padded.
                r = res_ref[...][0, :, 0, :, :cres]                   # (Ho, Wo, cres)
            else:
                r = res_ref[0]                                        # (H, W, cres)
            proj = jnp.dot(r.reshape(Ho * Wo, cres).astype(cdt), ws_ref[...],
                           preferred_element_type=jnp.float32)
            out = out + proj.reshape(Ho, Wo, tco)

        o_ref[...] = out.reshape(1, Ho, Wo, tco).astype(out_dtype)

    return kernel


def _bn_relu_conv3x3(x_nhwc, scale, shift, wk, *, stride=1, shortcut=None,
                     residual=None, ws=None, out_dtype=None):
    """One fused pallas_call:  conv3x3( relu(bn(x)) )  [+ shortcut add].
    All channel dims must already be 128-padded (see prepare_block_params)."""
    N, H, W, Cin = x_nhwc.shape
    Cout = wk.shape[-1]
    cdt = wk.dtype
    out_dtype = x_nhwc.dtype if out_dtype is None else jnp.dtype(out_dtype)
    s = int(stride)
    assert Cin % LANE == 0 and Cout % LANE == 0, "channels must be 128-padded"
    assert wk.shape == (3, 3 * Cin, Cout)
    if s > 1:
        assert H % s == 0 and W % s == 0, "spatial dims must divide the stride"
    Ho, Wo = H // s, W // s

    # output-channel grid axis: 128/256-wide lane-dense blocks
    tco = 256 if Cout % 256 == 0 else 128
    n_co = Cout // tco

    kernel = _make_bn_relu_conv3x3_kernel(H, W, Cin, tco, s, shortcut, cdt,
                                          out_dtype)

    args = [x_nhwc, scale, shift, wk]
    in_specs = [
        pl.BlockSpec((1, H, W, Cin), lambda n, co: (n, 0, 0, 0)),    # image tile
        pl.BlockSpec((1, Cin), lambda n, co: (0, 0)),                # BN scale (resident)
        pl.BlockSpec((1, Cin), lambda n, co: (0, 0)),                # BN shift (resident)
        pl.BlockSpec((3, 3 * Cin, tco), lambda n, co: (0, 0, co)),   # weight Cout block
    ]
    res_block_elems = 0
    cres = 0
    if shortcut == "identity":
        assert s == 1 and residual.shape[-1] == Cout
        args.append(residual)
        in_specs.append(pl.BlockSpec((1, H, W, tco), lambda n, co: (n, 0, 0, co)))
        res_block_elems = H * W * tco
    elif shortcut == "project":
        cres = residual.shape[-1]
        if s > 1:
            # Row-strided residual DMA: fetch only rows h*s (cuts HBM traffic
            # by s); the column subsample is a free lane slice in-kernel.
            res_in = residual.reshape(N, Ho, s, Wo, s * cres)
            in_specs.append(pl.BlockSpec((1, Ho, 1, Wo, s * cres),
                                         lambda n, co: (n, 0, 0, 0, 0)))
            res_block_elems = Ho * Wo * s * cres
        else:
            res_in = residual
            in_specs.append(pl.BlockSpec((1, H, W, cres),
                                         lambda n, co: (n, 0, 0, 0)))
            res_block_elems = H * W * cres
        args.append(res_in)
        args.append(ws)
        in_specs.append(pl.BlockSpec((cres, tco), lambda n, co: (0, co)))

    # VMEM budget from the actual per-step tiles (double-buffered grid operands
    # + in-kernel temporaries), clamped to be safe on v7x's 64 MiB.
    itc = jnp.dtype(cdt).itemsize
    est = (2 * H * W * Cin * x_nhwc.dtype.itemsize               # input tile
           + 2 * 9 * Cin * tco * itc                             # weight block
           + 2 * Ho * Wo * tco * jnp.dtype(out_dtype).itemsize   # output tile
           + H * W * Cin * itc                                   # bn+relu activation
           + H * Wo * 3 * Cin * itc                              # kw-folded slab
           + 2 * Ho * Wo * 3 * Cin * itc                         # shifted lhs temps
           + 2 * Ho * Wo * tco * 4)                              # f32 acc / out
    if shortcut is not None:
        est += 2 * res_block_elems * residual.dtype.itemsize
        if shortcut == "project":
            est += 2 * cres * tco * itc
    vmem_limit = int(min(max(est * 5 // 4, 32 * 1024 * 1024), 64 * 1024 * 1024))

    return pl.pallas_call(
        kernel,
        out_shape=jax.ShapeDtypeStruct((N, Ho, Wo, Cout), out_dtype),
        grid=(N, n_co),
        in_specs=in_specs,
        out_specs=pl.BlockSpec((1, Ho, Wo, tco), lambda n, co: (n, 0, 0, co)),
        compiler_params=pltpu.CompilerParams(
            dimension_semantics=("parallel", "parallel"),
            vmem_limit_bytes=vmem_limit,
        ),
    )(*args)


# ----------------------------------------------------------------------------
# WideBasicBlock forward (eval mode), NCHW in / NCHW out
# ----------------------------------------------------------------------------
@functools.partial(jax.jit, static_argnames=("planes", "stride"))
def wide_basic_block(x_nchw, params, *, planes, stride=1):
    """`params` must come from prepare_block_params.

    TODO(synk): in a full WRN keep activations NHWC and 128-padded ACROSS
    blocks so the transposes and channel pad/slice below run once at network
    entry/exit instead of per block."""
    x = jnp.transpose(x_nchw, (0, 2, 3, 1))                  # NCHW -> NHWC
    cin_p = params["w1"].shape[1] // 3
    x_p = _pad_last(x, cin_p)

    scale1, shift1 = params["bn1"]
    scale2, shift2 = params["bn2"]

    # conv1( relu(bn1(x)) )  -- one fused kernel (stride 1).
    # TODO(synk): pass out_dtype=jnp.bfloat16 here on v5e/v6e to halve the HBM
    #             traffic of the intermediate h (or fuse A+B into one kernel).
    h = _bn_relu_conv3x3(x_p, scale1, shift1, params["w1"], stride=1)

    # dropout: eval-mode identity.
    # TODO(synk): train-mode dropout via pltpu.prng_seed / pltpu.prng_random_bits.

    # conv2( relu(bn2(h)) ) + shortcut(x)  -- one fused kernel (incl. shortcut)
    if "ws" in params:                    # stride != 1 or in_planes != planes
        out = _bn_relu_conv3x3(h, scale2, shift2, params["w2"], stride=stride,
                               shortcut="project", residual=x_p, ws=params["ws"])
    else:
        out = _bn_relu_conv3x3(h, scale2, shift2, params["w2"], stride=stride,
                               shortcut="identity", residual=x_p)

    out = out[..., :planes]                                  # drop channel pad
    return jnp.transpose(out, (0, 3, 1, 2))                  # NHWC -> NCHW


# ----------------------------------------------------------------------------
# Pure-JAX (lax.conv) reference for verification
# ----------------------------------------------------------------------------
def reference(x, p, stride):
    eps = 1e-5
    dn = ("NCHW", "OIHW", "NCHW")

    def bn(h, bp):
        g, b, m, v = bp
        sc = g / jnp.sqrt(v + eps)
        return ((h - m[None, :, None, None]) * sc[None, :, None, None]
                + b[None, :, None, None])

    h = jax.nn.relu(bn(x, p["bn1"]))
    h = jax.lax.conv_general_dilated(h, p["w1"], (1, 1), ((1, 1), (1, 1)),
                                     dimension_numbers=dn)
    h = jax.nn.relu(bn(h, p["bn2"]))
    h = jax.lax.conv_general_dilated(h, p["w2"], (stride, stride),
                                     ((1, 1), (1, 1)), dimension_numbers=dn)
    if "ws" in p:
        sc = jax.lax.conv_general_dilated(x, p["ws"], (stride, stride),
                                          ((0, 0), (0, 0)), dimension_numbers=dn)
    else:
        sc = x
    return h + sc


# ----------------------------------------------------------------------------
# deterministic test harness
# ----------------------------------------------------------------------------
def _make_case(key, in_planes, planes, stride, N=2, H=16, W=16,
               dtype=jnp.float32):
    ks = jax.random.split(key, 6)
    x = jax.random.normal(ks[0], (N, in_planes, H, W), dtype)

    def bn_params(k, c):
        k0, k1, k2, k3 = jax.random.split(k, 4)
        gamma = 1.0 + 0.1 * jax.random.normal(k0, (c,), dtype)
        beta = 0.1 * jax.random.normal(k1, (c,), dtype)
        mean = 0.1 * jax.random.normal(k2, (c,), dtype)
        var = 0.9 + 0.1 * jnp.abs(jax.random.normal(k3, (c,), dtype))
        return (gamma, beta, mean, var)

    bn1 = bn_params(ks[1], in_planes)
    bn2 = bn_params(ks[2], planes)
    w1 = 0.1 * jax.random.normal(ks[3], (planes, in_planes, 3, 3), dtype)  # OIHW
    w2 = 0.1 * jax.random.normal(ks[4], (planes, planes, 3, 3), dtype)

    raw = {"bn1": bn1, "bn2": bn2,
           "w1_hwio": jnp.transpose(w1, (2, 3, 1, 0)),
           "w2_hwio": jnp.transpose(w2, (2, 3, 1, 0))}
    ref_p = {"bn1": bn1, "bn2": bn2, "w1": w1, "w2": w2}
    if stride != 1 or in_planes != planes:
        ws = 0.1 * jax.random.normal(ks[5], (planes, in_planes, 1, 1), dtype)
        raw["ws_io"] = ws[:, :, 0, 0].T                      # (Cin, Cout)
        ref_p["ws"] = ws
    return x, raw, ref_p


if __name__ == "__main__":
    key = jax.random.PRNGKey(0)
    cases = [
        # (in_planes, planes, stride)
        (4, 8, 1),   # projection shortcut (channel expansion)
        (8, 8, 1),   # identity shortcut
        (4, 8, 2),   # strided conv2 + fused strided 1x1 projection shortcut
    ]
    for idx, (cin, cout, stride) in enumerate(cases):
        x, raw_params, ref_p = _make_case(jax.random.fold_in(key, idx),
                                          cin, cout, stride)
        params = prepare_block_params(raw_params)    # once, outside the forward
        out = jax.block_until_ready(
            wide_basic_block(x, params, planes=cout, stride=stride))
        ref = jax.block_until_ready(reference(x, ref_p, stride))
        assert out.shape == ref.shape, (out.shape, ref.shape)
        err = float(jnp.max(jnp.abs(out - ref)))
        assert jnp.allclose(out, ref, rtol=1e-4, atol=2e-4), \
            (cin, cout, stride, err)

    print("KERNEL_OK")
</pallas_src>

<mosaic_0001>
module attributes {stable_mosaic.version = 11 : i64} {
  func.func @kernel(%arg0: i32, %arg1: i32, %arg2: memref<1x16x16x128xf32, #tpu.memory_space<vmem>>, %arg3: memref<1x128xf32, #tpu.memory_space<vmem>>, %arg4: memref<1x128xf32, #tpu.memory_space<vmem>>, %arg5: memref<3x384x128xf32, #tpu.memory_space<vmem>>, %arg6: memref<1x16x16x128xf32, #tpu.memory_space<vmem>>, %arg7: memref<128x128xf32, #tpu.memory_space<vmem>>, %arg8: memref<1x16x16x128xf32, #tpu.memory_space<vmem>>) attributes {dimension_semantics = [#tpu.dimension_semantics<parallel>, #tpu.dimension_semantics<parallel>], iteration_bounds = array<i64: 2, 1>, scalar_prefetch = 0 : i64, scratch_operands = 0 : i64, tpu.core_type = #tpu.core_type<tc>, window_params = [{transform_indices = @transform_0, window_bounds = array<i64: 1, 16, 16, 128>}, {pipeline_mode = #tpu.pipeline_mode<synchronous>, transform_indices = @transform_1, window_bounds = array<i64: 1, 128>}, {pipeline_mode = #tpu.pipeline_mode<synchronous>, transform_indices = @transform_2, window_bounds = array<i64: 1, 128>}, {transform_indices = @transform_3, window_bounds = array<i64: 3, 384, 128>}, {transform_indices = @transform_4, window_bounds = array<i64: 1, 16, 16, 128>}, {transform_indices = @transform_5, window_bounds = array<i64: 128, 128>}, {transform_indices = @transform_6, window_bounds = array<i64: 1, 16, 16, 128>}]} {
    %c0 = arith.constant 0 : index
    %c0_0 = arith.constant 0 : index
    %c0_1 = arith.constant 0 : index
    %c0_2 = arith.constant 0 : index
    %0 = vector.load %arg2[%c0, %c0_0, %c0_1, %c0_2] : memref<1x16x16x128xf32, #tpu.memory_space<vmem>>, vector<1x16x16x128xf32>
    %1 = vector.shape_cast %0 : vector<1x16x16x128xf32> to vector<16x16x128xf32>
    %c0_3 = arith.constant 0 : index
    %c0_4 = arith.constant 0 : index
    %2 = vector.load %arg3[%c0_3, %c0_4] : memref<1x128xf32, #tpu.memory_space<vmem>>, vector<1x128xf32>
    %3 = vector.shape_cast %2 : vector<1x128xf32> to vector<1x1x128xf32>
    %4 = vector.broadcast %3 : vector<1x1x128xf32> to vector<16x16x128xf32>
    %5 = arith.mulf %1, %4 : vector<16x16x128xf32>
    %c0_5 = arith.constant 0 : index
    %c0_6 = arith.constant 0 : index
    %6 = vector.load %arg4[%c0_5, %c0_6] : memref<1x128xf32, #tpu.memory_space<vmem>>, vector<1x128xf32>
    %7 = vector.shape_cast %6 : vector<1x128xf32> to vector<1x1x128xf32>
    %8 = vector.broadcast %7 : vector<1x1x128xf32> to vector<16x16x128xf32>
    %9 = arith.addf %5, %8 : vector<16x16x128xf32>
    %cst = arith.constant 0.000000e+00 : f32
    %10 = vector.broadcast %cst : f32 to vector<16x16x128xf32>
    %11 = arith.maximumf %9, %10 : vector<16x16x128xf32>
    %cst_7 = arith.constant 0.000000e+00 : f32
    %12 = vector.broadcast %cst_7 : f32 to vector<16x1x128xf32>
    %13 = vector.extract_strided_slice %11 {offsets = [0, 0, 0], sizes = [16, 15, 128], strides = [1, 1, 1]} : vector<16x16x128xf32> to vector<16x15x128xf32>
    %14 = tpu.concatenate %12, %13 in 1 : vector<16x1x128xf32>, vector<16x15x128xf32> -> vector<16x16x128xf32>
    %15 = vector.extract_strided_slice %11 {offsets = [0, 1, 0], sizes = [16, 15, 128], strides = [1, 1, 1]} : vector<16x16x128xf32> to vector<16x15x128xf32>
    %16 = tpu.concatenate %15, %12 in 1 : vector<16x15x128xf32>, vector<16x1x128xf32> -> vector<16x16x128xf32>
    %17 = tpu.concatenate %14, %11, %16 in 2 : vector<16x16x128xf32>, vector<16x16x128xf32>, vector<16x16x128xf32> -> vector<16x16x384xf32>
    %cst_8 = arith.constant 0.000000e+00 : f32
    %18 = vector.broadcast %cst_8 : f32 to vector<1x16x384xf32>
    %19 = vector.extract_strided_slice %17 {offsets = [0, 0, 0], sizes = [15, 16, 384], strides = [1, 1, 1]} : vector<16x16x384xf32> to vector<15x16x384xf32>
    %20 = tpu.concatenate %18, %19 in 0 : vector<1x16x384xf32>, vector<15x16x384xf32> -> vector<16x16x384xf32>
    %21 = vector.shape_cast %20 : vector<16x16x384xf32> to vector<256x384xf32>
    %c0_9 = arith.constant 0 : index
    %c0_10 = arith.constant 0 : index
    %c0_11 = arith.constant 0 : index
    %22 = vector.load %arg5[%c0_9, %c0_10, %c0_11] : memref<3x384x128xf32, #tpu.memory_space<vmem>>, vector<1x384x128xf32>
    %23 = vector.shape_cast %22 : vector<1x384x128xf32> to vector<384x128xf32>
    %cst_12 = arith.constant dense<0.000000e+00> : vector<256x128xf32>
    %24 = tpu.matmul %21, %23, %cst_12 {dimension_numbers = #tpu.dot_dimension_numbers<[1], [0], [0], [1], [0, 0, 1, 1], [], []>} : vector<256x384xf32>, vector<384x128xf32>, vector<256x128xf32> -> vector<256x128xf32>
    %25 = vector.shape_cast %17 : vector<16x16x384xf32> to vector<256x384xf32>
    %c1 = arith.constant 1 : index
    %c0_13 = arith.constant 0 : index
    %c0_14 = arith.constant 0 : index
    %26 = vector.load %arg5[%c1, %c0_13, %c0_14] : memref<3x384x128xf32, #tpu.memory_space<vmem>>, vector<1x384x128xf32>
    %27 = vector.shape_cast %26 : vector<1x384x128xf32> to vector<384x128xf32>
    %cst_15 = arith.constant dense<0.000000e+00> : vector<256x128xf32>
    %28 = tpu.matmul %25, %27, %cst_15 {dimension_numbers = #tpu.dot_dimension_numbers<[1], [0], [0], [1], [0, 0, 1, 1], [], []>} : vector<256x384xf32>, vector<384x128xf32>, vector<256x128xf32> -> vector<256x128xf32>
    %29 = arith.addf %24, %28 : vector<256x128xf32>
    %30 = vector.extract_strided_slice %17 {offsets = [1, 0, 0], sizes = [15, 16, 384], strides = [1, 1, 1]} : vector<16x16x384xf32> to vector<15x16x384xf32>
    %31 = tpu.concatenate %30, %18 in 0 : vector<15x16x384xf32>, vector<1x16x384xf32> -> vector<16x16x384xf32>
    %32 = vector.shape_cast %31 : vector<16x16x384xf32> to vector<256x384xf32>
    %c2 = arith.constant 2 : index
    %c0_16 = arith.constant 0 : index
    %c0_17 = arith.constant 0 : index
    %33 = vector.load %arg5[%c2, %c0_16, %c0_17] : memref<3x384x128xf32, #tpu.memory_space<vmem>>, vector<1x384x128xf32>
    %34 = vector.shape_cast %33 : vector<1x384x128xf32> to vector<384x128xf32>
    %cst_18 = arith.constant dense<0.000000e+00> : vector<256x128xf32>
    %35 = tpu.matmul %32, %34, %cst_18 {dimension_numbers = #tpu.dot_dimension_numbers<[1], [0], [0], [1], [0, 0, 1, 1], [], []>} : vector<256x384xf32>, vector<384x128xf32>, vector<256x128xf32> -> vector<256x128xf32>
    %36 = arith.addf %29, %35 : vector<256x128xf32>
    %37 = vector.shape_cast %36 : vector<256x128xf32> to vector<16x16x128xf32>
    %c0_19 = arith.constant 0 : index
    %c0_20 = arith.constant 0 : index
    %c0_21 = arith.constant 0 : index
    %c0_22 = arith.constant 0 : index
    %38 = vector.load %arg6[%c0_19, %c0_20, %c0_21, %c0_22] : memref<1x16x16x128xf32, #tpu.memory_space<vmem>>, vector<1x16x16x128xf32>
    %39 = vector.shape_cast %38 : vector<1x16x16x128xf32> to vector<16x16x128xf32>
    %40 = vector.shape_cast %39 : vector<16x16x128xf32> to vector<256x128xf32>
    %c0_23 = arith.constant 0 : index
    %c0_24 = arith.constant 0 : index
    %41 = vector.load %arg7[%c0_23, %c0_24] : memref<128x128xf32, #tpu.memory_space<vmem>>, vector<128x128xf32>
    %cst_25 = arith.constant dense<0.000000e+00> : vector<256x128xf32>
    %42 = tpu.matmul %40, %41, %cst_25 {dimension_numbers = #tpu.dot_dimension_numbers<[1], [0], [0], [1], [0, 0, 1, 1], [], []>} : vector<256x128xf32>, vector<128x128xf32>, vector<256x128xf32> -> vector<256x128xf32>
    %43 = vector.shape_cast %42 : vector<256x128xf32> to vector<16x16x128xf32>
    %44 = arith.addf %37, %43 : vector<16x16x128xf32>
    %45 = vector.shape_cast %44 : vector<16x16x128xf32> to vector<1x16x16x128xf32>
    %c0_26 = arith.constant 0 : index
    %c0_27 = arith.constant 0 : index
    %c0_28 = arith.constant 0 : index
    %c0_29 = arith.constant 0 : index
    %46 = vector.load %arg8[%c0_26, %c0_27, %c0_28, %c0_29] : memref<1x16x16x128xf32, #tpu.memory_space<vmem>>, vector<1x16x16x128xf32>
    tpu.vector_store %arg8[%c0_26, %c0_27, %c0_28, %c0_29], %45 {strides = array<i32>} : memref<1x16x16x128xf32, #tpu.memory_space<vmem>>, vector<1x16x16x128xf32>,
    return
  }
  func.func @transform_0(%arg0: i32, %arg1: i32) -> (i32, i32, i32, i32) {
    %c0_i32 = arith.constant 0 : i32
    %c0_i32_0 = arith.constant 0 : i32
    %c0_i32_1 = arith.constant 0 : i32
    %c0_i32_2 = arith.constant 0 : i32
    return %arg0, %c0_i32, %c0_i32_0, %c0_i32_1 : i32, i32, i32, i32
  }
  func.func @transform_1(%arg0: i32, %arg1: i32) -> (i32, i32) {
    %c0_i32 = arith.constant 0 : i32
    %c0_i32_0 = arith.constant 0 : i32
    %c0_i32_1 = arith.constant 0 : i32
    return %c0_i32, %c0_i32_0 : i32, i32
  }
  func.func @transform_2(%arg0: i32, %arg1: i32) -> (i32, i32) {
    %c0_i32 = arith.constant 0 : i32
    %c0_i32_0 = arith.constant 0 : i32
    %c0_i32_1 = arith.constant 0 : i32
    return %c0_i32, %c0_i32_0 : i32, i32
  }
  func.func @transform_3(%arg0: i32, %arg1: i32) -> (i32, i32, i32) {
    %c0_i32 = arith.constant 0 : i32
    %c0_i32_0 = arith.constant 0 : i32
    %c0_i32_1 = arith.constant 0 : i32
    return %c0_i32, %c0_i32_0, %arg1 : i32, i32, i32
  }
  func.func @transform_4(%arg0: i32, %arg1: i32) -> (i32, i32, i32, i32) {
    %c0_i32 = arith.constant 0 : i32
    %c0_i32_0 = arith.constant 0 : i32
    %c0_i32_1 = arith.constant 0 : i32
    %c0_i32_2 = arith.constant 0 : i32
    return %arg0, %c0_i32, %c0_i32_0, %c0_i32_1 : i32, i32, i32, i32
  }
  func.func @transform_5(%arg0: i32, %arg1: i32) -> (i32, i32) {
    %c0_i32 = arith.constant 0 : i32
    %c0_i32_0 = arith.constant 0 : i32
    return %c0_i32, %arg1 : i32, i32
  }
  func.func @transform_6(%arg0: i32, %arg1: i32) -> (i32, i32, i32, i32) {
    %c0_i32 = arith.constant 0 : i32
    %c0_i32_0 = arith.constant 0 : i32
    %c0_i32_1 = arith.constant 0 : i32
    return %arg0, %c0_i32, %c0_i32_0, %arg1 : i32, i32, i32, i32
  }
}

module attributes {stable_mosaic.version = 11 : i64} {
  func.func @kernel(%arg0: i32, %arg1: i32, %arg2: memref<1x16x16x128xf32, #tpu.memory_space<vmem>>, %arg3: memref<1x128xf32, #tpu.memory_space<vmem>>, %arg4: memref<1x128xf32, #tpu.memory_space<vmem>>, %arg5: memref<3x384x128xf32, #tpu.memory_space<vmem>>, %arg6: memref<1x16x16x128xf32, #tpu.memory_space<vmem>>) attributes {dimension_semantics = [#tpu.dimension_semantics<parallel>, #tpu.dimension_semantics<parallel>], iteration_bounds = array<i64: 2, 1>, scalar_prefetch = 0 : i64, scratch_operands = 0 : i64, tpu.core_type = #tpu.core_type<tc>, window_params = [{transform_indices = @transform_0, window_bounds = array<i64: 1, 16, 16, 128>}, {pipeline_mode = #tpu.pipeline_mode<synchronous>, transform_indices = @transform_1, window_bounds = array<i64: 1, 128>}, {pipeline_mode = #tpu.pipeline_mode<synchronous>, transform_indices = @transform_2, window_bounds = array<i64: 1, 128>}, {transform_indices = @transform_3, window_bounds = array<i64: 3, 384, 128>}, {transform_indices = @transform_4, window_bounds = array<i64: 1, 16, 16, 128>}]} {
    %c0 = arith.constant 0 : index
    %c0_0 = arith.constant 0 : index
    %c0_1 = arith.constant 0 : index
    %c0_2 = arith.constant 0 : index
    %0 = vector.load %arg2[%c0, %c0_0, %c0_1, %c0_2] : memref<1x16x16x128xf32, #tpu.memory_space<vmem>>, vector<1x16x16x128xf32>
    %1 = vector.shape_cast %0 : vector<1x16x16x128xf32> to vector<16x16x128xf32>
    %c0_3 = arith.constant 0 : index
    %c0_4 = arith.constant 0 : index
    %2 = vector.load %arg3[%c0_3, %c0_4] : memref<1x128xf32, #tpu.memory_space<vmem>>, vector<1x128xf32>
    %3 = vector.shape_cast %2 : vector<1x128xf32> to vector<1x1x128xf32>
    %4 = vector.broadcast %3 : vector<1x1x128xf32> to vector<16x16x128xf32>
    %5 = arith.mulf %1, %4 : vector<16x16x128xf32>
    %c0_5 = arith.constant 0 : index
    %c0_6 = arith.constant 0 : index
    %6 = vector.load %arg4[%c0_5, %c0_6] : memref<1x128xf32, #tpu.memory_space<vmem>>, vector<1x128xf32>
    %7 = vector.shape_cast %6 : vector<1x128xf32> to vector<1x1x128xf32>
    %8 = vector.broadcast %7 : vector<1x1x128xf32> to vector<16x16x128xf32>
    %9 = arith.addf %5, %8 : vector<16x16x128xf32>
    %cst = arith.constant 0.000000e+00 : f32
    %10 = vector.broadcast %cst : f32 to vector<16x16x128xf32>
    %11 = arith.maximumf %9, %10 : vector<16x16x128xf32>
    %cst_7 = arith.constant 0.000000e+00 : f32
    %12 = vector.broadcast %cst_7 : f32 to vector<16x1x128xf32>
    %13 = vector.extract_strided_slice %11 {offsets = [0, 0, 0], sizes = [16, 15, 128], strides = [1, 1, 1]} : vector<16x16x128xf32> to vector<16x15x128xf32>
    %14 = tpu.concatenate %12, %13 in 1 : vector<16x1x128xf32>, vector<16x15x128xf32> -> vector<16x16x128xf32>
    %15 = vector.extract_strided_slice %11 {offsets = [0, 1, 0], sizes = [16, 15, 128], strides = [1, 1, 1]} : vector<16x16x128xf32> to vector<16x15x128xf32>
    %16 = tpu.concatenate %15, %12 in 1 : vector<16x15x128xf32>, vector<16x1x128xf32> -> vector<16x16x128xf32>
    %17 = tpu.concatenate %14, %11, %16 in 2 : vector<16x16x128xf32>, vector<16x16x128xf32>, vector<16x16x128xf32> -> vector<16x16x384xf32>
    %cst_8 = arith.constant 0.000000e+00 : f32
    %18 = vector.broadcast %cst_8 : f32 to vector<1x16x384xf32>
    %19 = vector.extract_strided_slice %17 {offsets = [0, 0, 0], sizes = [15, 16, 384], strides = [1, 1, 1]} : vector<16x16x384xf32> to vector<15x16x384xf32>
    %20 = tpu.concatenate %18, %19 in 0 : vector<1x16x384xf32>, vector<15x16x384xf32> -> vector<16x16x384xf32>
    %21 = vector.shape_cast %20 : vector<16x16x384xf32> to vector<256x384xf32>
    %c0_9 = arith.constant 0 : index
    %c0_10 = arith.constant 0 : index
    %c0_11 = arith.constant 0 : index
    %22 = vector.load %arg5[%c0_9, %c0_10, %c0_11] : memref<3x384x128xf32, #tpu.memory_space<vmem>>, vector<1x384x128xf32>
    %23 = vector.shape_cast %22 : vector<1x384x128xf32> to vector<384x128xf32>
    %cst_12 = arith.constant dense<0.000000e+00> : vector<256x128xf32>
    %24 = tpu.matmul %21, %23, %cst_12 {dimension_numbers = #tpu.dot_dimension_numbers<[1], [0], [0], [1], [0, 0, 1, 1], [], []>} : vector<256x384xf32>, vector<384x128xf32>, vector<256x128xf32> -> vector<256x128xf32>
    %25 = vector.shape_cast %17 : vector<16x16x384xf32> to vector<256x384xf32>
    %c1 = arith.constant 1 : index
    %c0_13 = arith.constant 0 : index
    %c0_14 = arith.constant 0 : index
    %26 = vector.load %arg5[%c1, %c0_13, %c0_14] : memref<3x384x128xf32, #tpu.memory_space<vmem>>, vector<1x384x128xf32>
    %27 = vector.shape_cast %26 : vector<1x384x128xf32> to vector<384x128xf32>
    %cst_15 = arith.constant dense<0.000000e+00> : vector<256x128xf32>
    %28 = tpu.matmul %25, %27, %cst_15 {dimension_numbers = #tpu.dot_dimension_numbers<[1], [0], [0], [1], [0, 0, 1, 1], [], []>} : vector<256x384xf32>, vector<384x128xf32>, vector<256x128xf32> -> vector<256x128xf32>
    %29 = arith.addf %24, %28 : vector<256x128xf32>
    %30 = vector.extract_strided_slice %17 {offsets = [1, 0, 0], sizes = [15, 16, 384], strides = [1, 1, 1]} : vector<16x16x384xf32> to vector<15x16x384xf32>
    %31 = tpu.concatenate %30, %18 in 0 : vector<15x16x384xf32>, vector<1x16x384xf32> -> vector<16x16x384xf32>
    %32 = vector.shape_cast %31 : vector<16x16x384xf32> to vector<256x384xf32>
    %c2 = arith.constant 2 : index
    %c0_16 = arith.constant 0 : index
    %c0_17 = arith.constant 0 : index
    %33 = vector.load %arg5[%c2, %c0_16, %c0_17] : memref<3x384x128xf32, #tpu.memory_space<vmem>>, vector<1x384x128xf32>
    %34 = vector.shape_cast %33 : vector<1x384x128xf32> to vector<384x128xf32>
    %cst_18 = arith.constant dense<0.000000e+00> : vector<256x128xf32>
    %35 = tpu.matmul %32, %34, %cst_18 {dimension_numbers = #tpu.dot_dimension_numbers<[1], [0], [0], [1], [0, 0, 1, 1], [], []>} : vector<256x384xf32>, vector<384x128xf32>, vector<256x128xf32> -> vector<256x128xf32>
    %36 = arith.addf %29, %35 : vector<256x128xf32>
    %37 = vector.shape_cast %36 : vector<256x128xf32> to vector<16x16x128xf32>
    %38 = vector.shape_cast %37 : vector<16x16x128xf32> to vector<1x16x16x128xf32>
    %c0_19 = arith.constant 0 : index
    %c0_20 = arith.constant 0 : index
    %c0_21 = arith.constant 0 : index
    %c0_22 = arith.constant 0 : index
    %39 = vector.load %arg6[%c0_19, %c0_20, %c0_21, %c0_22] : memref<1x16x16x128xf32, #tpu.memory_space<vmem>>, vector<1x16x16x128xf32>
    tpu.vector_store %arg6[%c0_19, %c0_20, %c0_21, %c0_22], %38 {strides = array<i32>} : memref<1x16x16x128xf32, #tpu.memory_space<vmem>>, vector<1x16x16x128xf32>,
    return
  }
  func.func @transform_0(%arg0: i32, %arg1: i32) -> (i32, i32, i32, i32) {
    %c0_i32 = arith.constant 0 : i32
    %c0_i32_0 = arith.constant 0 : i32
    %c0_i32_1 = arith.constant 0 : i32
    %c0_i32_2 = arith.constant 0 : i32
    return %arg0, %c0_i32, %c0_i32_0, %c0_i32_1 : i32, i32, i32, i32
  }
  func.func @transform_1(%arg0: i32, %arg1: i32) -> (i32, i32) {
    %c0_i32 = arith.constant 0 : i32
    %c0_i32_0 = arith.constant 0 : i32
    %c0_i32_1 = arith.constant 0 : i32
    return %c0_i32, %c0_i32_0 : i32, i32
  }
  func.func @transform_2(%arg0: i32, %arg1: i32) -> (i32, i32) {
    %c0_i32 = arith.constant 0 : i32
    %c0_i32_0 = arith.constant 0 : i32
    %c0_i32_1 = arith.constant 0 : i32
    return %c0_i32, %c0_i32_0 : i32, i32
  }
  func.func @transform_3(%arg0: i32, %arg1: i32) -> (i32, i32, i32) {
    %c0_i32 = arith.constant 0 : i32
    %c0_i32_0 = arith.constant 0 : i32
    %c0_i32_1 = arith.constant 0 : i32
    return %c0_i32, %c0_i32_0, %arg1 : i32, i32, i32
  }
  func.func @transform_4(%arg0: i32, %arg1: i32) -> (i32, i32, i32, i32) {
    %c0_i32 = arith.constant 0 : i32
    %c0_i32_0 = arith.constant 0 : i32
    %c0_i32_1 = arith.constant 0 : i32
    return %arg0, %c0_i32, %c0_i32_0, %arg1 : i32, i32, i32, i32
  }
}

</mosaic_0001>

<llo_original>
// kernel: wide_basic_block.2
$region0: #{wide_basic_block.2}
  #allocation0 [shape = 'u32[]', space=smem, size = 0x4, offset = 0x4, fixed_abs, tag = 'smem constant byte address 0x4 - core index']
  #allocation1 [shape = 'u32[144,128]{1,0:T(1,128)}', space=vmem, size = 0x12000, scoped, tag = 'internal scratch']
  %s0 = inlined_call_operand.vmem [shape: f32[2,16,16,128], index: 0, kind: input, shape index: {}]
  %s1 = inlined_call_operand.vmem [shape: f32[1,128], index: 1, kind: input, shape index: {}]
  %s2 = inlined_call_operand.vmem [shape: f32[1,128], index: 2, kind: input, shape index: {}]
  %s3 = inlined_call_operand.vmem [shape: f32[3,384,128], index: 3, kind: input, shape index: {}]
  %s4 = inlined_call_operand.vmem [shape: f32[2,16,16,128], index: 4, kind: output, shape index: {}]
  %s5 = sld [smem:[#allocation0]]
  $region49: #{wide_basic_block.2} parent=0
    _
  %s7 = ssub.s32 1, %s5
  %s8 = scalar_select 0, %s7, %s5
  loop: start=0, step=1, limit=4
  $region2: #{wide_basic_block.2} parent=0 // loop_pre_header
    _
  $region3: #{wide_basic_block.2} parent=0 // loop_header
    %s10 = sphi 0, %s14
    %p11 = scmp.ge.s32.totalorder %s10, 4
    %s17 = sphi 0, %s29
    %s18 = sphi 0, %s25
    %s19 = sphi 0, %s17
    %s20 = sphi 0, %s18
    %s21 = sphi 0, %s19
    %s22 = sphi 0, %s20
    %s32 = sphi 0, %s34
    %s35 = sphi 0, %s32
    %s36 = sphi 0, %s35
    %s52 = sphi 0, %s36
    %s56 = sphi 0, %s56
    %s58 = sphi 0, %s56
    %s59 = sphi 0, %s58
    %s73 = sphi 0, %s59
    %s77 = sphi 0, %s77
    %s79 = sphi 0, %s77
    %s80 = sphi 0, %s79
    %s94 = sphi 0, %s80
    %s100 = sphi 0, %s102
    %s103 = sphi 0, %s100
    %s104 = sphi 0, %s103
    %s120 = sphi 0, %s104
    %s128 = sphi 0, %s130
    %s131 = sphi 0, %s128
    %s132 = sphi 0, %s131
    %s148 = sphi 0, %s132
  $region4: #{wide_basic_block.2} parent=0 // loop_header_branch
    %13 = sbr.rel (%p11) target = $region8
  $region5: #{wide_basic_block.2} parent=0 // loop_body
    %s15 = ssub.s32 %s10, 1
    %s16 = ssub.s32 %s10, 2
    %s23 = sadd.s32 1, %s18
    %p24 = scmp.ge.s32.totalorder %s23, 1
    %s25 = scalar_select %p24, 0, %s23
    %s26 = sadd.s32 1, %s17
    %s27 = scalar_select %p24, %s26, %s17
    %p28 = scmp.ge.s32.totalorder %s27, 2
    %s29 = scalar_select %p28, 0, %s27
    %s30 = ssub.s32 %s17, %s29
    %p31 = scmp.eq.s32.totalorder %s30, 0
    %s33 = sadd.s32 %s32, 1
    %s34 = scalar_select %p31, %s32, %s33
    %p37 = pneg %p31
    %p38 = scmp.eq.s32.totalorder %s10, 1
    %p39 = por %p37, %p38
    %p40 = scmp.ne.s32.totalorder %s32, %s35
    %p41 = scmp.eq.s32.totalorder %s10, 0
    %p42 = por %p40, %p41
    %p43 = scmp.ne.s32.totalorder %s32, %s35
    %p44 = scmp.eq.s32.totalorder %s15, 1
    %p45 = por %p43, %p44
    %p46 = scmp.ne.s32.totalorder %s35, %s36
    %p47 = scmp.eq.s32.totalorder %s15, 0
    %p48 = por %p46, %p47
    %p49 = scmp.ne.s32.totalorder %s35, %s36
    %p50 = scmp.eq.s32.totalorder %s16, 1
    %p51 = por %p49, %p50
    %p53 = scmp.ne.s32.totalorder %s36, %s52
    %p54 = scmp.eq.s32.totalorder %s16, 0
    %p55 = por %p53, %p54
    %s57 = sadd.s32 %s56, 1
    %p60 = scmp.eq.s32.totalorder %s10, 1
    %p61 = scmp.ne.s32.totalorder %s56, %s58
    %p62 = scmp.eq.s32.totalorder %s10, 0
    %p63 = por %p61, %p62
    %p64 = scmp.ne.s32.totalorder %s56, %s58
    %p65 = scmp.eq.s32.totalorder %s15, 1
    %p66 = por %p64, %p65
    %p67 = scmp.ne.s32.totalorder %s58, %s59
    %p68 = scmp.eq.s32.totalorder %s15, 0
    %p69 = por %p67, %p68
    %p70 = scmp.ne.s32.totalorder %s58, %s59
    %p71 = scmp.eq.s32.totalorder %s16, 1
    %p72 = por %p70, %p71
    %p74 = scmp.ne.s32.totalorder %s59, %s73
    %p75 = scmp.eq.s32.totalorder %s16, 0
    %p76 = por %p74, %p75
    %s78 = sadd.s32 %s77, 1
    %p81 = scmp.eq.s32.totalorder %s10, 1
    %p82 = scmp.ne.s32.totalorder %s77, %s79
    %p83 = scmp.eq.s32.totalorder %s10, 0
    %p84 = por %p82, %p83
    %p85 = scmp.ne.s32.totalorder %s77, %s79
    %p86 = scmp.eq.s32.totalorder %s15, 1
    %p87 = por %p85, %p86
    %p88 = scmp.ne.s32.totalorder %s79, %s80
    %p89 = scmp.eq.s32.totalorder %s15, 0
    %p90 = por %p88, %p89
    %p91 = scmp.ne.s32.totalorder %s79, %s80
    %p92 = scmp.eq.s32.totalorder %s16, 1
    %p93 = por %p91, %p92
    %p95 = scmp.ne.s32.totalorder %s80, %s94
    %p96 = scmp.eq.s32.totalorder %s16, 0
    %p97 = por %p95, %p96
    %s98 = ssub.s32 %s18, %s25
    %p99 = scmp.eq.s32.totalorder %s98, 0
    %s101 = sadd.s32 %s100, 1
    %s102 = scalar_select %p99, %s100, %s101
    %p105 = pneg %p99
    %p106 = scmp.eq.s32.totalorder %s10, 1
    %p107 = por %p105, %p106
    %p108 = scmp.ne.s32.totalorder %s100, %s103
    %p109 = scmp.eq.s32.totalorder %s10, 0
    %p110 = por %p108, %p109
    %p111 = scmp.ne.s32.totalorder %s100, %s103
    %p112 = scmp.eq.s32.totalorder %s15, 1
    %p113 = por %p111, %p112
    %p114 = scmp.ne.s32.totalorder %s103, %s104
    %p115 = scmp.eq.s32.totalorder %s15, 0
    %p116 = por %p114, %p115
    %p117 = scmp.ne.s32.totalorder %s103, %s104
    %p118 = scmp.eq.s32.totalorder %s16, 1
    %p119 = por %p117, %p118
    %p121 = scmp.ne.s32.totalorder %s104, %s120
    %p122 = scmp.eq.s32.totalorder %s16, 0
    %p123 = por %p121, %p122
    %s124 = ssub.s32 %s17, %s29
    %s125 = ssub.s32 %s18, %s25
    %s126 = sor.u32 %s124, %s125
    %p127 = scmp.eq.s32.totalorder %s126, 0
    %s129 = sadd.s32 %s128, 1
    %s130 = scalar_select %p127, %s128, %s129
    %p133 = pneg %p127
    %p134 = scmp.eq.s32.totalorder %s10, 1
    %p135 = por %p133, %p134
    %p136 = scmp.ne.s32.totalorder %s128, %s131
    %p137 = scmp.eq.s32.totalorder %s10, 0
    %p138 = por %p136, %p137
    %p139 = scmp.ne.s32.totalorder %s128, %s131
    %p140 = scmp.eq.s32.totalorder %s15, 1
    %p141 = por %p139, %p140
    %p142 = scmp.ne.s32.totalorder %s131, %s132
    %p143 = scmp.eq.s32.totalorder %s15, 0
    %p144 = por %p142, %p143
    %p145 = scmp.ne.s32.totalorder %s131, %s132
    %p146 = scmp.eq.s32.totalorder %s16, 1
    %p147 = por %p145, %p146
    %p149 = scmp.ne.s32.totalorder %s132, %s148
    %p150 = scmp.eq.s32.totalorder %s16, 0
    %p151 = por %p149, %p150
    %p152 = scmp.le.s32.totalorder 1, %s10
    %p153 = scmp.lt.s32.totalorder %s10, 3
    %p154 = pnand %p152, %p153
    %p155 = pneg %p154
    // Predicated region
    $region9: #{wide_basic_block.2} parent=5 // pred_check
      _
    $region10: #{wide_basic_block.2} parent=5 // pred_check_branch
      %157 = sbr.rel (%p154) target = $region12
    $region11: #{wide_basic_block.2} parent=5 // pred_region
      %s158 = ssub.s32 %s10, 1
      // Predicated region
      $region13: #{wide_basic_block.2} parent=11 // pred_check
        %p159 = pneg %p69
      $region14: #{wide_basic_block.2} parent=11 // pred_check_branch
        %161 = sbr.rel (%p159) target = $region16
      $region15: #{wide_basic_block.2} parent=11 // pred_region
        _
      $region16: #{wide_basic_block.2} parent=11 // pred_fallthru
        _
      // Predicated region
      $region17: #{wide_basic_block.2} parent=11 // pred_check
        %p162 = pneg %p90
      $region18: #{wide_basic_block.2} parent=11 // pred_check_branch
        %164 = sbr.rel (%p162) target = $region20
      $region19: #{wide_basic_block.2} parent=11 // pred_region
        _
      $region20: #{wide_basic_block.2} parent=11 // pred_fallthru
        _
      // Predicated region
      $region21: #{wide_basic_block.2} parent=11 // pred_check
        %p165 = pneg %p116
      $region22: #{wide_basic_block.2} parent=11 // pred_check_branch
        %167 = sbr.rel (%p165) target = $region24
      $region23: #{wide_basic_block.2} parent=11 // pred_region
        %p168 = scmp.lt.s32.totalorder %s20, 0
        %s169 = scalar_select %p168, %s20, 0
        %s170 = smul.addr %s169, 8
        %s171 = scalar_lea.vmem %s3, %s170
      $region24: #{wide_basic_block.2} parent=11 // pred_fallthru
        _
    $region12: #{wide_basic_block.2} parent=5 // pred_fallthru
      _
    %p172 = scmp.lt.s32.totalorder %s10, 2
    // Predicated region
    $region25: #{wide_basic_block.2} parent=5 // pred_check
      %p173 = pneg %p172
    $region26: #{wide_basic_block.2} parent=5 // pred_check_branch
      %175 = sbr.rel (%p173) target = $region28
    $region27: #{wide_basic_block.2} parent=5 // pred_region
      // Predicated region
      $region29: #{wide_basic_block.2} parent=27 // pred_check
        %p176 = pneg %p42
      $region30: #{wide_basic_block.2} parent=27 // pred_check_branch
        %178 = sbr.rel (%p176) target = $region32
      $region31: #{wide_basic_block.2} parent=27 // pred_region
        %p179 = scmp.lt.s32.totalorder %s17, 1
        %s180 = scalar_select %p179, %s17, 1
        %s181 = smul.addr %s180, 32
        %s182 = smul.addr %s181, 8
        %s183 = scalar_lea.vmem %s0, %s182
      $region32: #{wide_basic_block.2} parent=27 // pred_fallthru
        _
    $region28: #{wide_basic_block.2} parent=5 // pred_fallthru
      _
    %p184 = scmp.le.s32.totalorder 1, %s10
    %p185 = scmp.lt.s32.totalorder %s10, 3
    %p186 = pnand %p184, %p185
    %p187 = pneg %p186
    // Predicated region
    $region33: #{wide_basic_block.2} parent=5 // pred_check
      _
    $region34: #{wide_basic_block.2} parent=5 // pred_check_branch
      %189 = sbr.rel (%p186) target = $region36
    $region35: #{wide_basic_block.2} parent=5 // pred_region
      %s190 = ssub.s32 %s10, 1
      %p191 = scmp.lt.s32.totalorder %s19, 1
      %s192 = scalar_select %p191, %s19, 1
      %s193 = smul.addr %s192, 32
      %s194 = smul.addr %s193, 8
      %s195 = scalar_lea.vmem %s0, %s194
      %p196 = pneg %p48
      %p197 = pneg %p45
      %p198 = pneg %p69
      %p199 = pneg %p66
      %p200 = pneg %p90
      %p201 = pneg %p87
      %p202 = scmp.lt.s32.totalorder %s20, 0
      %s203 = scalar_select %p202, %s20, 0
      %s204 = smul.addr %s203, 8
      %s205 = scalar_lea.vmem %s3, %s204
      %p206 = pneg %p116
      %p207 = pneg %p113
      %p208 = pneg %p144
      %p209 = pneg %p141
      %p210 = scmp.lt.s32.totalorder %s19, 1
      %s211 = scalar_select %p210, %s19, 1
      %p212 = scmp.lt.s32.totalorder %s20, 0
      %s213 = scalar_select %p212, %s20, 0
      %s214 = smul.addr %s211, 32
      %s215 = sadd.s32 %s213, %s214
      %s216 = smul.addr %s215, 8
      %s217 = scalar_lea.vmem %s4, %s216
      %p218 = scmp.lt.s32.totalorder %s19, 1
      %s219 = scalar_select %p218, %s19, 1
      %s220 = smul.addr %s219, 32
      %s221 = smul.addr %s220, 8
      %s222 = scalar_lea.vmem %s0, %s221
      %p223 = scmp.lt.s32.totalorder %s20, 0
      %s224 = scalar_select %p223, %s20, 0
      %s225 = smul.addr %s224, 8
      %s226 = scalar_lea.vmem %s3, %s225
      %p227 = scmp.lt.s32.totalorder %s19, 1
      %s228 = scalar_select %p227, %s19, 1
      %p229 = scmp.lt.s32.totalorder %s20, 0
      %s230 = scalar_select %p229, %s20, 0
      %s231 = smul.addr %s228, 32
      %s232 = sadd.s32 %s230, %s231
      %s233 = smul.addr %s232, 8
      %s234 = scalar_lea.vmem %s4, %s233
      %v235 = vld [vmem:[%s222] sm:$0xff]
      %v236 = vld [vmem:[%s222 + $0x8] sm:$0xff]
      %v237 = vld [vmem:[%s222 + $0x10] sm:$0xff]
      %v238 = vld [vmem:[%s222 + $0x18] sm:$0xff]
      %v239 = vld [vmem:[%s222 + $0x20] sm:$0xff]
      %v240 = vld [vmem:[%s222 + $0x28] sm:$0xff]
      %v241 = vld [vmem:[%s222 + $0x30] sm:$0xff]
      %v242 = vld [vmem:[%s222 + $0x38] sm:$0xff]
      %v243 = vld [vmem:[%s222 + $0x40] sm:$0xff]
      %v244 = vld [vmem:[%s222 + $0x48] sm:$0xff]
      %v245 = vld [vmem:[%s222 + $0x50] sm:$0xff]
      %v246 = vld [vmem:[%s222 + $0x58] sm:$0xff]
      %v247 = vld [vmem:[%s222 + $0x60] sm:$0xff]
      %v248 = vld [vmem:[%s222 + $0x68] sm:$0xff]
      %v249 = vld [vmem:[%s222 + $0x70] sm:$0xff]
      %v250 = vld [vmem:[%s222 + $0x78] sm:$0xff]
      %v251 = vld [vmem:[%s222 + $0x80] sm:$0xff]
      %v252 = vld [vmem:[%s222 + $0x88] sm:$0xff]
      %v253 = vld [vmem:[%s222 + $0x90] sm:$0xff]
      %v254 = vld [vmem:[%s222 + $0x98] sm:$0xff]
      %v255 = vld [vmem:[%s222 + $0xa0] sm:$0xff]
      %v256 = vld [vmem:[%s222 + $0xa8] sm:$0xff]
      %v257 = vld [vmem:[%s222 + $0xb0] sm:$0xff]
      %v258 = vld [vmem:[%s222 + $0xb8] sm:$0xff]
      %v259 = vld [vmem:[%s222 + $0xc0] sm:$0xff]
      %v260 = vld [vmem:[%s222 + $0xc8] sm:$0xff]
      %v261 = vld [vmem:[%s222 + $0xd0] sm:$0xff]
      %v262 = vld [vmem:[%s222 + $0xd8] sm:$0xff]
      %v263 = vld [vmem:[%s222 + $0xe0] sm:$0xff]
      %v264 = vld [vmem:[%s222 + $0xe8] sm:$0xff]
      %v265 = vld [vmem:[%s222 + $0xf0] sm:$0xff]
      %v266 = vld [vmem:[%s222 + $0xf8] sm:$0xff]
      %v267 = vld [vmem:[%s1] sm:$0x1]
      %v269 = vlaneseq
      %v270 = vshrl.u32 %v269, 7
      %v271 = vsub.s32 0, %v270
      %v272 = vrot.slane %v267, %v271
      %v274 = vmul.f32 %v235, %v272
      %v275 = vmul.f32 %v236, %v272
      %v276 = vmul.f32 %v237, %v272
      %v277 = vmul.f32 %v238, %v272
      %v278 = vmul.f32 %v239, %v272
      %v279 = vmul.f32 %v240, %v272
      %v280 = vmul.f32 %v241, %v272
      %v281 = vmul.f32 %v242, %v272
      %v282 = vmul.f32 %v243, %v272
      %v283 = vmul.f32 %v244, %v272
      %v284 = vmul.f32 %v245, %v272
      %v285 = vmul.f32 %v246, %v272
      %v286 = vmul.f32 %v247, %v272
      %v287 = vmul.f32 %v248, %v272
      %v288 = vmul.f32 %v249, %v272
      %v289 = vmul.f32 %v250, %v272
      %v290 = vmul.f32 %v251, %v272
      %v291 = vmul.f32 %v252, %v272
      %v292 = vmul.f32 %v253, %v272
      %v293 = vmul.f32 %v254, %v272
      %v294 = vmul.f32 %v255, %v272
      %v295 = vmul.f32 %v256, %v272
      %v296 = vmul.f32 %v257, %v272
      %v297 = vmul.f32 %v258, %v272
      %v298 = vmul.f32 %v259, %v272
      %v299 = vmul.f32 %v260, %v272
      %v300 = vmul.f32 %v261, %v272
      %v301 = vmul.f32 %v262, %v272
      %v302 = vmul.f32 %v263, %v272
      %v303 = vmul.f32 %v264, %v272
      %v304 = vmul.f32 %v265, %v272
      %v305 = vmul.f32 %v266, %v272
      %v306 = vld [vmem:[%s2] sm:$0x1]
      %v308 = vlaneseq
      %v309 = vshrl.u32 %v308, 7
      %v310 = vsub.s32 0, %v309
      %v311 = vrot.slane %v306, %v310
      %v313 = vadd.f32 %v274, %v311
      %v314 = vadd.f32 %v275, %v311
      %v315 = vadd.f32 %v276, %v311
      %v316 = vadd.f32 %v277, %v311
      %v317 = vadd.f32 %v278, %v311
      %v318 = vadd.f32 %v279, %v311
      %v319 = vadd.f32 %v280, %v311
      %v320 = vadd.f32 %v281, %v311
      %v321 = vadd.f32 %v282, %v311
      %v322 = vadd.f32 %v283, %v311
      %v323 = vadd.f32 %v284, %v311
      %v324 = vadd.f32 %v285, %v311
      %v325 = vadd.f32 %v286, %v311
      %v326 = vadd.f32 %v287, %v311
      %v327 = vadd.f32 %v288, %v311
      %v328 = vadd.f32 %v289, %v311
      %v329 = vadd.f32 %v290, %v311
      %v330 = vadd.f32 %v291, %v311
      %v331 = vadd.f32 %v292, %v311
      %v332 = vadd.f32 %v293, %v311
      %v333 = vadd.f32 %v294, %v311
      %v334 = vadd.f32 %v295, %v311
      %v335 = vadd.f32 %v296, %v311
      %v336 = vadd.f32 %v297, %v311
      %v337 = vadd.f32 %v298, %v311
      %v338 = vadd.f32 %v299, %v311
      %v339 = vadd.f32 %v300, %v311
      %v340 = vadd.f32 %v301, %v311
      %v341 = vadd.f32 %v302, %v311
      %v342 = vadd.f32 %v303, %v311
      %v343 = vadd.f32 %v304, %v311
      %v344 = vadd.f32 %v305, %v311
      %v345 = vmax.f32 %v313, 0.0
      %v346 = vmax.f32 %v314, 0.0
      %v347 = vmax.f32 %v315, 0.0
      %v348 = vmax.f32 %v316, 0.0
      %v349 = vmax.f32 %v317, 0.0
      %v350 = vmax.f32 %v318, 0.0
      %v351 = vmax.f32 %v319, 0.0
      %v352 = vmax.f32 %v320, 0.0
      %v353 = vmax.f32 %v321, 0.0
      %v354 = vmax.f32 %v322, 0.0
      %v355 = vmax.f32 %v323, 0.0
      %v356 = vmax.f32 %v324, 0.0
      %v357 = vmax.f32 %v325, 0.0
      %v358 = vmax.f32 %v326, 0.0
      %v359 = vmax.f32 %v327, 0.0
      %v360 = vmax.f32 %v328, 0.0
      %v361 = vmax.f32 %v329, 0.0
      %v362 = vmax.f32 %v330, 0.0
      %v363 = vmax.f32 %v331, 0.0
      %v364 = vmax.f32 %v332, 0.0
      %v365 = vmax.f32 %v333, 0.0
      %v366 = vmax.f32 %v334, 0.0
      %v367 = vmax.f32 %v335, 0.0
      %v368 = vmax.f32 %v336, 0.0
      %v369 = vmax.f32 %v337, 0.0
      %v370 = vmax.f32 %v338, 0.0
      %v371 = vmax.f32 %v339, 0.0
      %v372 = vmax.f32 %v340, 0.0
      %v373 = vmax.f32 %v341, 0.0
      %v374 = vmax.f32 %v342, 0.0
      %v375 = vmax.f32 %v343, 0.0
      %v376 = vmax.f32 %v344, 0.0
      %vm409 = vcmask 1040384
      %v410 = vrot.slane %v345, 7
      %v411 = vrot.slane %v346, 7
      %v412 = vsel %vm409, %v410, %v411
      %v413 = vrot.slane %v347, 7
      %v414 = vrot.slane %v348, 7
      %v415 = vsel %vm409, %v413, %v414
      %v416 = vrot.slane %v349, 7
      %v417 = vrot.slane %v350, 7
      %v418 = vsel %vm409, %v416, %v417
      %v419 = vrot.slane %v351, 7
      %v420 = vrot.slane %v352, 7
      %v421 = vsel %vm409, %v419, %v420
      %v422 = vrot.slane %v353, 7
      %v423 = vrot.slane %v354, 7
      %v424 = vsel %vm409, %v422, %v423
      %v425 = vrot.slane %v355, 7
      %v426 = vrot.slane %v356, 7
      %v427 = vsel %vm409, %v425, %v426
      %v428 = vrot.slane %v357, 7
      %v429 = vrot.slane %v358, 7
      %v430 = vsel %vm409, %v428, %v429
      %v431 = vrot.slane %v359, 7
      %v432 = vrot.slane %v360, 7
      %v433 = vsel %vm409, %v431, %v432
      %v434 = vrot.slane %v361, 7
      %v435 = vrot.slane %v362, 7
      %v436 = vsel %vm409, %v434, %v435
      %v437 = vrot.slane %v363, 7
      %v438 = vrot.slane %v364, 7
      %v439 = vsel %vm409, %v437, %v438
      %v440 = vrot.slane %v365, 7
      %v441 = vrot.slane %v366, 7
      %v442 = vsel %vm409, %v440, %v441
      %v443 = vrot.slane %v367, 7
      %v444 = vrot.slane %v368, 7
      %v445 = vsel %vm409, %v443, %v444
      %v446 = vrot.slane %v369, 7
      %v447 = vrot.slane %v370, 7
      %v448 = vsel %vm409, %v446, %v447
      %v449 = vrot.slane %v371, 7
      %v450 = vrot.slane %v372, 7
      %v451 = vsel %vm409, %v449, %v450
      %v452 = vrot.slane %v373, 7
      %v453 = vrot.slane %v374, 7
      %v454 = vsel %vm409, %v452, %v453
      %v455 = vrot.slane %v375, 7
      %v456 = vrot.slane %v376, 7
      %v457 = vsel %vm409, %v455, %v456
      %v490 = vsel %vm409, 0.0, %v410
      %v491 = vsel %vm409, 0.0, %v413
      %v492 = vsel %vm409, 0.0, %v416
      %v493 = vsel %vm409, 0.0, %v419
      %v494 = vsel %vm409, 0.0, %v422
      %v495 = vsel %vm409, 0.0, %v425
      %v496 = vsel %vm409, 0.0, %v428
      %v497 = vsel %vm409, 0.0, %v431
      %v498 = vsel %vm409, 0.0, %v434
      %v499 = vsel %vm409, 0.0, %v437
      %v500 = vsel %vm409, 0.0, %v440
      %v501 = vsel %vm409, 0.0, %v443
      %v502 = vsel %vm409, 0.0, %v446
      %v503 = vsel %vm409, 0.0, %v449
      %v504 = vsel %vm409, 0.0, %v452
      %v505 = vsel %vm409, 0.0, %v455
      %vm506 = vcmask 1046528
      %v507 = vrot.slane %v345, 1
      %v508 = vrot.slane %v346, 1
      %v509 = vsel %vm506, %v507, %v508
      %v510 = vrot.slane %v347, 1
      %v511 = vrot.slane %v348, 1
      %v512 = vsel %vm506, %v510, %v511
      %v513 = vrot.slane %v349, 1
      %v514 = vrot.slane %v350, 1
      %v515 = vsel %vm506, %v513, %v514
      %v516 = vrot.slane %v351, 1
      %v517 = vrot.slane %v352, 1
      %v518 = vsel %vm506, %v516, %v517
      %v519 = vrot.slane %v353, 1
      %v520 = vrot.slane %v354, 1
      %v521 = vsel %vm506, %v519, %v520
      %v522 = vrot.slane %v355, 1
      %v523 = vrot.slane %v356, 1
      %v524 = vsel %vm506, %v522, %v523
      %v525 = vrot.slane %v357, 1
      %v526 = vrot.slane %v358, 1
      %v527 = vsel %vm506, %v525, %v526
      %v528 = vrot.slane %v359, 1
      %v529 = vrot.slane %v360, 1
      %v530 = vsel %vm506, %v528, %v529
      %v531 = vrot.slane %v361, 1
      %v532 = vrot.slane %v362, 1
      %v533 = vsel %vm506, %v531, %v532
      %v534 = vrot.slane %v363, 1
      %v535 = vrot.slane %v364, 1
      %v536 = vsel %vm506, %v534, %v535
      %v537 = vrot.slane %v365, 1
      %v538 = vrot.slane %v366, 1
      %v539 = vsel %vm506, %v537, %v538
      %v540 = vrot.slane %v367, 1
      %v541 = vrot.slane %v368, 1
      %v542 = vsel %vm506, %v540, %v541
      %v543 = vrot.slane %v369, 1
      %v544 = vrot.slane %v370, 1
      %v545 = vsel %vm506, %v543, %v544
      %v546 = vrot.slane %v371, 1
      %v547 = vrot.slane %v372, 1
      %v548 = vsel %vm506, %v546, %v547
      %v549 = vrot.slane %v373, 1
      %v550 = vrot.slane %v374, 1
      %v551 = vsel %vm506, %v549, %v550
      %v552 = vrot.slane %v375, 1
      %v553 = vrot.slane %v376, 1
      %v554 = vsel %vm506, %v552, %v553
      %v587 = vsel %vm506, %v508, 0.0
      %v588 = vsel %vm506, %v511, 0.0
      %v589 = vsel %vm506, %v514, 0.0
      %v590 = vsel %vm506, %v517, 0.0
      %v591 = vsel %vm506, %v520, 0.0
      %v592 = vsel %vm506, %v523, 0.0
      %v593 = vsel %vm506, %v526, 0.0
      %v594 = vsel %vm506, %v529, 0.0
      %v595 = vsel %vm506, %v532, 0.0
      %v596 = vsel %vm506, %v535, 0.0
      %v597 = vsel %vm506, %v538, 0.0
      %v598 = vsel %vm506, %v541, 0.0
      %v599 = vsel %vm506, %v544, 0.0
      %v600 = vsel %vm506, %v547, 0.0
      %v601 = vsel %vm506, %v550, 0.0
      %v602 = vsel %vm506, %v553, 0.0
      %v603 = vld [vmem:[%s226] sm:$0xff]
      %v604 = vld [vmem:[%s226 + $0x8] sm:$0xff]
      %v605 = vld [vmem:[%s226 + $0x10] sm:$0xff]
      %v606 = vld [vmem:[%s226 + $0x18] sm:$0xff]
      %v607 = vld [vmem:[%s226 + $0x20] sm:$0xff]
      %v608 = vld [vmem:[%s226 + $0x28] sm:$0xff]
      %v609 = vld [vmem:[%s226 + $0x30] sm:$0xff]
      %v610 = vld [vmem:[%s226 + $0x38] sm:$0xff]
      %v611 = vld [vmem:[%s226 + $0x40] sm:$0xff]
      %v612 = vld [vmem:[%s226 + $0x48] sm:$0xff]
      %v613 = vld [vmem:[%s226 + $0x50] sm:$0xff]
      %v614 = vld [vmem:[%s226 + $0x58] sm:$0xff]
      %v615 = vld [vmem:[%s226 + $0x60] sm:$0xff]
      %v616 = vld [vmem:[%s226 + $0x68] sm:$0xff]
      %v617 = vld [vmem:[%s226 + $0x70] sm:$0xff]
      %v618 = vld [vmem:[%s226 + $0x78] sm:$0xff]
      %v619 = vld [vmem:[%s226 + $0x80] sm:$0xff]
      %v620 = vld [vmem:[%s226 + $0x88] sm:$0xff]
      %v621 = vld [vmem:[%s226 + $0x90] sm:$0xff]
      %v622 = vld [vmem:[%s226 + $0x98] sm:$0xff]
      %v623 = vld [vmem:[%s226 + $0xa0] sm:$0xff]
      %v624 = vld [vmem:[%s226 + $0xa8] sm:$0xff]
      %v625 = vld [vmem:[%s226 + $0xb0] sm:$0xff]
      %v626 = vld [vmem:[%s226 + $0xb8] sm:$0xff]
      %v627 = vld [vmem:[%s226 + $0xc0] sm:$0xff]
      %v628 = vld [vmem:[%s226 + $0xc8] sm:$0xff]
      %v629 = vld [vmem:[%s226 + $0xd0] sm:$0xff]
      %v630 = vld [vmem:[%s226 + $0xd8] sm:$0xff]
      %v631 = vld [vmem:[%s226 + $0xe0] sm:$0xff]
      %v632 = vld [vmem:[%s226 + $0xe8] sm:$0xff]
      %v633 = vld [vmem:[%s226 + $0xf0] sm:$0xff]
      %v634 = vld [vmem:[%s226 + $0xf8] sm:$0xff]
      %v635 = vld [vmem:[%s226 + $0x100] sm:$0xff]
      %v636 = vld [vmem:[%s226 + $0x108] sm:$0xff]
      %v637 = vld [vmem:[%s226 + $0x110] sm:$0xff]
      %v638 = vld [vmem:[%s226 + $0x118] sm:$0xff]
      %v639 = vld [vmem:[%s226 + $0x120] sm:$0xff]
      %v640 = vld [vmem:[%s226 + $0x128] sm:$0xff]
      %v641 = vld [vmem:[%s226 + $0x130] sm:$0xff]
      %v642 = vld [vmem:[%s226 + $0x138] sm:$0xff]
      %v643 = vld [vmem:[%s226 + $0x140] sm:$0xff]
      %v644 = vld [vmem:[%s226 + $0x148] sm:$0xff]
      %v645 = vld [vmem:[%s226 + $0x150] sm:$0xff]
      %v646 = vld [vmem:[%s226 + $0x158] sm:$0xff]
      %v647 = vld [vmem:[%s226 + $0x160] sm:$0xff]
      %v648 = vld [vmem:[%s226 + $0x168] sm:$0xff]
      %v649 = vld [vmem:[%s226 + $0x170] sm:$0xff]
      %v650 = vld [vmem:[%s226 + $0x178] sm:$0xff]
      %s651 = scalar_lea.vmem %s226, 384
      %v652 = vld [vmem:[%s651] sm:$0xff]
      %v653 = vld [vmem:[%s651 + $0x8] sm:$0xff]
      %v654 = vld [vmem:[%s651 + $0x10] sm:$0xff]
      %v655 = vld [vmem:[%s651 + $0x18] sm:$0xff]
      %v656 = vld [vmem:[%s651 + $0x20] sm:$0xff]
      %v657 = vld [vmem:[%s651 + $0x28] sm:$0xff]
      %v658 = vld [vmem:[%s651 + $0x30] sm:$0xff]
      %v659 = vld [vmem:[%s651 + $0x38] sm:$0xff]
      %v660 = vld [vmem:[%s651 + $0x40] sm:$0xff]
      %v661 = vld [vmem:[%s651 + $0x48] sm:$0xff]
      %v662 = vld [vmem:[%s651 + $0x50] sm:$0xff]
      %v663 = vld [vmem:[%s651 + $0x58] sm:$0xff]
      %v664 = vld [vmem:[%s651 + $0x60] sm:$0xff]
      %v665 = vld [vmem:[%s651 + $0x68] sm:$0xff]
      %v666 = vld [vmem:[%s651 + $0x70] sm:$0xff]
      %v667 = vld [vmem:[%s651 + $0x78] sm:$0xff]
      %v668 = vld [vmem:[%s651 + $0x80] sm:$0xff]
      %v669 = vld [vmem:[%s651 + $0x88] sm:$0xff]
      %v670 = vld [vmem:[%s651 + $0x90] sm:$0xff]
      %v671 = vld [vmem:[%s651 + $0x98] sm:$0xff]
      %v672 = vld [vmem:[%s651 + $0xa0] sm:$0xff]
      %v673 = vld [vmem:[%s651 + $0xa8] sm:$0xff]
      %v674 = vld [vmem:[%s651 + $0xb0] sm:$0xff]
      %v675 = vld [vmem:[%s651 + $0xb8] sm:$0xff]
      %v676 = vld [vmem:[%s651 + $0xc0] sm:$0xff]
      %v677 = vld [vmem:[%s651 + $0xc8] sm:$0xff]
      %v678 = vld [vmem:[%s651 + $0xd0] sm:$0xff]
      %v679 = vld [vmem:[%s651 + $0xd8] sm:$0xff]
      %v680 = vld [vmem:[%s651 + $0xe0] sm:$0xff]
      %v681 = vld [vmem:[%s651 + $0xe8] sm:$0xff]
      %v682 = vld [vmem:[%s651 + $0xf0] sm:$0xff]
      %v683 = vld [vmem:[%s651 + $0xf8] sm:$0xff]
      %v684 = vld [vmem:[%s651 + $0x100] sm:$0xff]
      %v685 = vld [vmem:[%s651 + $0x108] sm:$0xff]
      %v686 = vld [vmem:[%s651 + $0x110] sm:$0xff]
      %v687 = vld [vmem:[%s651 + $0x118] sm:$0xff]
      %v688 = vld [vmem:[%s651 + $0x120] sm:$0xff]
      %v689 = vld [vmem:[%s651 + $0x128] sm:$0xff]
      %v690 = vld [vmem:[%s651 + $0x130] sm:$0xff]
      %v691 = vld [vmem:[%s651 + $0x138] sm:$0xff]
      %v692 = vld [vmem:[%s651 + $0x140] sm:$0xff]
      %v693 = vld [vmem:[%s651 + $0x148] sm:$0xff]
      %v694 = vld [vmem:[%s651 + $0x150] sm:$0xff]
      %v695 = vld [vmem:[%s651 + $0x158] sm:$0xff]
      %v696 = vld [vmem:[%s651 + $0x160] sm:$0xff]
      %v697 = vld [vmem:[%s651 + $0x168] sm:$0xff]
      %v698 = vld [vmem:[%s651 + $0x170] sm:$0xff]
      %v699 = vld [vmem:[%s651 + $0x178] sm:$0xff]
      %700 = vmatprep.subr.mxu0 0.0
      %701 = vmatpush1.msra.mxu0 %v652
      %702 = vmatprep.subr.mxu0 0.0
      %703 = vmatpush1.msra.mxu0 %v653
      %704 = vmatprep.subr.mxu0 0.0
      %705 = vmatpush1.msra.mxu0 %v654
      %706 = vmatprep.subr.mxu0 0.0
      %707 = vmatpush1.msra.mxu0 %v655
      %708 = vmatprep.subr.mxu0 0.0
      %709 = vmatpush1.msra.mxu0 %v656
      %710 = vmatprep.subr.mxu0 0.0
      %711 = vmatpush1.msra.mxu0 %v657
      %712 = vmatprep.subr.mxu0 0.0
      %713 = vmatpush1.msra.mxu0 %v658
      %714 = vmatprep.subr.mxu0 0.0
      %715 = vmatpush1.msra.mxu0 %v659
      %716 = vmatprep.subr.mxu0 0.0
      %717 = vmatpush1.msra.mxu0 %v660
      %718 = vmatprep.subr.mxu0 0.0
      %719 = vmatpush1.msra.mxu0 %v661
      %720 = vmatprep.subr.mxu0 0.0
      %721 = vmatpush1.msra.mxu0 %v662
      %722 = vmatprep.subr.mxu0 0.0
      %723 = vmatpush1.msra.mxu0 %v663
      %724 = vmatprep.subr.mxu0 0.0
      %725 = vmatpush1.msra.mxu0 %v664
      %726 = vmatprep.subr.mxu0 0.0
      %727 = vmatpush1.msra.mxu0 %v665
      %728 = vmatprep.subr.mxu0 0.0
      %729 = vmatpush1.msra.mxu0 %v666
      %730 = vmatprep.subr.mxu0 0.0
      %731 = vmatpush1.msra.mxu0 %v667
      %732 = vmatprep.subr.mxu0 0.0
      %733 = vmatpush1.msra.mxu0 %v668
      %734 = vmatprep.subr.mxu0 0.0
      %735 = vmatpush1.msra.mxu0 %v669
      %736 = vmatprep.subr.mxu0 0.0
      %737 = vmatpush1.msra.mxu0 %v670
      %738 = vmatprep.subr.mxu0 0.0
      %739 = vmatpush1.msra.mxu0 %v671
      %740 = vmatprep.subr.mxu0 0.0
      %741 = vmatpush1.msra.mxu0 %v672
      %742 = vmatprep.subr.mxu0 0.0
      %743 = vmatpush1.msra.mxu0 %v673
      %744 = vmatprep.subr.mxu0 0.0
      %745 = vmatpush1.msra.mxu0 %v674
      %746 = vmatprep.subr.mxu0 0.0
      %747 = vmatpush1.msra.mxu0 %v675
      %748 = vmatprep.subr.mxu0 0.0
      %749 = vmatpush1.msra.mxu0 %v676
      %750 = vmatprep.subr.mxu0 0.0
      %751 = vmatpush1.msra.mxu0 %v677
      %752 = vmatprep.subr.mxu0 0.0
      %753 = vmatpush1.msra.mxu0 %v678
      %754 = vmatprep.subr.mxu0 0.0
      %755 = vmatpush1.msra.mxu0 %v679
      %756 = vmatprep.subr.mxu0 0.0
      %757 = vmatpush1.msra.mxu0 %v680
      %758 = vmatprep.subr.mxu0 0.0
      %759 = vmatpush1.msra.mxu0 %v681
      %760 = vmatprep.subr.mxu0 0.0
      %761 = vmatpush1.msra.mxu0 %v682
      %762 = vmatprep.subr.mxu0 0.0
      %763 = vmatpush1.msra.mxu0 %v683
      %764 = vmatprep.mubr.f32.mxu0 %v345
      %765 = vmatmul.mubr.f32.gmra.mrb[0].mxu0 %v490
      %v766 = vpop.f32.mrb[0].mxu0
      %v767 = vadd.f32 0.0, %v766
      %v768 = vpop.f32.mrb[0].mxu0
      %769 = vmatprep.mubr.f32.mxu0 %v346
      %770 = vmatmul.mubr.f32.gmra.mrb[0].mxu0 %v412
      %v771 = vpop.f32.mrb[0].mxu0
      %v772 = vadd.f32 0.0, %v771
      %v773 = vpop.f32.mrb[0].mxu0
      %774 = vmatprep.mubr.f32.mxu0 %v347
      %775 = vmatmul.mubr.f32.gmra.mrb[0].mxu0 %v491
      %v776 = vpop.f32.mrb[0].mxu0
      %v777 = vadd.f32 0.0, %v776
      %v778 = vpop.f32.mrb[0].mxu0
      %779 = vmatprep.mubr.f32.mxu0 %v348
      %780 = vmatmul.mubr.f32.gmra.mrb[0].mxu0 %v415
      %v781 = vpop.f32.mrb[0].mxu0
      %v782 = vadd.f32 0.0, %v781
      %v783 = vpop.f32.mrb[0].mxu0
      %784 = vmatprep.mubr.f32.mxu0 %v349
      %785 = vmatmul.mubr.f32.gmra.mrb[0].mxu0 %v492
      %v786 = vpop.f32.mrb[0].mxu0
      %v787 = vadd.f32 0.0, %v786
      %v788 = vpop.f32.mrb[0].mxu0
      %789 = vmatprep.mubr.f32.mxu0 %v350
      %790 = vmatmul.mubr.f32.gmra.mrb[0].mxu0 %v418
      %v791 = vpop.f32.mrb[0].mxu0
      %v792 = vadd.f32 0.0, %v791
      %v793 = vpop.f32.mrb[0].mxu0
      %794 = vmatprep.mubr.f32.mxu0 %v351
      %795 = vmatmul.mubr.f32.gmra.mrb[0].mxu0 %v493
      %v796 = vpop.f32.mrb[0].mxu0
      %v797 = vadd.f32 0.0, %v796
      %v798 = vpop.f32.mrb[0].mxu0
      %799 = vmatprep.mubr.f32.mxu0 %v352
      %800 = vmatmul.mubr.f32.gmra.mrb[0].mxu0 %v421
      %v801 = vpop.f32.mrb[0].mxu0
      %v802 = vadd.f32 0.0, %v801
      %v803 = vpop.f32.mrb[0].mxu0
      %804 = vmatprep.mubr.f32.mxu0 %v353
      %805 = vmatmul.mubr.f32.gmra.mrb[0].mxu0 %v494
      %v806 = vpop.f32.mrb[0].mxu0
      %v807 = vadd.f32 0.0, %v806
      %v808 = vpop.f32.mrb[0].mxu0
      %809 = vmatprep.mubr.f32.mxu0 %v354
      %810 = vmatmul.mubr.f32.gmra.mrb[0].mxu0 %v424
      %v811 = vpop.f32.mrb[0].mxu0
      %v812 = vadd.f32 0.0, %v811
      %v813 = vpop.f32.mrb[0].mxu0
      %814 = vmatprep.mubr.f32.mxu0 %v355
      %815 = vmatmul.mubr.f32.gmra.mrb[0].mxu0 %v495
      %v816 = vpop.f32.mrb[0].mxu0
      %v817 = vadd.f32 0.0, %v816
      %v818 = vpop.f32.mrb[0].mxu0
      %819 = vmatprep.mubr.f32.mxu0 %v356
      %820 = vmatmul.mubr.f32.gmra.mrb[0].mxu0 %v427
      %v821 = vpop.f32.mrb[0].mxu0
      %v822 = vadd.f32 0.0, %v821
      %v823 = vpop.f32.mrb[0].mxu0
      %824 = vmatprep.mubr.f32.mxu0 %v357
      %825 = vmatmul.mubr.f32.gmra.mrb[0].mxu0 %v496
      %v826 = vpop.f32.mrb[0].mxu0
      %v827 = vadd.f32 0.0, %v826
      %v828 = vpop.f32.mrb[0].mxu0
      %829 = vmatprep.mubr.f32.mxu0 %v358
      %830 = vmatmul.mubr.f32.gmra.mrb[0].mxu0 %v430
      %v831 = vpop.f32.mrb[0].mxu0
      %v832 = vadd.f32 0.0, %v831
      %v833 = vpop.f32.mrb[0].mxu0
      %834 = vmatprep.mubr.f32.mxu0 %v359
      %835 = vmatmul.mubr.f32.gmra.mrb[0].mxu0 %v497
      %v836 = vpop.f32.mrb[0].mxu0
      %v837 = vadd.f32 0.0, %v836
      %v838 = vpop.f32.mrb[0].mxu0
      %839 = vmatprep.mubr.f32.mxu0 %v360
      %840 = vmatmul.mubr.f32.gmra.mrb[0].mxu0 %v433
      %v841 = vpop.f32.mrb[0].mxu0
      %v842 = vadd.f32 0.0, %v841
      %v843 = vpop.f32.mrb[0].mxu0
      %844 = vmatprep.mubr.f32.mxu0 %v361
      %845 = vmatmul.mubr.f32.gmra.mrb[0].mxu0 %v498
      %v846 = vpop.f32.mrb[0].mxu0
      %v847 = vadd.f32 0.0, %v846
      %v848 = vpop.f32.mrb[0].mxu0
      %849 = vmatprep.mubr.f32.mxu0 %v362
      %850 = vmatmul.mubr.f32.gmra.mrb[0].mxu0 %v436
      %v851 = vpop.f32.mrb[0].mxu0
      %v852 = vadd.f32 0.0, %v851
      %v853 = vpop.f32.mrb[0].mxu0
      %854 = vmatprep.mubr.f32.mxu0 %v363
      %855 = vmatmul.mubr.f32.gmra.mrb[0].mxu0 %v499
      %v856 = vpop.f32.mrb[0].mxu0
      %v857 = vadd.f32 0.0, %v856
      %v858 = vpop.f32.mrb[0].mxu0
      %859 = vmatprep.mubr.f32.mxu0 %v364
      %860 = vmatmul.mubr.f32.gmra.mrb[0].mxu0 %v439
      %v861 = vpop.f32.mrb[0].mxu0
      %v862 = vadd.f32 0.0, %v861
      %v863 = vpop.f32.mrb[0].mxu0
      %864 = vmatprep.mubr.f32.mxu0 %v365
      %865 = vmatmul.mubr.f32.gmra.mrb[0].mxu0 %v500
      %v866 = vpop.f32.mrb[0].mxu0
      %v867 = vadd.f32 0.0, %v866
      %v868 = vpop.f32.mrb[0].mxu0
      %869 = vmatprep.mubr.f32.mxu0 %v366
      %870 = vmatmul.mubr.f32.gmra.mrb[0].mxu0 %v442
      %v871 = vpop.f32.mrb[0].mxu0
      %v872 = vadd.f32 0.0, %v871
      %v873 = vpop.f32.mrb[0].mxu0
      %874 = vmatprep.mubr.f32.mxu0 %v367
      %875 = vmatmul.mubr.f32.gmra.mrb[0].mxu0 %v501
      %v876 = vpop.f32.mrb[0].mxu0
      %v877 = vadd.f32 0.0, %v876
      %v878 = vpop.f32.mrb[0].mxu0
      %879 = vmatprep.mubr.f32.mxu0 %v368
      %880 = vmatmul.mubr.f32.gmra.mrb[0].mxu0 %v445
      %v881 = vpop.f32.mrb[0].mxu0
      %v882 = vadd.f32 0.0, %v881
      %v883 = vpop.f32.mrb[0].mxu0
      %884 = vmatprep.mubr.f32.mxu0 %v369
      %885 = vmatmul.mubr.f32.gmra.mrb[0].mxu0 %v502
      %v886 = vpop.f32.mrb[0].mxu0
      %v887 = vadd.f32 0.0, %v886
      %v888 = vpop.f32.mrb[0].mxu0
      %889 = vmatprep.mubr.f32.mxu0 %v370
      %890 = vmatmul.mubr.f32.gmra.mrb[0].mxu0 %v448
      %v891 = vpop.f32.mrb[0].mxu0
      %v892 = vadd.f32 0.0, %v891
      %v893 = vpop.f32.mrb[0].mxu0
      %894 = vmatprep.mubr.f32.mxu0 %v371
      %895 = vmatmul.mubr.f32.gmra.mrb[0].mxu0 %v503
      %v896 = vpop.f32.mrb[0].mxu0
      %v897 = vadd.f32 0.0, %v896
      %v898 = vpop.f32.mrb[0].mxu0
      %899 = vmatprep.mubr.f32.mxu0 %v372
      %900 = vmatmul.mubr.f32.gmra.mrb[0].mxu0 %v451
      %v901 = vpop.f32.mrb[0].mxu0
      %v902 = vadd.f32 0.0, %v901
      %v903 = vpop.f32.mrb[0].mxu0
      %904 = vmatprep.mubr.f32.mxu0 %v373
      %905 = vmatmul.mubr.f32.gmra.mrb[0].mxu0 %v504
      %v906 = vpop.f32.mrb[0].mxu0
      %v907 = vadd.f32 0.0, %v906
      %v908 = vpop.f32.mrb[0].mxu0
      %909 = vmatprep.mubr.f32.mxu0 %v374
      %910 = vmatmul.mubr.f32.gmra.mrb[0].mxu0 %v454
      %v911 = vpop.f32.mrb[0].mxu0
      %v912 = vadd.f32 0.0, %v911
      %v913 = vpop.f32.mrb[0].mxu0
      %914 = vmatprep.mubr.f32.mxu0 %v375
      %915 = vmatmul.mubr.f32.gmra.mrb[0].mxu0 %v505
      %v916 = vpop.f32.mrb[0].mxu0
      %v917 = vadd.f32 0.0, %v916
      %v918 = vpop.f32.mrb[0].mxu0
      %919 = vmatprep.mubr.f32.mxu0 %v376
      %920 = vmatmul.mubr.f32.gmra.mrb[0].mxu0 %v457
      %v921 = vpop.f32.mrb[0].mxu0
      %v922 = vadd.f32 0.0, %v921
      %v923 = vpop.f32.mrb[0].mxu0
      %924 = vdwg.mxu0
      %925 = vmatprep.subr.mxu0 0.0
      %926 = vmatpush1.msra.mxu0 %v684
      %927 = vmatprep.subr.mxu0 0.0
      %928 = vmatpush1.msra.mxu0 %v685
      %929 = vmatprep.subr.mxu0 0.0
      %930 = vmatpush1.msra.mxu0 %v686
      %931 = vmatprep.subr.mxu0 0.0
      %932 = vmatpush1.msra.mxu0 %v687
      %933 = vmatprep.subr.mxu0 0.0
      %934 = vmatpush1.msra.mxu0 %v688
      %935 = vmatprep.subr.mxu0 0.0
      %936 = vmatpush1.msra.mxu0 %v689
      %937 = vmatprep.subr.mxu0 0.0
      %938 = vmatpush1.msra.mxu0 %v690
      %939 = vmatprep.subr.mxu0 0.0
      %940 = vmatpush1.msra.mxu0 %v691
      %941 = vmatprep.subr.mxu0 0.0
      %942 = vmatpush1.msra.mxu0 %v692
      %943 = vmatprep.subr.mxu0 0.0
      %944 = vmatpush1.msra.mxu0 %v693
      %945 = vmatprep.subr.mxu0 0.0
      %946 = vmatpush1.msra.mxu0 %v694
      %947 = vmatprep.subr.mxu0 0.0
      %948 = vmatpush1.msra.mxu0 %v695
      %949 = vmatprep.subr.mxu0 0.0
      %950 = vmatpush1.msra.mxu0 %v696
      %951 = vmatprep.subr.mxu0 0.0
      %952 = vmatpush1.msra.mxu0 %v697
      %953 = vmatprep.subr.mxu0 0.0
      %954 = vmatpush1.msra.mxu0 %v698
      %955 = vmatprep.subr.mxu0 0.0
      %956 = vmatpush1.msra.mxu0 %v699
      %957 = vmatprep.subr.mxu0 0.0
      %958 = vmatpush1.msra.mxu0 0.0
      %959 = vmatprep.subr.mxu0 0.0
      %960 = vmatpush1.msra.mxu0 0.0
      %961 = vmatprep.subr.mxu0 0.0
      %962 = vmatpush1.msra.mxu0 0.0
      %963 = vmatprep.subr.mxu0 0.0
      %964 = vmatpush1.msra.mxu0 0.0
      %965 = vmatprep.subr.mxu0 0.0
      %966 = vmatpush1.msra.mxu0 0.0
      %967 = vmatprep.subr.mxu0 0.0
      %968 = vmatpush1.msra.mxu0 0.0
      %969 = vmatprep.subr.mxu0 0.0
      %970 = vmatpush1.msra.mxu0 0.0
      %971 = vmatprep.subr.mxu0 0.0
      %972 = vmatpush1.msra.mxu0 0.0
      %973 = vmatprep.subr.mxu0 0.0
      %974 = vmatpush1.msra.mxu0 0.0
      %975 = vmatprep.subr.mxu0 0.0
      %976 = vmatpush1.msra.mxu0 0.0
      %977 = vmatprep.subr.mxu0 0.0
      %978 = vmatpush1.msra.mxu0 0.0
      %979 = vmatprep.subr.mxu0 0.0
      %980 = vmatpush1.msra.mxu0 0.0
      %981 = vmatprep.subr.mxu0 0.0
      %982 = vmatpush1.msra.mxu0 0.0
      %983 = vmatprep.subr.mxu0 0.0
      %984 = vmatpush1.msra.mxu0 0.0
      %985 = vmatprep.subr.mxu0 0.0
      %986 = vmatpush1.msra.mxu0 0.0
      %987 = vmatprep.subr.mxu0 0.0
      %988 = vmatpush1.msra.mxu0 0.0
      %989 = vmatprep.mubr.f32.mxu0 0.0
      %990 = vmatmul.mubr.f32.gmra.mrb[0].mxu0 %v509
      %v991 = vpop.f32.mrb[0].mxu0
      %v992 = vadd.f32 %v767, %v991
      %v993 = vpop.f32.mrb[0].mxu0
      %994 = vmatprep.mubr.f32.mxu0 0.0
      %995 = vmatmul.mubr.f32.gmra.mrb[0].mxu0 %v587
      %v996 = vpop.f32.mrb[0].mxu0
      %v997 = vadd.f32 %v772, %v996
      %v998 = vpop.f32.mrb[0].mxu0
      %999 = vmatprep.mubr.f32.mxu0 0.0
      %1000 = vmatmul.mubr.f32.gmra.mrb[0].mxu0 %v512
      %v1001 = vpop.f32.mrb[0].mxu0
      %v1002 = vadd.f32 %v777, %v1001
      %v1003 = vpop.f32.mrb[0].mxu0
      %1004 = vmatprep.mubr.f32.mxu0 0.0
      %1005 = vmatmul.mubr.f32.gmra.mrb[0].mxu0 %v588
      %v1006 = vpop.f32.mrb[0].mxu0
      %v1007 = vadd.f32 %v782, %v1006
      %v1008 = vpop.f32.mrb[0].mxu0
      %1009 = vmatprep.mubr.f32.mxu0 0.0
      %1010 = vmatmul.mubr.f32.gmra.mrb[0].mxu0 %v515
      %v1011 = vpop.f32.mrb[0].mxu0
      %v1012 = vadd.f32 %v787, %v1011
      %v1013 = vpop.f32.mrb[0].mxu0
      %1014 = vmatprep.mubr.f32.mxu0 0.0
      %1015 = vmatmul.mubr.f32.gmra.mrb[0].mxu0 %v589
      %v1016 = vpop.f32.mrb[0].mxu0
      %v1017 = vadd.f32 %v792, %v1016
      %v1018 = vpop.f32.mrb[0].mxu0
      %1019 = vmatprep.mubr.f32.mxu0 0.0
      %1020 = vmatmul.mubr.f32.gmra.mrb[0].mxu0 %v518
      %v1021 = vpop.f32.mrb[0].mxu0
      %v1022 = vadd.f32 %v797, %v1021
      %v1023 = vpop.f32.mrb[0].mxu0
      %1024 = vmatprep.mubr.f32.mxu0 0.0
      %1025 = vmatmul.mubr.f32.gmra.mrb[0].mxu0 %v590
      %v1026 = vpop.f32.mrb[0].mxu0
      %v1027 = vadd.f32 %v802, %v1026
      %v1028 = vpop.f32.mrb[0].mxu0
      %1029 = vmatprep.mubr.f32.mxu0 0.0
      %1030 = vmatmul.mubr.f32.gmra.mrb[0].mxu0 %v521
      %v1031 = vpop.f32.mrb[0].mxu0
      %v1032 = vadd.f32 %v807, %v1031
      %v1033 = vpop.f32.mrb[0].mxu0
      %1034 = vmatprep.mubr.f32.mxu0 0.0
      %1035 = vmatmul.mubr.f32.gmra.mrb[0].mxu0 %v591
      %v1036 = vpop.f32.mrb[0].mxu0
      %v1037 = vadd.f32 %v812, %v1036
      %v1038 = vpop.f32.mrb[0].mxu0
      %1039 = vmatprep.mubr.f32.mxu0 0.0
      %1040 = vmatmul.mubr.f32.gmra.mrb[0].mxu0 %v524
      %v1041 = vpop.f32.mrb[0].mxu0
      %v1042 = vadd.f32 %v817, %v1041
      %v1043 = vpop.f32.mrb[0].mxu0
      %1044 = vmatprep.mubr.f32.mxu0 0.0
      %1045 = vmatmul.mubr.f32.gmra.mrb[0].mxu0 %v592
      %v1046 = vpop.f32.mrb[0].mxu0
      %v1047 = vadd.f32 %v822, %v1046
      %v1048 = vpop.f32.mrb[0].mxu0
      %1049 = vmatprep.mubr.f32.mxu0 0.0
      %1050 = vmatmul.mubr.f32.gmra.mrb[0].mxu0 %v527
      %v1051 = vpop.f32.mrb[0].mxu0
      %v1052 = vadd.f32 %v827, %v1051
      %v1053 = vpop.f32.mrb[0].mxu0
      %1054 = vmatprep.mubr.f32.mxu0 0.0
      %1055 = vmatmul.mubr.f32.gmra.mrb[0].mxu0 %v593
      %v1056 = vpop.f32.mrb[0].mxu0
      %v1057 = vadd.f32 %v832, %v1056
      %v1058 = vpop.f32.mrb[0].mxu0
      %1059 = vmatprep.mubr.f32.mxu0 0.0
      %1060 = vmatmul.mubr.f32.gmra.mrb[0].mxu0 %v530
      %v1061 = vpop.f32.mrb[0].mxu0
      %v1062 = vadd.f32 %v837, %v1061
      %v1063 = vpop.f32.mrb[0].mxu0
      %1064 = vmatprep.mubr.f32.mxu0 0.0
      %1065 = vmatmul.mubr.f32.gmra.mrb[0].mxu0 %v594
      %v1066 = vpop.f32.mrb[0].mxu0
      %v1067 = vadd.f32 %v842, %v1066
      %v1068 = vpop.f32.mrb[0].mxu0
      %1069 = vmatprep.mubr.f32.mxu0 0.0
      %1070 = vmatmul.mubr.f32.gmra.mrb[0].mxu0 %v533
      %v1071 = vpop.f32.mrb[0].mxu0
      %v1072 = vadd.f32 %v847, %v1071
      %v1073 = vpop.f32.mrb[0].mxu0
      %1074 = vmatprep.mubr.f32.mxu0 0.0
      %1075 = vmatmul.mubr.f32.gmra.mrb[0].mxu0 %v595
      %v1076 = vpop.f32.mrb[0].mxu0
      %v1077 = vadd.f32 %v852, %v1076
      %v1078 = vpop.f32.mrb[0].mxu0
      %1079 = vmatprep.mubr.f32.mxu0 0.0
      %1080 = vmatmul.mubr.f32.gmra.mrb[0].mxu0 %v536
      %v1081 = vpop.f32.mrb[0].mxu0
      %v1082 = vadd.f32 %v857, %v1081
      %v1083 = vpop.f32.mrb[0].mxu0
      %1084 = vmatprep.mubr.f32.mxu0 0.0
      %1085 = vmatmul.mubr.f32.gmra.mrb[0].mxu0 %v596
      %v1086 = vpop.f32.mrb[0].mxu0
      %v1087 = vadd.f32 %v862, %v1086
      %v1088 = vpop.f32.mrb[0].mxu0
      %1089 = vmatprep.mubr.f32.mxu0 0.0
      %1090 = vmatmul.mubr.f32.gmra.mrb[0].mxu0 %v539
      %v1091 = vpop.f32.mrb[0].mxu0
      %v1092 = vadd.f32 %v867, %v1091
      %v1093 = vpop.f32.mrb[0].mxu0
      %1094 = vmatprep.mubr.f32.mxu0 0.0
      %1095 = vmatmul.mubr.f32.gmra.mrb[0].mxu0 %v597
      %v1096 = vpop.f32.mrb[0].mxu0
      %v1097 = vadd.f32 %v872, %v1096
      %v1098 = vpop.f32.mrb[0].mxu0
      %1099 = vmatprep.mubr.f32.mxu0 0.0
      %1100 = vmatmul.mubr.f32.gmra.mrb[0].mxu0 %v542
      %v1101 = vpop.f32.mrb[0].mxu0
      %v1102 = vadd.f32 %v877, %v1101
      %v1103 = vpop.f32.mrb[0].mxu0
      %1104 = vmatprep.mubr.f32.mxu0 0.0
      %1105 = vmatmul.mubr.f32.gmra.mrb[0].mxu0 %v598
      %v1106 = vpop.f32.mrb[0].mxu0
      %v1107 = vadd.f32 %v882, %v1106
      %v1108 = vpop.f32.mrb[0].mxu0
      %1109 = vmatprep.mubr.f32.mxu0 0.0
      %1110 = vmatmul.mubr.f32.gmra.mrb[0].mxu0 %v545
      %v1111 = vpop.f32.mrb[0].mxu0
      %v1112 = vadd.f32 %v887, %v1111
      %v1113 = vpop.f32.mrb[0].mxu0
      %1114 = vmatprep.mubr.f32.mxu0 0.0
      %1115 = vmatmul.mubr.f32.gmra.mrb[0].mxu0 %v599
      %v1116 = vpop.f32.mrb[0].mxu0
      %v1117 = vadd.f32 %v892, %v1116
      %v1118 = vpop.f32.mrb[0].mxu0
      %1119 = vmatprep.mubr.f32.mxu0 0.0
      %1120 = vmatmul.mubr.f32.gmra.mrb[0].mxu0 %v548
      %v1121 = vpop.f32.mrb[0].mxu0
      %v1122 = vadd.f32 %v897, %v1121
      %v1123 = vpop.f32.mrb[0].mxu0
      %1124 = vmatprep.mubr.f32.mxu0 0.0
      %1125 = vmatmul.mubr.f32.gmra.mrb[0].mxu0 %v600
      %v1126 = vpop.f32.mrb[0].mxu0
      %v1127 = vadd.f32 %v902, %v1126
      %v1128 = vpop.f32.mrb[0].mxu0
      %1129 = vmatprep.mubr.f32.mxu0 0.0
      %1130 = vmatmul.mubr.f32.gmra.mrb[0].mxu0 %v551
      %v1131 = vpop.f32.mrb[0].mxu0
      %v1132 = vadd.f32 %v907, %v1131
      %v1133 = vpop.f32.mrb[0].mxu0
      %1134 = vmatprep.mubr.f32.mxu0 0.0
      %1135 = vmatmul.mubr.f32.gmra.mrb[0].mxu0 %v601
      %v1136 = vpop.f32.mrb[0].mxu0
      %v1137 = vadd.f32 %v912, %v1136
      %v1138 = vpop.f32.mrb[0].mxu0
      %1139 = vmatprep.mubr.f32.mxu0 0.0
      %1140 = vmatmul.mubr.f32.gmra.mrb[0].mxu0 %v554
      %v1141 = vpop.f32.mrb[0].mxu0
      %v1142 = vadd.f32 %v917, %v1141
      %v1143 = vpop.f32.mrb[0].mxu0
      %1144 = vmatprep.mubr.f32.mxu0 0.0
      %1145 = vmatmul.mubr.f32.gmra.mrb[0].mxu0 %v602
      %v1146 = vpop.f32.mrb[0].mxu0
      %v1147 = vadd.f32 %v922, %v1146
      %v1148 = vpop.f32.mrb[0].mxu0
      %1149 = vdwg.mxu0
      %1150 = vmatprep.subr.mxu0 0.0
      %1151 = vmatpush1.msra.mxu0 %v603
      %1152 = vmatprep.subr.mxu0 0.0
      %1153 = vmatpush1.msra.mxu0 %v604
      %1154 = vmatprep.subr.mxu0 0.0
      %1155 = vmatpush1.msra.mxu0 %v605
      %1156 = vmatprep.subr.mxu0 0.0
      %1157 = vmatpush1.msra.mxu0 %v606
      %1158 = vmatprep.subr.mxu0 0.0
      %1159 = vmatpush1.msra.mxu0 %v607
      %1160 = vmatprep.subr.mxu0 0.0
      %1161 = vmatpush1.msra.mxu0 %v608
      %1162 = vmatprep.subr.mxu0 0.0
      %1163 = vmatpush1.msra.mxu0 %v609
      %1164 = vmatprep.subr.mxu0 0.0
      %1165 = vmatpush1.msra.mxu0 %v610
      %1166 = vmatprep.subr.mxu0 0.0
      %1167 = vmatpush1.msra.mxu0 %v611
      %1168 = vmatprep.subr.mxu0 0.0
      %1169 = vmatpush1.msra.mxu0 %v612
      %1170 = vmatprep.subr.mxu0 0.0
      %1171 = vmatpush1.msra.mxu0 %v613
      %1172 = vmatprep.subr.mxu0 0.0
      %1173 = vmatpush1.msra.mxu0 %v614
      %1174 = vmatprep.subr.mxu0 0.0
      %1175 = vmatpush1.msra.mxu0 %v615
      %1176 = vmatprep.subr.mxu0 0.0
      %1177 = vmatpush1.msra.mxu0 %v616
      %1178 = vmatprep.subr.mxu0 0.0
      %1179 = vmatpush1.msra.mxu0 %v617
      %1180 = vmatprep.subr.mxu0 0.0
      %1181 = vmatpush1.msra.mxu0 %v618
      %1182 = vmatprep.subr.mxu0 0.0
      %1183 = vmatpush1.msra.mxu0 %v619
      %1184 = vmatprep.subr.mxu0 0.0
      %1185 = vmatpush1.msra.mxu0 %v620
      %1186 = vmatprep.subr.mxu0 0.0
      %1187 = vmatpush1.msra.mxu0 %v621
      %1188 = vmatprep.subr.mxu0 0.0
      %1189 = vmatpush1.msra.mxu0 %v622
      %1190 = vmatprep.subr.mxu0 0.0
      %1191 = vmatpush1.msra.mxu0 %v623
      %1192 = vmatprep.subr.mxu0 0.0
      %1193 = vmatpush1.msra.mxu0 %v624
      %1194 = vmatprep.subr.mxu0 0.0
      %1195 = vmatpush1.msra.mxu0 %v625
      %1196 = vmatprep.subr.mxu0 0.0
      %1197 = vmatpush1.msra.mxu0 %v626
      %1198 = vmatprep.subr.mxu0 0.0
      %1199 = vmatpush1.msra.mxu0 %v627
      %1200 = vmatprep.subr.mxu0 0.0
      %1201 = vmatpush1.msra.mxu0 %v628
      %1202 = vmatprep.subr.mxu0 0.0
      %1203 = vmatpush1.msra.mxu0 %v629
      %1204 = vmatprep.subr.mxu0 0.0
      %1205 = vmatpush1.msra.mxu0 %v630
      %1206 = vmatprep.subr.mxu0 0.0
      %1207 = vmatpush1.msra.mxu0 %v631
      %1208 = vmatprep.subr.mxu0 0.0
      %1209 = vmatpush1.msra.mxu0 %v632
      %1210 = vmatprep.subr.mxu0 0.0
      %1211 = vmatpush1.msra.mxu0 %v633
      %1212 = vmatprep.subr.mxu0 0.0
      %1213 = vmatpush1.msra.mxu0 %v634
      %1214 = vmatprep.mubr.f32.mxu0 0.0
      %1215 = vmatmul.mubr.f32.gmra.mrb[0].mxu0 0.0
      %v1216 = vpop.f32.mrb[0].mxu0
      %v1217 = vadd.f32 %v992, %v1216
      %v1218 = vpop.f32.mrb[0].mxu0
      %1219 = vmatprep.mubr.f32.mxu0 0.0
      %1220 = vmatmul.mubr.f32.gmra.mrb[0].mxu0 0.0
      %v1221 = vpop.f32.mrb[0].mxu0
      %v1222 = vadd.f32 %v997, %v1221
      %v1223 = vpop.f32.mrb[0].mxu0
      %1224 = vmatprep.mubr.f32.mxu0 %v345
      %1225 = vmatmul.mubr.f32.gmra.mrb[0].mxu0 %v490
      %v1226 = vpop.f32.mrb[0].mxu0
      %v1227 = vadd.f32 %v1002, %v1226
      %v1228 = vpop.f32.mrb[0].mxu0
      %1229 = vmatprep.mubr.f32.mxu0 %v346
      %1230 = vmatmul.mubr.f32.gmra.mrb[0].mxu0 %v412
      %v1231 = vpop.f32.mrb[0].mxu0
      %v1232 = vadd.f32 %v1007, %v1231
      %v1233 = vpop.f32.mrb[0].mxu0
      %1234 = vmatprep.mubr.f32.mxu0 %v347
      %1235 = vmatmul.mubr.f32.gmra.mrb[0].mxu0 %v491
      %v1236 = vpop.f32.mrb[0].mxu0
      %v1237 = vadd.f32 %v1012, %v1236
      %v1238 = vpop.f32.mrb[0].mxu0
      %1239 = vmatprep.mubr.f32.mxu0 %v348
      %1240 = vmatmul.mubr.f32.gmra.mrb[0].mxu0 %v415
      %v1241 = vpop.f32.mrb[0].mxu0
      %v1242 = vadd.f32 %v1017, %v1241
      %v1243 = vpop.f32.mrb[0].mxu0
      %1244 = vmatprep.mubr.f32.mxu0 %v349
      %1245 = vmatmul.mubr.f32.gmra.mrb[0].mxu0 %v492
      %v1246 = vpop.f32.mrb[0].mxu0
      %v1247 = vadd.f32 %v1022, %v1246
      %v1248 = vpop.f32.mrb[0].mxu0
      %1249 = vmatprep.mubr.f32.mxu0 %v350
      %1250 = vmatmul.mubr.f32.gmra.mrb[0].mxu0 %v418
      %v1251 = vpop.f32.mrb[0].mxu0
      %v1252 = vadd.f32 %v1027, %v1251
      %v1253 = vpop.f32.mrb[0].mxu0
      %1254 = vmatprep.mubr.f32.mxu0 %v351
      %1255 = vmatmul.mubr.f32.gmra.mrb[0].mxu0 %v493
      %v1256 = vpop.f32.mrb[0].mxu0
      %v1257 = vadd.f32 %v1032, %v1256
      %v1258 = vpop.f32.mrb[0].mxu0
      %1259 = vmatprep.mubr.f32.mxu0 %v352
      %1260 = vmatmul.mubr.f32.gmra.mrb[0].mxu0 %v421
      %v1261 = vpop.f32.mrb[0].mxu0
      %v1262 = vadd.f32 %v1037, %v1261
      %v1263 = vpop.f32.mrb[0].mxu0
      %1264 = vmatprep.mubr.f32.mxu0 %v353
      %1265 = vmatmul.mubr.f32.gmra.mrb[0].mxu0 %v494
      %v1266 = vpop.f32.mrb[0].mxu0
      %v1267 = vadd.f32 %v1042, %v1266
      %v1268 = vpop.f32.mrb[0].mxu0
      %1269 = vmatprep.mubr.f32.mxu0 %v354
      %1270 = vmatmul.mubr.f32.gmra.mrb[0].mxu0 %v424
      %v1271 = vpop.f32.mrb[0].mxu0
      %v1272 = vadd.f32 %v1047, %v1271
      %v1273 = vpop.f32.mrb[0].mxu0
      %1274 = vmatprep.mubr.f32.mxu0 %v355
      %1275 = vmatmul.mubr.f32.gmra.mrb[0].mxu0 %v495
      %v1276 = vpop.f32.mrb[0].mxu0
      %v1277 = vadd.f32 %v1052, %v1276
      %v1278 = vpop.f32.mrb[0].mxu0
      %1279 = vmatprep.mubr.f32.mxu0 %v356
      %1280 = vmatmul.mubr.f32.gmra.mrb[0].mxu0 %v427
      %v1281 = vpop.f32.mrb[0].mxu0
      %v1282 = vadd.f32 %v1057, %v1281
      %v1283 = vpop.f32.mrb[0].mxu0
      %1284 = vmatprep.mubr.f32.mxu0 %v357
      %1285 = vmatmul.mubr.f32.gmra.mrb[0].mxu0 %v496
      %v1286 = vpop.f32.mrb[0].mxu0
      %v1287 = vadd.f32 %v1062, %v1286
      %v1288 = vpop.f32.mrb[0].mxu0
      %1289 = vmatprep.mubr.f32.mxu0 %v358
      %1290 = vmatmul.mubr.f32.gmra.mrb[0].mxu0 %v430
      %v1291 = vpop.f32.mrb[0].mxu0
      %v1292 = vadd.f32 %v1067, %v1291
      %v1293 = vpop.f32.mrb[0].mxu0
      %1294 = vmatprep.mubr.f32.mxu0 %v359
      %1295 = vmatmul.mubr.f32.gmra.mrb[0].mxu0 %v497
      %v1296 = vpop.f32.mrb[0].mxu0
      %v1297 = vadd.f32 %v1072, %v1296
      %v1298 = vpop.f32.mrb[0].mxu0
      %1299 = vmatprep.mubr.f32.mxu0 %v360
      %1300 = vmatmul.mubr.f32.gmra.mrb[0].mxu0 %v433
      %v1301 = vpop.f32.mrb[0].mxu0
      %v1302 = vadd.f32 %v1077, %v1301
      %v1303 = vpop.f32.mrb[0].mxu0
      %1304 = vmatprep.mubr.f32.mxu0 %v361
      %1305 = vmatmul.mubr.f32.gmra.mrb[0].mxu0 %v498
      %v1306 = vpop.f32.mrb[0].mxu0
      %v1307 = vadd.f32 %v1082, %v1306
      %v1308 = vpop.f32.mrb[0].mxu0
      %1309 = vmatprep.mubr.f32.mxu0 %v362
      %1310 = vmatmul.mubr.f32.gmra.mrb[0].mxu0 %v436
      %v1311 = vpop.f32.mrb[0].mxu0
      %v1312 = vadd.f32 %v1087, %v1311
      %v1313 = vpop.f32.mrb[0].mxu0
      %1314 = vmatprep.mubr.f32.mxu0 %v363
      %1315 = vmatmul.mubr.f32.gmra.mrb[0].mxu0 %v499
      %v1316 = vpop.f32.mrb[0].mxu0
      %v1317 = vadd.f32 %v1092, %v1316
      %v1318 = vpop.f32.mrb[0].mxu0
      %1319 = vmatprep.mubr.f32.mxu0 %v364
      %1320 = vmatmul.mubr.f32.gmra.mrb[0].mxu0 %v439
      %v1321 = vpop.f32.mrb[0].mxu0
      %v1322 = vadd.f32 %v1097, %v1321
      %v1323 = vpop.f32.mrb[0].mxu0
      %1324 = vmatprep.mubr.f32.mxu0 %v365
      %1325 = vmatmul.mubr.f32.gmra.mrb[0].mxu0 %v500
      %v1326 = vpop.f32.mrb[0].mxu0
      %v1327 = vadd.f32 %v1102, %v1326
      %v1328 = vpop.f32.mrb[0].mxu0
      %1329 = vmatprep.mubr.f32.mxu0 %v366
      %1330 = vmatmul.mubr.f32.gmra.mrb[0].mxu0 %v442
      %v1331 = vpop.f32.mrb[0].mxu0
      %v1332 = vadd.f32 %v1107, %v1331
      %v1333 = vpop.f32.mrb[0].mxu0
      %1334 = vmatprep.mubr.f32.mxu0 %v367
      %1335 = vmatmul.mubr.f32.gmra.mrb[0].mxu0 %v501
      %v1336 = vpop.f32.mrb[0].mxu0
      %v1337 = vadd.f32 %v1112, %v1336
      %v1338 = vpop.f32.mrb[0].mxu0
      %1339 = vmatprep.mubr.f32.mxu0 %v368
      %1340 = vmatmul.mubr.f32.gmra.mrb[0].mxu0 %v445
      %v1341 = vpop.f32.mrb[0].mxu0
      %v1342 = vadd.f32 %v1117, %v1341
      %v1343 = vpop.f32.mrb[0].mxu0
      %1344 = vmatprep.mubr.f32.mxu0 %v369
      %1345 = vmatmul.mubr.f32.gmra.mrb[0].mxu0 %v502
      %v1346 = vpop.f32.mrb[0].mxu0
      %v1347 = vadd.f32 %v1122, %v1346
      %v1348 = vpop.f32.mrb[0].mxu0
      %1349 = vmatprep.mubr.f32.mxu0 %v370
      %1350 = vmatmul.mubr.f32.gmra.mrb[0].mxu0 %v448
      %v1351 = vpop.f32.mrb[0].mxu0
      %v1352 = vadd.f32 %v1127, %v1351
      %v1353 = vpop.f32.mrb[0].mxu0
      %1354 = vmatprep.mubr.f32.mxu0 %v371
      %1355 = vmatmul.mubr.f32.gmra.mrb[0].mxu0 %v503
      %v1356 = vpop.f32.mrb[0].mxu0
      %v1357 = vadd.f32 %v1132, %v1356
      %v1358 = vpop.f32.mrb[0].mxu0
      %1359 = vmatprep.mubr.f32.mxu0 %v372
      %1360 = vmatmul.mubr.f32.gmra.mrb[0].mxu0 %v451
      %v1361 = vpop.f32.mrb[0].mxu0
      %v1362 = vadd.f32 %v1137, %v1361
      %v1363 = vpop.f32.mrb[0].mxu0
      %1364 = vmatprep.mubr.f32.mxu0 %v373
      %1365 = vmatmul.mubr.f32.gmra.mrb[0].mxu0 %v504
      %v1366 = vpop.f32.mrb[0].mxu0
      %v1367 = vadd.f32 %v1142, %v1366
      %v1368 = vpop.f32.mrb[0].mxu0
      %1369 = vmatprep.mubr.f32.mxu0 %v374
      %1370 = vmatmul.mubr.f32.gmra.mrb[0].mxu0 %v454
      %v1371 = vpop.f32.mrb[0].mxu0
      %v1372 = vadd.f32 %v1147, %v1371
      %v1373 = vpop.f32.mrb[0].mxu0
      %1374 = vdwg.mxu0
      %1375 = vmatprep.subr.mxu0 0.0
      %1376 = vmatpush1.msra.mxu0 %v635
      %1377 = vmatprep.subr.mxu0 0.0
      %1378 = vmatpush1.msra.mxu0 %v636
      %1379 = vmatprep.subr.mxu0 0.0
      %1380 = vmatpush1.msra.mxu0 %v637
      %1381 = vmatprep.subr.mxu0 0.0
      %1382 = vmatpush1.msra.mxu0 %v638
      %1383 = vmatprep.subr.mxu0 0.0
      %1384 = vmatpush1.msra.mxu0 %v639
      %1385 = vmatprep.subr.mxu0 0.0
      %1386 = vmatpush1.msra.mxu0 %v640
      %1387 = vmatprep.subr.mxu0 0.0
      %1388 = vmatpush1.msra.mxu0 %v641
      %1389 = vmatprep.subr.mxu0 0.0
      %1390 = vmatpush1.msra.mxu0 %v642
      %1391 = vmatprep.subr.mxu0 0.0
      %1392 = vmatpush1.msra.mxu0 %v643
      %1393 = vmatprep.subr.mxu0 0.0
      %1394 = vmatpush1.msra.mxu0 %v644
      %1395 = vmatprep.subr.mxu0 0.0
      %1396 = vmatpush1.msra.mxu0 %v645
      %1397 = vmatprep.subr.mxu0 0.0
      %1398 = vmatpush1.msra.mxu0 %v646
      %1399 = vmatprep.subr.mxu0 0.0
      %1400 = vmatpush1.msra.mxu0 %v647
      %1401 = vmatprep.subr.mxu0 0.0
      %1402 = vmatpush1.msra.mxu0 %v648
      %1403 = vmatprep.subr.mxu0 0.0
      %1404 = vmatpush1.msra.mxu0 %v649
      %1405 = vmatprep.subr.mxu0 0.0
      %1406 = vmatpush1.msra.mxu0 %v650
      %1407 = vmatprep.subr.mxu0 0.0
      %1408 = vmatpush1.msra.mxu0 0.0
      %1409 = vmatprep.subr.mxu0 0.0
      %1410 = vmatpush1.msra.mxu0 0.0
      %1411 = vmatprep.subr.mxu0 0.0
      %1412 = vmatpush1.msra.mxu0 0.0
      %1413 = vmatprep.subr.mxu0 0.0
      %1414 = vmatpush1.msra.mxu0 0.0
      %1415 = vmatprep.subr.mxu0 0.0
      %1416 = vmatpush1.msra.mxu0 0.0
      %1417 = vmatprep.subr.mxu0 0.0
      %1418 = vmatpush1.msra.mxu0 0.0
      %1419 = vmatprep.subr.mxu0 0.0
      %1420 = vmatpush1.msra.mxu0 0.0
      %1421 = vmatprep.subr.mxu0 0.0
      %1422 = vmatpush1.msra.mxu0 0.0
      %1423 = vmatprep.subr.mxu0 0.0
      %1424 = vmatpush1.msra.mxu0 0.0
      %1425 = vmatprep.subr.mxu0 0.0
      %1426 = vmatpush1.msra.mxu0 0.0
      %1427 = vmatprep.subr.mxu0 0.0
      %1428 = vmatpush1.msra.mxu0 0.0
      %1429 = vmatprep.subr.mxu0 0.0
      %1430 = vmatpush1.msra.mxu0 0.0
      %1431 = vmatprep.subr.mxu0 0.0
      %1432 = vmatpush1.msra.mxu0 0.0
      %1433 = vmatprep.subr.mxu0 0.0
      %1434 = vmatpush1.msra.mxu0 0.0
      %1435 = vmatprep.subr.mxu0 0.0
      %1436 = vmatpush1.msra.mxu0 0.0
      %1437 = vmatprep.subr.mxu0 0.0
      %1438 = vmatpush1.msra.mxu0 0.0
      %1439 = vmatprep.mubr.f32.mxu0 0.0
      %1440 = vmatmul.mubr.f32.gmra.mrb[0].mxu0 0.0
      %v1441 = vpop.f32.mrb[0].mxu0
      %v1442 = vadd.f32 %v1217, %v1441
      %v1443 = vpop.f32.mrb[0].mxu0
      %1444 = vmatprep.mubr.f32.mxu0 0.0
      %1445 = vmatmul.mubr.f32.gmra.mrb[0].mxu0 0.0
      %v1446 = vpop.f32.mrb[0].mxu0
      %v1447 = vadd.f32 %v1222, %v1446
      %v1448 = vpop.f32.mrb[0].mxu0
      %1449 = vmatprep.mubr.f32.mxu0 0.0
      %1450 = vmatmul.mubr.f32.gmra.mrb[0].mxu0 %v509
      %v1451 = vpop.f32.mrb[0].mxu0
      %v1452 = vadd.f32 %v1227, %v1451
      %v1453 = vpop.f32.mrb[0].mxu0
      %1454 = vmatprep.mubr.f32.mxu0 0.0
      %1455 = vmatmul.mubr.f32.gmra.mrb[0].mxu0 %v587
      %v1456 = vpop.f32.mrb[0].mxu0
      %v1457 = vadd.f32 %v1232, %v1456
      %v1458 = vpop.f32.mrb[0].mxu0
      %1459 = vmatprep.mubr.f32.mxu0 0.0
      %1460 = vmatmul.mubr.f32.gmra.mrb[0].mxu0 %v512
      %v1461 = vpop.f32.mrb[0].mxu0
      %v1462 = vadd.f32 %v1237, %v1461
      %v1463 = vpop.f32.mrb[0].mxu0
      %1464 = vmatprep.mubr.f32.mxu0 0.0
      %1465 = vmatmul.mubr.f32.gmra.mrb[0].mxu0 %v588
      %v1466 = vpop.f32.mrb[0].mxu0
      %v1467 = vadd.f32 %v1242, %v1466
      %v1468 = vpop.f32.mrb[0].mxu0
      %1469 = vmatprep.mubr.f32.mxu0 0.0
      %1470 = vmatmul.mubr.f32.gmra.mrb[0].mxu0 %v515
      %v1471 = vpop.f32.mrb[0].mxu0
      %v1472 = vadd.f32 %v1247, %v1471
      %v1473 = vpop.f32.mrb[0].mxu0
      %1474 = vmatprep.mubr.f32.mxu0 0.0
      %1475 = vmatmul.mubr.f32.gmra.mrb[0].mxu0 %v589
      %v1476 = vpop.f32.mrb[0].mxu0
      %v1477 = vadd.f32 %v1252, %v1476
      %v1478 = vpop.f32.mrb[0].mxu0
      %1479 = vmatprep.mubr.f32.mxu0 0.0
      %1480 = vmatmul.mubr.f32.gmra.mrb[0].mxu0 %v518
      %v1481 = vpop.f32.mrb[0].mxu0
      %v1482 = vadd.f32 %v1257, %v1481
      %v1483 = vpop.f32.mrb[0].mxu0
      %1484 = vmatprep.mubr.f32.mxu0 0.0
      %1485 = vmatmul.mubr.f32.gmra.mrb[0].mxu0 %v590
      %v1486 = vpop.f32.mrb[0].mxu0
      %v1487 = vadd.f32 %v1262, %v1486
      %v1488 = vpop.f32.mrb[0].mxu0
      %1489 = vmatprep.mubr.f32.mxu0 0.0
      %1490 = vmatmul.mubr.f32.gmra.mrb[0].mxu0 %v521
      %v1491 = vpop.f32.mrb[0].mxu0
      %v1492 = vadd.f32 %v1267, %v1491
      %v1493 = vpop.f32.mrb[0].mxu0
      %1494 = vmatprep.mubr.f32.mxu0 0.0
      %1495 = vmatmul.mubr.f32.gmra.mrb[0].mxu0 %v591
      %v1496 = vpop.f32.mrb[0].mxu0
      %v1497 = vadd.f32 %v1272, %v1496
      %v1498 = vpop.f32.mrb[0].mxu0
      %1499 = vmatprep.mubr.f32.mxu0 0.0
      %1500 = vmatmul.mubr.f32.gmra.mrb[0].mxu0 %v524
      %v1501 = vpop.f32.mrb[0].mxu0
      %v1502 = vadd.f32 %v1277, %v1501
      %v1503 = vpop.f32.mrb[0].mxu0
      %1504 = vmatprep.mubr.f32.mxu0 0.0
      %1505 = vmatmul.mubr.f32.gmra.mrb[0].mxu0 %v592
      %v1506 = vpop.f32.mrb[0].mxu0
      %v1507 = vadd.f32 %v1282, %v1506
      %v1508 = vpop.f32.mrb[0].mxu0
      %1509 = vmatprep.mubr.f32.mxu0 0.0
      %1510 = vmatmul.mubr.f32.gmra.mrb[0].mxu0 %v527
      %v1511 = vpop.f32.mrb[0].mxu0
      %v1512 = vadd.f32 %v1287, %v1511
      %v1513 = vpop.f32.mrb[0].mxu0
      %1514 = vmatprep.mubr.f32.mxu0 0.0
      %1515 = vmatmul.mubr.f32.gmra.mrb[0].mxu0 %v593
      %v1516 = vpop.f32.mrb[0].mxu0
      %v1517 = vadd.f32 %v1292, %v1516
      %v1518 = vpop.f32.mrb[0].mxu0
      %1519 = vmatprep.mubr.f32.mxu0 0.0
      %1520 = vmatmul.mubr.f32.gmra.mrb[0].mxu0 %v530
      %v1521 = vpop.f32.mrb[0].mxu0
      %v1522 = vadd.f32 %v1297, %v1521
      %v1523 = vpop.f32.mrb[0].mxu0
      %1524 = vmatprep.mubr.f32.mxu0 0.0
      %1525 = vmatmul.mubr.f32.gmra.mrb[0].mxu0 %v594
      %v1526 = vpop.f32.mrb[0].mxu0
      %v1527 = vadd.f32 %v1302, %v1526
      %v1528 = vpop.f32.mrb[0].mxu0
      %1529 = vmatprep.mubr.f32.mxu0 0.0
      %1530 = vmatmul.mubr.f32.gmra.mrb[0].mxu0 %v533
      %v1531 = vpop.f32.mrb[0].mxu0
      %v1532 = vadd.f32 %v1307, %v1531
      %v1533 = vpop.f32.mrb[0].mxu0
      %1534 = vmatprep.mubr.f32.mxu0 0.0
      %1535 = vmatmul.mubr.f32.gmra.mrb[0].mxu0 %v595
      %v1536 = vpop.f32.mrb[0].mxu0
      %v1537 = vadd.f32 %v1312, %v1536
      %v1538 = vpop.f32.mrb[0].mxu0
      %1539 = vmatprep.mubr.f32.mxu0 0.0
      %1540 = vmatmul.mubr.f32.gmra.mrb[0].mxu0 %v536
      %v1541 = vpop.f32.mrb[0].mxu0
      %v1542 = vadd.f32 %v1317, %v1541
      %v1543 = vpop.f32.mrb[0].mxu0
      %1544 = vmatprep.mubr.f32.mxu0 0.0
      %1545 = vmatmul.mubr.f32.gmra.mrb[0].mxu0 %v596
      %v1546 = vpop.f32.mrb[0].mxu0
      %v1547 = vadd.f32 %v1322, %v1546
      %v1548 = vpop.f32.mrb[0].mxu0
      %1549 = vmatprep.mubr.f32.mxu0 0.0
      %1550 = vmatmul.mubr.f32.gmra.mrb[0].mxu0 %v539
      %v1551 = vpop.f32.mrb[0].mxu0
      %v1552 = vadd.f32 %v1327, %v1551
      %v1553 = vpop.f32.mrb[0].mxu0
      %1554 = vmatprep.mubr.f32.mxu0 0.0
      %1555 = vmatmul.mubr.f32.gmra.mrb[0].mxu0 %v597
      %v1556 = vpop.f32.mrb[0].mxu0
      %v1557 = vadd.f32 %v1332, %v1556
      %v1558 = vpop.f32.mrb[0].mxu0
      %1559 = vmatprep.mubr.f32.mxu0 0.0
      %1560 = vmatmul.mubr.f32.gmra.mrb[0].mxu0 %v542
      %v1561 = vpop.f32.mrb[0].mxu0
      %v1562 = vadd.f32 %v1337, %v1561
      %v1563 = vpop.f32.mrb[0].mxu0
      %1564 = vmatprep.mubr.f32.mxu0 0.0
      %1565 = vmatmul.mubr.f32.gmra.mrb[0].mxu0 %v598
      %v1566 = vpop.f32.mrb[0].mxu0
      %v1567 = vadd.f32 %v1342, %v1566
      %v1568 = vpop.f32.mrb[0].mxu0
      %1569 = vmatprep.mubr.f32.mxu0 0.0
      %1570 = vmatmul.mubr.f32.gmra.mrb[0].mxu0 %v545
      %v1571 = vpop.f32.mrb[0].mxu0
      %v1572 = vadd.f32 %v1347, %v1571
      %v1573 = vpop.f32.mrb[0].mxu0
      %1574 = vmatprep.mubr.f32.mxu0 0.0
      %1575 = vmatmul.mubr.f32.gmra.mrb[0].mxu0 %v599
      %v1576 = vpop.f32.mrb[0].mxu0
      %v1577 = vadd.f32 %v1352, %v1576
      %v1578 = vpop.f32.mrb[0].mxu0
      %1579 = vmatprep.mubr.f32.mxu0 0.0
      %1580 = vmatmul.mubr.f32.gmra.mrb[0].mxu0 %v548
      %v1581 = vpop.f32.mrb[0].mxu0
      %v1582 = vadd.f32 %v1357, %v1581
      %v1583 = vpop.f32.mrb[0].mxu0
      %1584 = vmatprep.mubr.f32.mxu0 0.0
      %1585 = vmatmul.mubr.f32.gmra.mrb[0].mxu0 %v600
      %v1586 = vpop.f32.mrb[0].mxu0
      %v1587 = vadd.f32 %v1362, %v1586
      %v1588 = vpop.f32.mrb[0].mxu0
      %1589 = vmatprep.mubr.f32.mxu0 0.0
      %1590 = vmatmul.mubr.f32.gmra.mrb[0].mxu0 %v551
      %v1591 = vpop.f32.mrb[0].mxu0
      %v1592 = vadd.f32 %v1367, %v1591
      %v1593 = vpop.f32.mrb[0].mxu0
      %1594 = vmatprep.mubr.f32.mxu0 0.0
      %1595 = vmatmul.mubr.f32.gmra.mrb[0].mxu0 %v601
      %v1596 = vpop.f32.mrb[0].mxu0
      %v1597 = vadd.f32 %v1372, %v1596
      %v1598 = vpop.f32.mrb[0].mxu0
      %1599 = vdwg.mxu0
      %s1600 = scalar_lea.vmem %s226, 768
      %v1601 = vld [vmem:[%s1600] sm:$0xff]
      %v1602 = vld [vmem:[%s1600 + $0x8] sm:$0xff]
      %v1603 = vld [vmem:[%s1600 + $0x10] sm:$0xff]
      %v1604 = vld [vmem:[%s1600 + $0x18] sm:$0xff]
      %v1605 = vld [vmem:[%s1600 + $0x20] sm:$0xff]
      %v1606 = vld [vmem:[%s1600 + $0x28] sm:$0xff]
      %v1607 = vld [vmem:[%s1600 + $0x30] sm:$0xff]
      %v1608 = vld [vmem:[%s1600 + $0x38] sm:$0xff]
      %v1609 = vld [vmem:[%s1600 + $0x40] sm:$0xff]
      %v1610 = vld [vmem:[%s1600 + $0x48] sm:$0xff]
      %v1611 = vld [vmem:[%s1600 + $0x50] sm:$0xff]
      %v1612 = vld [vmem:[%s1600 + $0x58] sm:$0xff]
      %v1613 = vld [vmem:[%s1600 + $0x60] sm:$0xff]
      %v1614 = vld [vmem:[%s1600 + $0x68] sm:$0xff]
      %v1615 = vld [vmem:[%s1600 + $0x70] sm:$0xff]
      %v1616 = vld [vmem:[%s1600 + $0x78] sm:$0xff]
      %v1617 = vld [vmem:[%s1600 + $0x80] sm:$0xff]
      %v1618 = vld [vmem:[%s1600 + $0x88] sm:$0xff]
      %v1619 = vld [vmem:[%s1600 + $0x90] sm:$0xff]
      %v1620 = vld [vmem:[%s1600 + $0x98] sm:$0xff]
      %v1621 = vld [vmem:[%s1600 + $0xa0] sm:$0xff]
      %v1622 = vld [vmem:[%s1600 + $0xa8] sm:$0xff]
      %v1623 = vld [vmem:[%s1600 + $0xb0] sm:$0xff]
      %v1624 = vld [vmem:[%s1600 + $0xb8] sm:$0xff]
      %v1625 = vld [vmem:[%s1600 + $0xc0] sm:$0xff]
      %v1626 = vld [vmem:[%s1600 + $0xc8] sm:$0xff]
      %v1627 = vld [vmem:[%s1600 + $0xd0] sm:$0xff]
      %v1628 = vld [vmem:[%s1600 + $0xd8] sm:$0xff]
      %v1629 = vld [vmem:[%s1600 + $0xe0] sm:$0xff]
      %v1630 = vld [vmem:[%s1600 + $0xe8] sm:$0xff]
      %v1631 = vld [vmem:[%s1600 + $0xf0] sm:$0xff]
      %v1632 = vld [vmem:[%s1600 + $0xf8] sm:$0xff]
      %v1633 = vld [vmem:[%s1600 + $0x100] sm:$0xff]
      %v1634 = vld [vmem:[%s1600 + $0x108] sm:$0xff]
      %v1635 = vld [vmem:[%s1600 + $0x110] sm:$0xff]
      %v1636 = vld [vmem:[%s1600 + $0x118] sm:$0xff]
      %v1637 = vld [vmem:[%s1600 + $0x120] sm:$0xff]
      %v1638 = vld [vmem:[%s1600 + $0x128] sm:$0xff]
      %v1639 = vld [vmem:[%s1600 + $0x130] sm:$0xff]
      %v1640 = vld [vmem:[%s1600 + $0x138] sm:$0xff]
      %v1641 = vld [vmem:[%s1600 + $0x140] sm:$0xff]
      %v1642 = vld [vmem:[%s1600 + $0x148] sm:$0xff]
      %v1643 = vld [vmem:[%s1600 + $0x150] sm:$0xff]
      %v1644 = vld [vmem:[%s1600 + $0x158] sm:$0xff]
      %v1645 = vld [vmem:[%s1600 + $0x160] sm:$0xff]
      %v1646 = vld [vmem:[%s1600 + $0x168] sm:$0xff]
      %v1647 = vld [vmem:[%s1600 + $0x170] sm:$0xff]
      %v1648 = vld [vmem:[%s1600 + $0x178] sm:$0xff]
      %1649 = vmatprep.subr.mxu0 0.0
      %1650 = vmatpush1.msra.mxu0 %v1601
      %1651 = vmatprep.subr.mxu0 0.0
      %1652 = vmatpush1.msra.mxu0 %v1602
      %1653 = vmatprep.subr.mxu0 0.0
      %1654 = vmatpush1.msra.mxu0 %v1603
      %1655 = vmatprep.subr.mxu0 0.0
      %1656 = vmatpush1.msra.mxu0 %v1604
      %1657 = vmatprep.subr.mxu0 0.0
      %1658 = vmatpush1.msra.mxu0 %v1605
      %1659 = vmatprep.subr.mxu0 0.0
      %1660 = vmatpush1.msra.mxu0 %v1606
      %1661 = vmatprep.subr.mxu0 0.0
      %1662 = vmatpush1.msra.mxu0 %v1607
      %1663 = vmatprep.subr.mxu0 0.0
      %1664 = vmatpush1.msra.mxu0 %v1608
      %1665 = vmatprep.subr.mxu0 0.0
      %1666 = vmatpush1.msra.mxu0 %v1609
      %1667 = vmatprep.subr.mxu0 0.0
      %1668 = vmatpush1.msra.mxu0 %v1610
      %1669 = vmatprep.subr.mxu0 0.0
      %1670 = vmatpush1.msra.mxu0 %v1611
      %1671 = vmatprep.subr.mxu0 0.0
      %1672 = vmatpush1.msra.mxu0 %v1612
      %1673 = vmatprep.subr.mxu0 0.0
      %1674 = vmatpush1.msra.mxu0 %v1613
      %1675 = vmatprep.subr.mxu0 0.0
      %1676 = vmatpush1.msra.mxu0 %v1614
      %1677 = vmatprep.subr.mxu0 0.0
      %1678 = vmatpush1.msra.mxu0 %v1615
      %1679 = vmatprep.subr.mxu0 0.0
      %1680 = vmatpush1.msra.mxu0 %v1616
      %1681 = vmatprep.subr.mxu0 0.0
      %1682 = vmatpush1.msra.mxu0 %v1617
      %1683 = vmatprep.subr.mxu0 0.0
      %1684 = vmatpush1.msra.mxu0 %v1618
      %1685 = vmatprep.subr.mxu0 0.0
      %1686 = vmatpush1.msra.mxu0 %v1619
      %1687 = vmatprep.subr.mxu0 0.0
      %1688 = vmatpush1.msra.mxu0 %v1620
      %1689 = vmatprep.subr.mxu0 0.0
      %1690 = vmatpush1.msra.mxu0 %v1621
      %1691 = vmatprep.subr.mxu0 0.0
      %1692 = vmatpush1.msra.mxu0 %v1622
      %1693 = vmatprep.subr.mxu0 0.0
      %1694 = vmatpush1.msra.mxu0 %v1623
      %1695 = vmatprep.subr.mxu0 0.0
      %1696 = vmatpush1.msra.mxu0 %v1624
      %1697 = vmatprep.subr.mxu0 0.0
      %1698 = vmatpush1.msra.mxu0 %v1625
      %1699 = vmatprep.subr.mxu0 0.0
      %1700 = vmatpush1.msra.mxu0 %v1626
      %1701 = vmatprep.subr.mxu0 0.0
      %1702 = vmatpush1.msra.mxu0 %v1627
      %1703 = vmatprep.subr.mxu0 0.0
      %1704 = vmatpush1.msra.mxu0 %v1628
      %1705 = vmatprep.subr.mxu0 0.0
      %1706 = vmatpush1.msra.mxu0 %v1629
      %1707 = vmatprep.subr.mxu0 0.0
      %1708 = vmatpush1.msra.mxu0 %v1630
      %1709 = vmatprep.subr.mxu0 0.0
      %1710 = vmatpush1.msra.mxu0 %v1631
      %1711 = vmatprep.subr.mxu0 0.0
      %1712 = vmatpush1.msra.mxu0 %v1632
      %1713 = vmatprep.mubr.f32.mxu0 %v347
      %1714 = vmatmul.mubr.f32.gmra.mrb[0].mxu0 %v491
      %v1715 = vpop.f32.mrb[0].mxu0
      %v1716 = vadd.f32 0.0, %v1715
      %v1717 = vpop.f32.mrb[0].mxu0
      %1718 = vmatprep.mubr.f32.mxu0 %v348
      %1719 = vmatmul.mubr.f32.gmra.mrb[0].mxu0 %v415
      %v1720 = vpop.f32.mrb[0].mxu0
      %v1721 = vadd.f32 0.0, %v1720
      %v1722 = vpop.f32.mrb[0].mxu0
      %1723 = vmatprep.mubr.f32.mxu0 %v349
      %1724 = vmatmul.mubr.f32.gmra.mrb[0].mxu0 %v492
      %v1725 = vpop.f32.mrb[0].mxu0
      %v1726 = vadd.f32 0.0, %v1725
      %v1727 = vpop.f32.mrb[0].mxu0
      %1728 = vmatprep.mubr.f32.mxu0 %v350
      %1729 = vmatmul.mubr.f32.gmra.mrb[0].mxu0 %v418
      %v1730 = vpop.f32.mrb[0].mxu0
      %v1731 = vadd.f32 0.0, %v1730
      %v1732 = vpop.f32.mrb[0].mxu0
      %1733 = vmatprep.mubr.f32.mxu0 %v351
      %1734 = vmatmul.mubr.f32.gmra.mrb[0].mxu0 %v493
      %v1735 = vpop.f32.mrb[0].mxu0
      %v1736 = vadd.f32 0.0, %v1735
      %v1737 = vpop.f32.mrb[0].mxu0
      %1738 = vmatprep.mubr.f32.mxu0 %v352
      %1739 = vmatmul.mubr.f32.gmra.mrb[0].mxu0 %v421
      %v1740 = vpop.f32.mrb[0].mxu0
      %v1741 = vadd.f32 0.0, %v1740
      %v1742 = vpop.f32.mrb[0].mxu0
      %1743 = vmatprep.mubr.f32.mxu0 %v353
      %1744 = vmatmul.mubr.f32.gmra.mrb[0].mxu0 %v494
      %v1745 = vpop.f32.mrb[0].mxu0
      %v1746 = vadd.f32 0.0, %v1745
      %v1747 = vpop.f32.mrb[0].mxu0
      %1748 = vmatprep.mubr.f32.mxu0 %v354
      %1749 = vmatmul.mubr.f32.gmra.mrb[0].mxu0 %v424
      %v1750 = vpop.f32.mrb[0].mxu0
      %v1751 = vadd.f32 0.0, %v1750
      %v1752 = vpop.f32.mrb[0].mxu0
      %1753 = vmatprep.mubr.f32.mxu0 %v355
      %1754 = vmatmul.mubr.f32.gmra.mrb[0].mxu0 %v495
      %v1755 = vpop.f32.mrb[0].mxu0
      %v1756 = vadd.f32 0.0, %v1755
      %v1757 = vpop.f32.mrb[0].mxu0
      %1758 = vmatprep.mubr.f32.mxu0 %v356
      %1759 = vmatmul.mubr.f32.gmra.mrb[0].mxu0 %v427
      %v1760 = vpop.f32.mrb[0].mxu0
      %v1761 = vadd.f32 0.0, %v1760
      %v1762 = vpop.f32.mrb[0].mxu0
      %1763 = vmatprep.mubr.f32.mxu0 %v357
      %1764 = vmatmul.mubr.f32.gmra.mrb[0].mxu0 %v496
      %v1765 = vpop.f32.mrb[0].mxu0
      %v1766 = vadd.f32 0.0, %v1765
      %v1767 = vpop.f32.mrb[0].mxu0
      %1768 = vmatprep.mubr.f32.mxu0 %v358
      %1769 = vmatmul.mubr.f32.gmra.mrb[0].mxu0 %v430
      %v1770 = vpop.f32.mrb[0].mxu0
      %v1771 = vadd.f32 0.0, %v1770
      %v1772 = vpop.f32.mrb[0].mxu0
      %1773 = vmatprep.mubr.f32.mxu0 %v359
      %1774 = vmatmul.mubr.f32.gmra.mrb[0].mxu0 %v497
      %v1775 = vpop.f32.mrb[0].mxu0
      %v1776 = vadd.f32 0.0, %v1775
      %v1777 = vpop.f32.mrb[0].mxu0
      %1778 = vmatprep.mubr.f32.mxu0 %v360
      %1779 = vmatmul.mubr.f32.gmra.mrb[0].mxu0 %v433
      %v1780 = vpop.f32.mrb[0].mxu0
      %v1781 = vadd.f32 0.0, %v1780
      %v1782 = vpop.f32.mrb[0].mxu0
      %1783 = vmatprep.mubr.f32.mxu0 %v361
      %1784 = vmatmul.mubr.f32.gmra.mrb[0].mxu0 %v498
      %v1785 = vpop.f32.mrb[0].mxu0
      %v1786 = vadd.f32 0.0, %v1785
      %v1787 = vpop.f32.mrb[0].mxu0
      %1788 = vmatprep.mubr.f32.mxu0 %v362
      %1789 = vmatmul.mubr.f32.gmra.mrb[0].mxu0 %v436
      %v1790 = vpop.f32.mrb[0].mxu0
      %v1791 = vadd.f32 0.0, %v1790
      %v1792 = vpop.f32.mrb[0].mxu0
      %1793 = vmatprep.mubr.f32.mxu0 %v363
      %1794 = vmatmul.mubr.f32.gmra.mrb[0].mxu0 %v499
      %v1795 = vpop.f32.mrb[0].mxu0
      %v1796 = vadd.f32 0.0, %v1795
      %v1797 = vpop.f32.mrb[0].mxu0
      %1798 = vmatprep.mubr.f32.mxu0 %v364
      %1799 = vmatmul.mubr.f32.gmra.mrb[0].mxu0 %v439
      %v1800 = vpop.f32.mrb[0].mxu0
      %v1801 = vadd.f32 0.0, %v1800
      %v1802 = vpop.f32.mrb[0].mxu0
      %1803 = vmatprep.mubr.f32.mxu0 %v365
      %1804 = vmatmul.mubr.f32.gmra.mrb[0].mxu0 %v500
      %v1805 = vpop.f32.mrb[0].mxu0
      %v1806 = vadd.f32 0.0, %v1805
      %v1807 = vpop.f32.mrb[0].mxu0
      %1808 = vmatprep.mubr.f32.mxu0 %v366
      %1809 = vmatmul.mubr.f32.gmra.mrb[0].mxu0 %v442
      %v1810 = vpop.f32.mrb[0].mxu0
      %v1811 = vadd.f32 0.0, %v1810
      %v1812 = vpop.f32.mrb[0].mxu0
      %1813 = vmatprep.mubr.f32.mxu0 %v367
      %1814 = vmatmul.mubr.f32.gmra.mrb[0].mxu0 %v501
      %v1815 = vpop.f32.mrb[0].mxu0
      %v1816 = vadd.f32 0.0, %v1815
      %v1817 = vpop.f32.mrb[0].mxu0
      %1818 = vmatprep.mubr.f32.mxu0 %v368
      %1819 = vmatmul.mubr.f32.gmra.mrb[0].mxu0 %v445
      %v1820 = vpop.f32.mrb[0].mxu0
      %v1821 = vadd.f32 0.0, %v1820
      %v1822 = vpop.f32.mrb[0].mxu0
      %1823 = vmatprep.mubr.f32.mxu0 %v369
      %1824 = vmatmul.mubr.f32.gmra.mrb[0].mxu0 %v502
      %v1825 = vpop.f32.mrb[0].mxu0
      %v1826 = vadd.f32 0.0, %v1825
      %v1827 = vpop.f32.mrb[0].mxu0
      %1828 = vmatprep.mubr.f32.mxu0 %v370
      %1829 = vmatmul.mubr.f32.gmra.mrb[0].mxu0 %v448
      %v1830 = vpop.f32.mrb[0].mxu0
      %v1831 = vadd.f32 0.0, %v1830
      %v1832 = vpop.f32.mrb[0].mxu0
      %1833 = vmatprep.mubr.f32.mxu0 %v371
      %1834 = vmatmul.mubr.f32.gmra.mrb[0].mxu0 %v503
      %v1835 = vpop.f32.mrb[0].mxu0
      %v1836 = vadd.f32 0.0, %v1835
      %v1837 = vpop.f32.mrb[0].mxu0
      %1838 = vmatprep.mubr.f32.mxu0 %v372
      %1839 = vmatmul.mubr.f32.gmra.mrb[0].mxu0 %v451
      %v1840 = vpop.f32.mrb[0].mxu0
      %v1841 = vadd.f32 0.0, %v1840
      %v1842 = vpop.f32.mrb[0].mxu0
      %1843 = vmatprep.mubr.f32.mxu0 %v373
      %1844 = vmatmul.mubr.f32.gmra.mrb[0].mxu0 %v504
      %v1845 = vpop.f32.mrb[0].mxu0
      %v1846 = vadd.f32 0.0, %v1845
      %v1847 = vpop.f32.mrb[0].mxu0
      %1848 = vmatprep.mubr.f32.mxu0 %v374
      %1849 = vmatmul.mubr.f32.gmra.mrb[0].mxu0 %v454
      %v1850 = vpop.f32.mrb[0].mxu0
      %v1851 = vadd.f32 0.0, %v1850
      %v1852 = vpop.f32.mrb[0].mxu0
      %1853 = vmatprep.mubr.f32.mxu0 %v375
      %1854 = vmatmul.mubr.f32.gmra.mrb[0].mxu0 %v505
      %v1855 = vpop.f32.mrb[0].mxu0
      %v1856 = vadd.f32 0.0, %v1855
      %v1857 = vpop.f32.mrb[0].mxu0
      %1858 = vmatprep.mubr.f32.mxu0 %v376
      %1859 = vmatmul.mubr.f32.gmra.mrb[0].mxu0 %v457
      %v1860 = vpop.f32.mrb[0].mxu0
      %v1861 = vadd.f32 0.0, %v1860
      %v1862 = vpop.f32.mrb[0].mxu0
      %1863 = vmatprep.mubr.f32.mxu0 0.0
      %1864 = vmatmul.mubr.f32.gmra.mrb[0].mxu0 0.0
      %v1865 = vpop.f32.mrb[0].mxu0
      %v1866 = vadd.f32 0.0, %v1865
      %v1867 = vpop.f32.mrb[0].mxu0
      %1868 = vmatprep.mubr.f32.mxu0 0.0
      %1869 = vmatmul.mubr.f32.gmra.mrb[0].mxu0 0.0
      %v1870 = vpop.f32.mrb[0].mxu0
      %v1871 = vadd.f32 0.0, %v1870
      %v1872 = vpop.f32.mrb[0].mxu0
      %1873 = vdwg.mxu0
      %1874 = vmatprep.subr.mxu0 0.0
      %1875 = vmatpush1.msra.mxu0 %v1633
      %1876 = vmatprep.subr.mxu0 0.0
      %1877 = vmatpush1.msra.mxu0 %v1634
      %1878 = vmatprep.subr.mxu0 0.0
      %1879 = vmatpush1.msra.mxu0 %v1635
      %1880 = vmatprep.subr.mxu0 0.0
      %1881 = vmatpush1.msra.mxu0 %v1636
      %1882 = vmatprep.subr.mxu0 0.0
      %1883 = vmatpush1.msra.mxu0 %v1637
      %1884 = vmatprep.subr.mxu0 0.0
      %1885 = vmatpush1.msra.mxu0 %v1638
      %1886 = vmatprep.subr.mxu0 0.0
      %1887 = vmatpush1.msra.mxu0 %v1639
      %1888 = vmatprep.subr.mxu0 0.0
      %1889 = vmatpush1.msra.mxu0 %v1640
      %1890 = vmatprep.subr.mxu0 0.0
      %1891 = vmatpush1.msra.mxu0 %v1641
      %1892 = vmatprep.subr.mxu0 0.0
      %1893 = vmatpush1.msra.mxu0 %v1642
      %1894 = vmatprep.subr.mxu0 0.0
      %1895 = vmatpush1.msra.mxu0 %v1643
      %1896 = vmatprep.subr.mxu0 0.0
      %1897 = vmatpush1.msra.mxu0 %v1644
      %1898 = vmatprep.subr.mxu0 0.0
      %1899 = vmatpush1.msra.mxu0 %v1645
      %1900 = vmatprep.subr.mxu0 0.0
      %1901 = vmatpush1.msra.mxu0 %v1646
      %1902 = vmatprep.subr.mxu0 0.0
      %1903 = vmatpush1.msra.mxu0 %v1647
      %1904 = vmatprep.subr.mxu0 0.0
      %1905 = vmatpush1.msra.mxu0 %v1648
      %1906 = vmatprep.subr.mxu0 0.0
      %1907 = vmatpush1.msra.mxu0 0.0
      %1908 = vmatprep.subr.mxu0 0.0
      %1909 = vmatpush1.msra.mxu0 0.0
      %1910 = vmatprep.subr.mxu0 0.0
      %1911 = vmatpush1.msra.mxu0 0.0
      %1912 = vmatprep.subr.mxu0 0.0
      %1913 = vmatpush1.msra.mxu0 0.0
      %1914 = vmatprep.subr.mxu0 0.0
      %1915 = vmatpush1.msra.mxu0 0.0
      %1916 = vmatprep.subr.mxu0 0.0
      %1917 = vmatpush1.msra.mxu0 0.0
      %1918 = vmatprep.subr.mxu0 0.0
      %1919 = vmatpush1.msra.mxu0 0.0
      %1920 = vmatprep.subr.mxu0 0.0
      %1921 = vmatpush1.msra.mxu0 0.0
      %1922 = vmatprep.subr.mxu0 0.0
      %1923 = vmatpush1.msra.mxu0 0.0
      %1924 = vmatprep.subr.mxu0 0.0
      %1925 = vmatpush1.msra.mxu0 0.0
      %1926 = vmatprep.subr.mxu0 0.0
      %1927 = vmatpush1.msra.mxu0 0.0
      %1928 = vmatprep.subr.mxu0 0.0
      %1929 = vmatpush1.msra.mxu0 0.0
      %1930 = vmatprep.subr.mxu0 0.0
      %1931 = vmatpush1.msra.mxu0 0.0
      %1932 = vmatprep.subr.mxu0 0.0
      %1933 = vmatpush1.msra.mxu0 0.0
      %1934 = vmatprep.subr.mxu0 0.0
      %1935 = vmatpush1.msra.mxu0 0.0
      %1936 = vmatprep.subr.mxu0 0.0
      %1937 = vmatpush1.msra.mxu0 0.0
      %1938 = vmatprep.mubr.f32.mxu0 0.0
      %1939 = vmatmul.mubr.f32.gmra.mrb[0].mxu0 %v512
      %v1940 = vpop.f32.mrb[0].mxu0
      %v1941 = vadd.f32 %v1716, %v1940
      %v1942 = vpop.f32.mrb[0].mxu0
      %1943 = vmatprep.mubr.f32.mxu0 0.0
      %1944 = vmatmul.mubr.f32.gmra.mrb[0].mxu0 %v588
      %v1945 = vpop.f32.mrb[0].mxu0
      %v1946 = vadd.f32 %v1721, %v1945
      %v1947 = vpop.f32.mrb[0].mxu0
      %1948 = vmatprep.mubr.f32.mxu0 0.0
      %1949 = vmatmul.mubr.f32.gmra.mrb[0].mxu0 %v515
      %v1950 = vpop.f32.mrb[0].mxu0
      %v1951 = vadd.f32 %v1726, %v1950
      %v1952 = vpop.f32.mrb[0].mxu0
      %1953 = vmatprep.mubr.f32.mxu0 0.0
      %1954 = vmatmul.mubr.f32.gmra.mrb[0].mxu0 %v589
      %v1955 = vpop.f32.mrb[0].mxu0
      %v1956 = vadd.f32 %v1731, %v1955
      %v1957 = vpop.f32.mrb[0].mxu0
      %1958 = vmatprep.mubr.f32.mxu0 0.0
      %1959 = vmatmul.mubr.f32.gmra.mrb[0].mxu0 %v518
      %v1960 = vpop.f32.mrb[0].mxu0
      %v1961 = vadd.f32 %v1736, %v1960
      %v1962 = vpop.f32.mrb[0].mxu0
      %1963 = vmatprep.mubr.f32.mxu0 0.0
      %1964 = vmatmul.mubr.f32.gmra.mrb[0].mxu0 %v590
      %v1965 = vpop.f32.mrb[0].mxu0
      %v1966 = vadd.f32 %v1741, %v1965
      %v1967 = vpop.f32.mrb[0].mxu0
      %1968 = vmatprep.mubr.f32.mxu0 0.0
      %1969 = vmatmul.mubr.f32.gmra.mrb[0].mxu0 %v521
      %v1970 = vpop.f32.mrb[0].mxu0
      %v1971 = vadd.f32 %v1746, %v1970
      %v1972 = vpop.f32.mrb[0].mxu0
      %1973 = vmatprep.mubr.f32.mxu0 0.0
      %1974 = vmatmul.mubr.f32.gmra.mrb[0].mxu0 %v591
      %v1975 = vpop.f32.mrb[0].mxu0
      %v1976 = vadd.f32 %v1751, %v1975
      %v1977 = vpop.f32.mrb[0].mxu0
      %1978 = vmatprep.mubr.f32.mxu0 0.0
      %1979 = vmatmul.mubr.f32.gmra.mrb[0].mxu0 %v524
      %v1980 = vpop.f32.mrb[0].mxu0
      %v1981 = vadd.f32 %v1756, %v1980
      %v1982 = vpop.f32.mrb[0].mxu0
      %1983 = vmatprep.mubr.f32.mxu0 0.0
      %1984 = vmatmul.mubr.f32.gmra.mrb[0].mxu0 %v592
      %v1985 = vpop.f32.mrb[0].mxu0
      %v1986 = vadd.f32 %v1761, %v1985
      %v1987 = vpop.f32.mrb[0].mxu0
      %1988 = vmatprep.mubr.f32.mxu0 0.0
      %1989 = vmatmul.mubr.f32.gmra.mrb[0].mxu0 %v527
      %v1990 = vpop.f32.mrb[0].mxu0
      %v1991 = vadd.f32 %v1766, %v1990
      %v1992 = vpop.f32.mrb[0].mxu0
      %1993 = vmatprep.mubr.f32.mxu0 0.0
      %1994 = vmatmul.mubr.f32.gmra.mrb[0].mxu0 %v593
      %v1995 = vpop.f32.mrb[0].mxu0
      %v1996 = vadd.f32 %v1771, %v1995
      %v1997 = vpop.f32.mrb[0].mxu0
      %1998 = vmatprep.mubr.f32.mxu0 0.0
      %1999 = vmatmul.mubr.f32.gmra.mrb[0].mxu0 %v530
      %v2000 = vpop.f32.mrb[0].mxu0
      %v2001 = vadd.f32 %v1776, %v2000
      %v2002 = vpop.f32.mrb[0].mxu0
      %2003 = vmatprep.mubr.f32.mxu0 0.0
      %2004 = vmatmul.mubr.f32.gmra.mrb[0].mxu0 %v594
      %v2005 = vpop.f32.mrb[0].mxu0
      %v2006 = vadd.f32 %v1781, %v2005
      %v2007 = vpop.f32.mrb[0].mxu0
      %2008 = vmatprep.mubr.f32.mxu0 0.0
      %2009 = vmatmul.mubr.f32.gmra.mrb[0].mxu0 %v533
      %v2010 = vpop.f32.mrb[0].mxu0
      %v2011 = vadd.f32 %v1786, %v2010
      %v2012 = vpop.f32.mrb[0].mxu0
      %2013 = vmatprep.mubr.f32.mxu0 0.0
      %2014 = vmatmul.mubr.f32.gmra.mrb[0].mxu0 %v595
      %v2015 = vpop.f32.mrb[0].mxu0
      %v2016 = vadd.f32 %v1791, %v2015
      %v2017 = vpop.f32.mrb[0].mxu0
      %2018 = vmatprep.mubr.f32.mxu0 0.0
      %2019 = vmatmul.mubr.f32.gmra.mrb[0].mxu0 %v536
      %v2020 = vpop.f32.mrb[0].mxu0
      %v2021 = vadd.f32 %v1796, %v2020
      %v2022 = vpop.f32.mrb[0].mxu0
      %2023 = vmatprep.mubr.f32.mxu0 0.0
      %2024 = vmatmul.mubr.f32.gmra.mrb[0].mxu0 %v596
      %v2025 = vpop.f32.mrb[0].mxu0
      %v2026 = vadd.f32 %v1801, %v2025
      %v2027 = vpop.f32.mrb[0].mxu0
      %2028 = vmatprep.mubr.f32.mxu0 0.0
      %2029 = vmatmul.mubr.f32.gmra.mrb[0].mxu0 %v539
      %v2030 = vpop.f32.mrb[0].mxu0
      %v2031 = vadd.f32 %v1806, %v2030
      %v2032 = vpop.f32.mrb[0].mxu0
      %2033 = vmatprep.mubr.f32.mxu0 0.0
      %2034 = vmatmul.mubr.f32.gmra.mrb[0].mxu0 %v597
      %v2035 = vpop.f32.mrb[0].mxu0
      %v2036 = vadd.f32 %v1811, %v2035
      %v2037 = vpop.f32.mrb[0].mxu0
      %2038 = vmatprep.mubr.f32.mxu0 0.0
      %2039 = vmatmul.mubr.f32.gmra.mrb[0].mxu0 %v542
      %v2040 = vpop.f32.mrb[0].mxu0
      %v2041 = vadd.f32 %v1816, %v2040
      %v2042 = vpop.f32.mrb[0].mxu0
      %2043 = vmatprep.mubr.f32.mxu0 0.0
      %2044 = vmatmul.mubr.f32.gmra.mrb[0].mxu0 %v598
      %v2045 = vpop.f32.mrb[0].mxu0
      %v2046 = vadd.f32 %v1821, %v2045
      %v2047 = vpop.f32.mrb[0].mxu0
      %2048 = vmatprep.mubr.f32.mxu0 0.0
      %2049 = vmatmul.mubr.f32.gmra.mrb[0].mxu0 %v545
      %v2050 = vpop.f32.mrb[0].mxu0
      %v2051 = vadd.f32 %v1826, %v2050
      %v2052 = vpop.f32.mrb[0].mxu0
      %2053 = vmatprep.mubr.f32.mxu0 0.0
      %2054 = vmatmul.mubr.f32.gmra.mrb[0].mxu0 %v599
      %v2055 = vpop.f32.mrb[0].mxu0
      %v2056 = vadd.f32 %v1831, %v2055
      %v2057 = vpop.f32.mrb[0].mxu0
      %2058 = vmatprep.mubr.f32.mxu0 0.0
      %2059 = vmatmul.mubr.f32.gmra.mrb[0].mxu0 %v548
      %v2060 = vpop.f32.mrb[0].mxu0
      %v2061 = vadd.f32 %v1836, %v2060
      %v2062 = vpop.f32.mrb[0].mxu0
      %2063 = vmatprep.mubr.f32.mxu0 0.0
      %2064 = vmatmul.mubr.f32.gmra.mrb[0].mxu0 %v600
      %v2065 = vpop.f32.mrb[0].mxu0
      %v2066 = vadd.f32 %v1841, %v2065
      %v2067 = vpop.f32.mrb[0].mxu0
      %2068 = vmatprep.mubr.f32.mxu0 0.0
      %2069 = vmatmul.mubr.f32.gmra.mrb[0].mxu0 %v551
      %v2070 = vpop.f32.mrb[0].mxu0
      %v2071 = vadd.f32 %v1846, %v2070
      %v2072 = vpop.f32.mrb[0].mxu0
      %2073 = vmatprep.mubr.f32.mxu0 0.0
      %2074 = vmatmul.mubr.f32.gmra.mrb[0].mxu0 %v601
      %v2075 = vpop.f32.mrb[0].mxu0
      %v2076 = vadd.f32 %v1851, %v2075
      %v2077 = vpop.f32.mrb[0].mxu0
      %2078 = vmatprep.mubr.f32.mxu0 0.0
      %2079 = vmatmul.mubr.f32.gmra.mrb[0].mxu0 %v554
      %v2080 = vpop.f32.mrb[0].mxu0
      %v2081 = vadd.f32 %v1856, %v2080
      %v2082 = vpop.f32.mrb[0].mxu0
      %2083 = vmatprep.mubr.f32.mxu0 0.0
      %2084 = vmatmul.mubr.f32.gmra.mrb[0].mxu0 %v602
      %v2085 = vpop.f32.mrb[0].mxu0
      %v2086 = vadd.f32 %v1861, %v2085
      %v2087 = vpop.f32.mrb[0].mxu0
      %2088 = vmatprep.mubr.f32.mxu0 0.0
      %2089 = vmatmul.mubr.f32.gmra.mrb[0].mxu0 0.0
      %v2090 = vpop.f32.mrb[0].mxu0
      %v2091 = vadd.f32 %v1866, %v2090
      %v2092 = vpop.f32.mrb[0].mxu0
      %2093 = vmatprep.mubr.f32.mxu0 0.0
      %2094 = vmatmul.mubr.f32.gmra.mrb[0].mxu0 0.0
      %v2095 = vpop.f32.mrb[0].mxu0
      %v2096 = vadd.f32 %v1871, %v2095
      %v2097 = vpop.f32.mrb[0].mxu0
      %2098 = vdwg.mxu0
      %v2099 = vadd.f32 %v1442, %v1941
      %v2100 = vadd.f32 %v1447, %v1946
      %v2101 = vadd.f32 %v1452, %v1951
      %v2102 = vadd.f32 %v1457, %v1956
      %v2103 = vadd.f32 %v1462, %v1961
      %v2104 = vadd.f32 %v1467, %v1966
      %v2105 = vadd.f32 %v1472, %v1971
      %v2106 = vadd.f32 %v1477, %v1976
      %v2107 = vadd.f32 %v1482, %v1981
      %v2108 = vadd.f32 %v1487, %v1986
      %v2109 = vadd.f32 %v1492, %v1991
      %v2110 = vadd.f32 %v1497, %v1996
      %v2111 = vadd.f32 %v1502, %v2001
      %v2112 = vadd.f32 %v1507, %v2006
      %v2113 = vadd.f32 %v1512, %v2011
      %v2114 = vadd.f32 %v1517, %v2016
      %v2115 = vadd.f32 %v1522, %v2021
      %v2116 = vadd.f32 %v1527, %v2026
      %v2117 = vadd.f32 %v1532, %v2031
      %v2118 = vadd.f32 %v1537, %v2036
      %v2119 = vadd.f32 %v1542, %v2041
      %v2120 = vadd.f32 %v1547, %v2046
      %v2121 = vadd.f32 %v1552, %v2051
      %v2122 = vadd.f32 %v1557, %v2056
      %v2123 = vadd.f32 %v1562, %v2061
      %v2124 = vadd.f32 %v1567, %v2066
      %v2125 = vadd.f32 %v1572, %v2071
      %v2126 = vadd.f32 %v1577, %v2076
      %v2127 = vadd.f32 %v1582, %v2081
      %v2128 = vadd.f32 %v1587, %v2086
      %v2129 = vadd.f32 %v1592, %v2091
      %v2130 = vadd.f32 %v1597, %v2096
      %2131 = vst [vmem:[%s234] sm:$0xff] %v2099
      %2132 = vst [vmem:[%s234 + $0x8] sm:$0xff] %v2100
      %2133 = vst [vmem:[%s234 + $0x10] sm:$0xff] %v2101
      %2134 = vst [vmem:[%s234 + $0x18] sm:$0xff] %v2102
      %2135 = vst [vmem:[%s234 + $0x20] sm:$0xff] %v2103
      %2136 = vst [vmem:[%s234 + $0x28] sm:$0xff] %v2104
      %2137 = vst [vmem:[%s234 + $0x30] sm:$0xff] %v2105
      %2138 = vst [vmem:[%s234 + $0x38] sm:$0xff] %v2106
      %2139 = vst [vmem:[%s234 + $0x40] sm:$0xff] %v2107
      %2140 = vst [vmem:[%s234 + $0x48] sm:$0xff] %v2108
      %2141 = vst [vmem:[%s234 + $0x50] sm:$0xff] %v2109
      %2142 = vst [vmem:[%s234 + $0x58] sm:$0xff] %v2110
      %2143 = vst [vmem:[%s234 + $0x60] sm:$0xff] %v2111
      %2144 = vst [vmem:[%s234 + $0x68] sm:$0xff] %v2112
      %2145 = vst [vmem:[%s234 + $0x70] sm:$0xff] %v2113
      %2146 = vst [vmem:[%s234 + $0x78] sm:$0xff] %v2114
      %2147 = vst [vmem:[%s234 + $0x80] sm:$0xff] %v2115
      %2148 = vst [vmem:[%s234 + $0x88] sm:$0xff] %v2116
      %2149 = vst [vmem:[%s234 + $0x90] sm:$0xff] %v2117
      %2150 = vst [vmem:[%s234 + $0x98] sm:$0xff] %v2118
      %2151 = vst [vmem:[%s234 + $0xa0] sm:$0xff] %v2119
      %2152 = vst [vmem:[%s234 + $0xa8] sm:$0xff] %v2120
      %2153 = vst [vmem:[%s234 + $0xb0] sm:$0xff] %v2121
      %2154 = vst [vmem:[%s234 + $0xb8] sm:$0xff] %v2122
      %2155 = vst [vmem:[%s234 + $0xc0] sm:$0xff] %v2123
      %2156 = vst [vmem:[%s234 + $0xc8] sm:$0xff] %v2124
      %2157 = vst [vmem:[%s234 + $0xd0] sm:$0xff] %v2125
      %2158 = vst [vmem:[%s234 + $0xd8] sm:$0xff] %v2126
      %2159 = vst [vmem:[%s234 + $0xe0] sm:$0xff] %v2127
      %2160 = vst [vmem:[%s234 + $0xe8] sm:$0xff] %v2128
      %2161 = vst [vmem:[%s234 + $0xf0] sm:$0xff] %v2129
      %2162 = vst [vmem:[%s234 + $0xf8] sm:$0xff] %v2130
      %p2163 = scmp.lt.s32.totalorder %s19, 1
      %s2164 = scalar_select %p2163, %s19, 1
      %p2165 = scmp.lt.s32.totalorder %s20, 0
      %s2166 = scalar_select %p2165, %s20, 0
      %s2167 = smul.addr %s2164, 32
      %s2168 = sadd.s32 %s2166, %s2167
      %s2169 = smul.addr %s2168, 8
      %s2170 = scalar_lea.vmem %s4, %s2169
      // Predicated region
      $region37: #{wide_basic_block.2} parent=35 // pred_check
        %p2171 = pneg %p141
      $region38: #{wide_basic_block.2} parent=35 // pred_check_branch
        %2173 = sbr.rel (%p2171) target = $region40
      $region39: #{wide_basic_block.2} parent=35 // pred_region
        _
      $region40: #{wide_basic_block.2} parent=35 // pred_fallthru
        _
    $region36: #{wide_basic_block.2} parent=5 // pred_fallthru
      _
    %p2174 = scmp.le.s32.totalorder 2, %s10
    // Predicated region
    $region41: #{wide_basic_block.2} parent=5 // pred_check
      %p2175 = pneg %p2174
    $region42: #{wide_basic_block.2} parent=5 // pred_check_branch
      %2177 = sbr.rel (%p2175) target = $region44
    $region43: #{wide_basic_block.2} parent=5 // pred_region
      %s2178 = ssub.s32 %s10, 2
      // Predicated region
      $region45: #{wide_basic_block.2} parent=43 // pred_check
        %p2179 = pneg %p147
      $region46: #{wide_basic_block.2} parent=43 // pred_check_branch
        %2181 = sbr.rel (%p2179) target = $region48
      $region47: #{wide_basic_block.2} parent=43 // pred_region
        %p2182 = scmp.lt.s32.totalorder %s21, 1
        %s2183 = scalar_select %p2182, %s21, 1
        %p2184 = scmp.lt.s32.totalorder %s22, 0
        %s2185 = scalar_select %p2184, %s22, 0
        %s2186 = smul.addr %s2183, 32
        %s2187 = sadd.s32 %s2185, %s2186
        %s2188 = smul.addr %s2187, 8
        %s2189 = scalar_lea.vmem %s4, %s2188
      $region48: #{wide_basic_block.2} parent=43 // pred_fallthru
        _
    $region44: #{wide_basic_block.2} parent=5 // pred_fallthru
      _
  $region6: #{wide_basic_block.2} parent=0 // loop_footer
    %s14 = sadd.s32 1, %s10
  $region7: #{wide_basic_block.2} parent=0 // loop_footer_branch
    %9 = sbr.rel target = $region3
  $region8: #{wide_basic_block.2} parent=0 // loop_exit
    _

// kernel: wide_basic_block.3
$region0: #{wide_basic_block.3}
  #allocation0 [shape = 'u32[]', space=smem, size = 0x4, offset = 0x4, fixed_abs, tag = 'smem constant byte address 0x4 - core index']
  #allocation1 [shape = 'u32[144,128]{1,0:T(1,128)}', space=vmem, size = 0x12000, scoped, tag = 'internal scratch']
  %s0 = inlined_call_operand.vmem [shape: f32[2,16,16,128], index: 0, kind: input, shape index: {}]
  %s1 = inlined_call_operand.vmem [shape: f32[1,128], index: 1, kind: input, shape index: {}]
  %s2 = inlined_call_operand.vmem [shape: f32[1,128], index: 2, kind: input, shape index: {}]
  %s3 = inlined_call_operand.vmem [shape: f32[3,384,128], index: 3, kind: input, shape index: {}]
  %s4 = inlined_call_operand.vmem [shape: f32[2,16,16,128], index: 4, kind: input, shape index: {}]
  %s5 = inlined_call_operand.vmem [shape: f32[128,128], index: 5, kind: input, shape index: {}]
  %s6 = inlined_call_operand.vmem [shape: f32[2,16,16,128], index: 6, kind: output, shape index: {}]
  %s7 = sld [smem:[#allocation0]]
  $region57: #{wide_basic_block.3} parent=0
    _
  %s9 = ssub.s32 1, %s7
  %s10 = scalar_select 0, %s9, %s7
  loop: start=0, step=1, limit=4
  $region2: #{wide_basic_block.3} parent=0 // loop_pre_header
    _
  $region3: #{wide_basic_block.3} parent=0 // loop_header
    %s12 = sphi 0, %s16
    %p13 = scmp.ge.s32.totalorder %s12, 4
    %s19 = sphi 0, %s31
    %s20 = sphi 0, %s27
    %s21 = sphi 0, %s19
    %s22 = sphi 0, %s20
    %s23 = sphi 0, %s21
    %s24 = sphi 0, %s22
    %s34 = sphi 0, %s36
    %s37 = sphi 0, %s34
    %s38 = sphi 0, %s37
    %s54 = sphi 0, %s38
    %s58 = sphi 0, %s58
    %s60 = sphi 0, %s58
    %s61 = sphi 0, %s60
    %s75 = sphi 0, %s61
    %s79 = sphi 0, %s79
    %s81 = sphi 0, %s79
    %s82 = sphi 0, %s81
    %s96 = sphi 0, %s82
    %s102 = sphi 0, %s104
    %s105 = sphi 0, %s102
    %s106 = sphi 0, %s105
    %s122 = sphi 0, %s106
    %s128 = sphi 0, %s130
    %s131 = sphi 0, %s128
    %s132 = sphi 0, %s131
    %s148 = sphi 0, %s132
    %s154 = sphi 0, %s156
    %s157 = sphi 0, %s154
    %s158 = sphi 0, %s157
    %s174 = sphi 0, %s158
    %s182 = sphi 0, %s184
    %s185 = sphi 0, %s182
    %s186 = sphi 0, %s185
    %s202 = sphi 0, %s186
  $region4: #{wide_basic_block.3} parent=0 // loop_header_branch
    %15 = sbr.rel (%p13) target = $region8
  $region5: #{wide_basic_block.3} parent=0 // loop_body
    %s17 = ssub.s32 %s12, 1
    %s18 = ssub.s32 %s12, 2
    %s25 = sadd.s32 1, %s20
    %p26 = scmp.ge.s32.totalorder %s25, 1
    %s27 = scalar_select %p26, 0, %s25
    %s28 = sadd.s32 1, %s19
    %s29 = scalar_select %p26, %s28, %s19
    %p30 = scmp.ge.s32.totalorder %s29, 2
    %s31 = scalar_select %p30, 0, %s29
    %s32 = ssub.s32 %s19, %s31
    %p33 = scmp.eq.s32.totalorder %s32, 0
    %s35 = sadd.s32 %s34, 1
    %s36 = scalar_select %p33, %s34, %s35
    %p39 = pneg %p33
    %p40 = scmp.eq.s32.totalorder %s12, 1
    %p41 = por %p39, %p40
    %p42 = scmp.ne.s32.totalorder %s34, %s37
    %p43 = scmp.eq.s32.totalorder %s12, 0
    %p44 = por %p42, %p43
    %p45 = scmp.ne.s32.totalorder %s34, %s37
    %p46 = scmp.eq.s32.totalorder %s17, 1
    %p47 = por %p45, %p46
    %p48 = scmp.ne.s32.totalorder %s37, %s38
    %p49 = scmp.eq.s32.totalorder %s17, 0
    %p50 = por %p48, %p49
    %p51 = scmp.ne.s32.totalorder %s37, %s38
    %p52 = scmp.eq.s32.totalorder %s18, 1
    %p53 = por %p51, %p52
    %p55 = scmp.ne.s32.totalorder %s38, %s54
    %p56 = scmp.eq.s32.totalorder %s18, 0
    %p57 = por %p55, %p56
    %s59 = sadd.s32 %s58, 1
    %p62 = scmp.eq.s32.totalorder %s12, 1
    %p63 = scmp.ne.s32.totalorder %s58, %s60
    %p64 = scmp.eq.s32.totalorder %s12, 0
    %p65 = por %p63, %p64
    %p66 = scmp.ne.s32.totalorder %s58, %s60
    %p67 = scmp.eq.s32.totalorder %s17, 1
    %p68 = por %p66, %p67
    %p69 = scmp.ne.s32.totalorder %s60, %s61
    %p70 = scmp.eq.s32.totalorder %s17, 0
    %p71 = por %p69, %p70
    %p72 = scmp.ne.s32.totalorder %s60, %s61
    %p73 = scmp.eq.s32.totalorder %s18, 1
    %p74 = por %p72, %p73
    %p76 = scmp.ne.s32.totalorder %s61, %s75
    %p77 = scmp.eq.s32.totalorder %s18, 0
    %p78 = por %p76, %p77
    %s80 = sadd.s32 %s79, 1
    %p83 = scmp.eq.s32.totalorder %s12, 1
    %p84 = scmp.ne.s32.totalorder %s79, %s81
    %p85 = scmp.eq.s32.totalorder %s12, 0
    %p86 = por %p84, %p85
    %p87 = scmp.ne.s32.totalorder %s79, %s81
    %p88 = scmp.eq.s32.totalorder %s17, 1
    %p89 = por %p87, %p88
    %p90 = scmp.ne.s32.totalorder %s81, %s82
    %p91 = scmp.eq.s32.totalorder %s17, 0
    %p92 = por %p90, %p91
    %p93 = scmp.ne.s32.totalorder %s81, %s82
    %p94 = scmp.eq.s32.totalorder %s18, 1
    %p95 = por %p93, %p94
    %p97 = scmp.ne.s32.totalorder %s82, %s96
    %p98 = scmp.eq.s32.totalorder %s18, 0
    %p99 = por %p97, %p98
    %s100 = ssub.s32 %s20, %s27
    %p101 = scmp.eq.s32.totalorder %s100, 0
    %s103 = sadd.s32 %s102, 1
    %s104 = scalar_select %p101, %s102, %s103
    %p107 = pneg %p101
    %p108 = scmp.eq.s32.totalorder %s12, 1
    %p109 = por %p107, %p108
    %p110 = scmp.ne.s32.totalorder %s102, %s105
    %p111 = scmp.eq.s32.totalorder %s12, 0
    %p112 = por %p110, %p111
    %p113 = scmp.ne.s32.totalorder %s102, %s105
    %p114 = scmp.eq.s32.totalorder %s17, 1
    %p115 = por %p113, %p114
    %p116 = scmp.ne.s32.totalorder %s105, %s106
    %p117 = scmp.eq.s32.totalorder %s17, 0
    %p118 = por %p116, %p117
    %p119 = scmp.ne.s32.totalorder %s105, %s106
    %p120 = scmp.eq.s32.totalorder %s18, 1
    %p121 = por %p119, %p120
    %p123 = scmp.ne.s32.totalorder %s106, %s122
    %p124 = scmp.eq.s32.totalorder %s18, 0
    %p125 = por %p123, %p124
    %s126 = ssub.s32 %s19, %s31
    %p127 = scmp.eq.s32.totalorder %s126, 0
    %s129 = sadd.s32 %s128, 1
    %s130 = scalar_select %p127, %s128, %s129
    %p133 = pneg %p127
    %p134 = scmp.eq.s32.totalorder %s12, 1
    %p135 = por %p133, %p134
    %p136 = scmp.ne.s32.totalorder %s128, %s131
    %p137 = scmp.eq.s32.totalorder %s12, 0
    %p138 = por %p136, %p137
    %p139 = scmp.ne.s32.totalorder %s128, %s131
    %p140 = scmp.eq.s32.totalorder %s17, 1
    %p141 = por %p139, %p140
    %p142 = scmp.ne.s32.totalorder %s131, %s132
    %p143 = scmp.eq.s32.totalorder %s17, 0
    %p144 = por %p142, %p143
    %p145 = scmp.ne.s32.totalorder %s131, %s132
    %p146 = scmp.eq.s32.totalorder %s18, 1
    %p147 = por %p145, %p146
    %p149 = scmp.ne.s32.totalorder %s132, %s148
    %p150 = scmp.eq.s32.totalorder %s18, 0
    %p151 = por %p149, %p150
    %s152 = ssub.s32 %s20, %s27
    %p153 = scmp.eq.s32.totalorder %s152, 0
    %s155 = sadd.s32 %s154, 1
    %s156 = scalar_select %p153, %s154, %s155
    %p159 = pneg %p153
    %p160 = scmp.eq.s32.totalorder %s12, 1
    %p161 = por %p159, %p160
    %p162 = scmp.ne.s32.totalorder %s154, %s157
    %p163 = scmp.eq.s32.totalorder %s12, 0
    %p164 = por %p162, %p163
    %p165 = scmp.ne.s32.totalorder %s154, %s157
    %p166 = scmp.eq.s32.totalorder %s17, 1
    %p167 = por %p165, %p166
    %p168 = scmp.ne.s32.totalorder %s157, %s158
    %p169 = scmp.eq.s32.totalorder %s17, 0
    %p170 = por %p168, %p169
    %p171 = scmp.ne.s32.totalorder %s157, %s158
    %p172 = scmp.eq.s32.totalorder %s18, 1
    %p173 = por %p171, %p172
    %p175 = scmp.ne.s32.totalorder %s158, %s174
    %p176 = scmp.eq.s32.totalorder %s18, 0
    %p177 = por %p175, %p176
    %s178 = ssub.s32 %s19, %s31
    %s179 = ssub.s32 %s20, %s27
    %s180 = sor.u32 %s178, %s179
    %p181 = scmp.eq.s32.totalorder %s180, 0
    %s183 = sadd.s32 %s182, 1
    %s184 = scalar_select %p181, %s182, %s183
    %p187 = pneg %p181
    %p188 = scmp.eq.s32.totalorder %s12, 1
    %p189 = por %p187, %p188
    %p190 = scmp.ne.s32.totalorder %s182, %s185
    %p191 = scmp.eq.s32.totalorder %s12, 0
    %p192 = por %p190, %p191
    %p193 = scmp.ne.s32.totalorder %s182, %s185
    %p194 = scmp.eq.s32.totalorder %s17, 1
    %p195 = por %p193, %p194
    %p196 = scmp.ne.s32.totalorder %s185, %s186
    %p197 = scmp.eq.s32.totalorder %s17, 0
    %p198 = por %p196, %p197
    %p199 = scmp.ne.s32.totalorder %s185, %s186
    %p200 = scmp.eq.s32.totalorder %s18, 1
    %p201 = por %p199, %p200
    %p203 = scmp.ne.s32.totalorder %s186, %s202
    %p204 = scmp.eq.s32.totalorder %s18, 0
    %p205 = por %p203, %p204
    %p206 = scmp.le.s32.totalorder 1, %s12
    %p207 = scmp.lt.s32.totalorder %s12, 3
    %p208 = pnand %p206, %p207
    %p209 = pneg %p208
    // Predicated region
    $region9: #{wide_basic_block.3} parent=5 // pred_check
      _
    $region10: #{wide_basic_block.3} parent=5 // pred_check_branch
      %211 = sbr.rel (%p208) target = $region12
    $region11: #{wide_basic_block.3} parent=5 // pred_region
      %s212 = ssub.s32 %s12, 1
      // Predicated region
      $region13: #{wide_basic_block.3} parent=11 // pred_check
        %p213 = pneg %p71
      $region14: #{wide_basic_block.3} parent=11 // pred_check_branch
        %215 = sbr.rel (%p213) target = $region16
      $region15: #{wide_basic_block.3} parent=11 // pred_region
        _
      $region16: #{wide_basic_block.3} parent=11 // pred_fallthru
        _
      // Predicated region
      $region17: #{wide_basic_block.3} parent=11 // pred_check
        %p216 = pneg %p92
      $region18: #{wide_basic_block.3} parent=11 // pred_check_branch
        %218 = sbr.rel (%p216) target = $region20
      $region19: #{wide_basic_block.3} parent=11 // pred_region
        _
      $region20: #{wide_basic_block.3} parent=11 // pred_fallthru
        _
      // Predicated region
      $region21: #{wide_basic_block.3} parent=11 // pred_check
        %p219 = pneg %p118
      $region22: #{wide_basic_block.3} parent=11 // pred_check_branch
        %221 = sbr.rel (%p219) target = $region24
      $region23: #{wide_basic_block.3} parent=11 // pred_region
        %p222 = scmp.lt.s32.totalorder %s22, 0
        %s223 = scalar_select %p222, %s22, 0
        %s224 = smul.addr %s223, 8
        %s225 = scalar_lea.vmem %s3, %s224
      $region24: #{wide_basic_block.3} parent=11 // pred_fallthru
        _
      // Predicated region
      $region25: #{wide_basic_block.3} parent=11 // pred_check
        %p226 = pneg %p170
      $region26: #{wide_basic_block.3} parent=11 // pred_check_branch
        %228 = sbr.rel (%p226) target = $region28
      $region27: #{wide_basic_block.3} parent=11 // pred_region
        %p229 = scmp.lt.s32.totalorder %s22, 0
        %s230 = scalar_select %p229, %s22, 0
        %s231 = smul.addr %s230, 8
        %s232 = scalar_lea.vmem %s5, %s231
      $region28: #{wide_basic_block.3} parent=11 // pred_fallthru
        _
    $region12: #{wide_basic_block.3} parent=5 // pred_fallthru
      _
    %p233 = scmp.lt.s32.totalorder %s12, 2
    // Predicated region
    $region29: #{wide_basic_block.3} parent=5 // pred_check
      %p234 = pneg %p233
    $region30: #{wide_basic_block.3} parent=5 // pred_check_branch
      %236 = sbr.rel (%p234) target = $region32
    $region31: #{wide_basic_block.3} parent=5 // pred_region
      // Predicated region
      $region33: #{wide_basic_block.3} parent=31 // pred_check
        %p237 = pneg %p44
      $region34: #{wide_basic_block.3} parent=31 // pred_check_branch
        %239 = sbr.rel (%p237) target = $region36
      $region35: #{wide_basic_block.3} parent=31 // pred_region
        %p240 = scmp.lt.s32.totalorder %s19, 1
        %s241 = scalar_select %p240, %s19, 1
        %s242 = smul.addr %s241, 32
        %s243 = smul.addr %s242, 8
        %s244 = scalar_lea.vmem %s0, %s243
      $region36: #{wide_basic_block.3} parent=31 // pred_fallthru
        _
      // Predicated region
      $region37: #{wide_basic_block.3} parent=31 // pred_check
        %p245 = pneg %p138
      $region38: #{wide_basic_block.3} parent=31 // pred_check_branch
        %247 = sbr.rel (%p245) target = $region40
      $region39: #{wide_basic_block.3} parent=31 // pred_region
        %p248 = scmp.lt.s32.totalorder %s19, 1
        %s249 = scalar_select %p248, %s19, 1
        %s250 = smul.addr %s249, 32
        %s251 = smul.addr %s250, 8
        %s252 = scalar_lea.vmem %s4, %s251
      $region40: #{wide_basic_block.3} parent=31 // pred_fallthru
        _
    $region32: #{wide_basic_block.3} parent=5 // pred_fallthru
      _
    %p253 = scmp.le.s32.totalorder 1, %s12
    %p254 = scmp.lt.s32.totalorder %s12, 3
    %p255 = pnand %p253, %p254
    %p256 = pneg %p255
    // Predicated region
    $region41: #{wide_basic_block.3} parent=5 // pred_check
      _
    $region42: #{wide_basic_block.3} parent=5 // pred_check_branch
      %258 = sbr.rel (%p255) target = $region44
    $region43: #{wide_basic_block.3} parent=5 // pred_region
      %s259 = ssub.s32 %s12, 1
      %p260 = scmp.lt.s32.totalorder %s21, 1
      %s261 = scalar_select %p260, %s21, 1
      %s262 = smul.addr %s261, 32
      %s263 = smul.addr %s262, 8
      %s264 = scalar_lea.vmem %s0, %s263
      %p265 = pneg %p50
      %p266 = pneg %p47
      %p267 = pneg %p71
      %p268 = pneg %p68
      %p269 = pneg %p92
      %p270 = pneg %p89
      %p271 = scmp.lt.s32.totalorder %s22, 0
      %s272 = scalar_select %p271, %s22, 0
      %s273 = smul.addr %s272, 8
      %s274 = scalar_lea.vmem %s3, %s273
      %p275 = pneg %p118
      %p276 = pneg %p115
      %p277 = scmp.lt.s32.totalorder %s21, 1
      %s278 = scalar_select %p277, %s21, 1
      %s279 = smul.addr %s278, 32
      %s280 = smul.addr %s279, 8
      %s281 = scalar_lea.vmem %s4, %s280
      %p282 = pneg %p144
      %p283 = pneg %p141
      %p284 = scmp.lt.s32.totalorder %s22, 0
      %s285 = scalar_select %p284, %s22, 0
      %s286 = smul.addr %s285, 8
      %s287 = scalar_lea.vmem %s5, %s286
      %p288 = pneg %p170
      %p289 = pneg %p167
      %p290 = pneg %p198
      %p291 = pneg %p195
      %p292 = scmp.lt.s32.totalorder %s21, 1
      %s293 = scalar_select %p292, %s21, 1
      %p294 = scmp.lt.s32.totalorder %s22, 0
      %s295 = scalar_select %p294, %s22, 0
      %s296 = smul.addr %s293, 32
      %s297 = sadd.s32 %s295, %s296
      %s298 = smul.addr %s297, 8
      %s299 = scalar_lea.vmem %s6, %s298
      %p300 = scmp.lt.s32.totalorder %s21, 1
      %s301 = scalar_select %p300, %s21, 1
      %s302 = smul.addr %s301, 32
      %s303 = smul.addr %s302, 8
      %s304 = scalar_lea.vmem %s0, %s303
      %p305 = scmp.lt.s32.totalorder %s22, 0
      %s306 = scalar_select %p305, %s22, 0
      %s307 = smul.addr %s306, 8
      %s308 = scalar_lea.vmem %s3, %s307
      %p309 = scmp.lt.s32.totalorder %s21, 1
      %s310 = scalar_select %p309, %s21, 1
      %s311 = smul.addr %s310, 32
      %s312 = smul.addr %s311, 8
      %s313 = scalar_lea.vmem %s4, %s312
      %p314 = scmp.lt.s32.totalorder %s22, 0
      %s315 = scalar_select %p314, %s22, 0
      %s316 = smul.addr %s315, 8
      %s317 = scalar_lea.vmem %s5, %s316
      %p318 = scmp.lt.s32.totalorder %s21, 1
      %s319 = scalar_select %p318, %s21, 1
      %p320 = scmp.lt.s32.totalorder %s22, 0
      %s321 = scalar_select %p320, %s22, 0
      %s322 = smul.addr %s319, 32
      %s323 = sadd.s32 %s321, %s322
      %s324 = smul.addr %s323, 8
      %s325 = scalar_lea.vmem %s6, %s324
      %v326 = vld [vmem:[%s304] sm:$0xff]
      %v327 = vld [vmem:[%s304 + $0x8] sm:$0xff]
      %v328 = vld [vmem:[%s304 + $0x10] sm:$0xff]
      %v329 = vld [vmem:[%s304 + $0x18] sm:$0xff]
      %v330 = vld [vmem:[%s304 + $0x20] sm:$0xff]
      %v331 = vld [vmem:[%s304 + $0x28] sm:$0xff]
      %v332 = vld [vmem:[%s304 + $0x30] sm:$0xff]
      %v333 = vld [vmem:[%s304 + $0x38] sm:$0xff]
      %v334 = vld [vmem:[%s304 + $0x40] sm:$0xff]
      %v335 = vld [vmem:[%s304 + $0x48] sm:$0xff]
      %v336 = vld [vmem:[%s304 + $0x50] sm:$0xff]
      %v337 = vld [vmem:[%s304 + $0x58] sm:$0xff]
      %v338 = vld [vmem:[%s304 + $0x60] sm:$0xff]
      %v339 = vld [vmem:[%s304 + $0x68] sm:$0xff]
      %v340 = vld [vmem:[%s304 + $0x70] sm:$0xff]
      %v341 = vld [vmem:[%s304 + $0x78] sm:$0xff]
      %v342 = vld [vmem:[%s304 + $0x80] sm:$0xff]
      %v343 = vld [vmem:[%s304 + $0x88] sm:$0xff]
      %v344 = vld [vmem:[%s304 + $0x90] sm:$0xff]
      %v345 = vld [vmem:[%s304 + $0x98] sm:$0xff]
      %v346 = vld [vmem:[%s304 + $0xa0] sm:$0xff]
      %v347 = vld [vmem:[%s304 + $0xa8] sm:$0xff]
      %v348 = vld [vmem:[%s304 + $0xb0] sm:$0xff]
      %v349 = vld [vmem:[%s304 + $0xb8] sm:$0xff]
      %v350 = vld [vmem:[%s304 + $0xc0] sm:$0xff]
      %v351 = vld [vmem:[%s304 + $0xc8] sm:$0xff]
      %v352 = vld [vmem:[%s304 + $0xd0] sm:$0xff]
      %v353 = vld [vmem:[%s304 + $0xd8] sm:$0xff]
      %v354 = vld [vmem:[%s304 + $0xe0] sm:$0xff]
      %v355 = vld [vmem:[%s304 + $0xe8] sm:$0xff]
      %v356 = vld [vmem:[%s304 + $0xf0] sm:$0xff]
      %v357 = vld [vmem:[%s304 + $0xf8] sm:$0xff]
      %v358 = vld [vmem:[%s1] sm:$0x1]
      %v360 = vlaneseq
      %v361 = vshrl.u32 %v360, 7
      %v362 = vsub.s32 0, %v361
      %v363 = vrot.slane %v358, %v362
      %v365 = vmul.f32 %v326, %v363
      %v366 = vmul.f32 %v327, %v363
      %v367 = vmul.f32 %v328, %v363
      %v368 = vmul.f32 %v329, %v363
      %v369 = vmul.f32 %v330, %v363
      %v370 = vmul.f32 %v331, %v363
      %v371 = vmul.f32 %v332, %v363
      %v372 = vmul.f32 %v333, %v363
      %v373 = vmul.f32 %v334, %v363
      %v374 = vmul.f32 %v335, %v363
      %v375 = vmul.f32 %v336, %v363
      %v376 = vmul.f32 %v337, %v363
      %v377 = vmul.f32 %v338, %v363
      %v378 = vmul.f32 %v339, %v363
      %v379 = vmul.f32 %v340, %v363
      %v380 = vmul.f32 %v341, %v363
      %v381 = vmul.f32 %v342, %v363
      %v382 = vmul.f32 %v343, %v363
      %v383 = vmul.f32 %v344, %v363
      %v384 = vmul.f32 %v345, %v363
      %v385 = vmul.f32 %v346, %v363
      %v386 = vmul.f32 %v347, %v363
      %v387 = vmul.f32 %v348, %v363
      %v388 = vmul.f32 %v349, %v363
      %v389 = vmul.f32 %v350, %v363
      %v390 = vmul.f32 %v351, %v363
      %v391 = vmul.f32 %v352, %v363
      %v392 = vmul.f32 %v353, %v363
      %v393 = vmul.f32 %v354, %v363
      %v394 = vmul.f32 %v355, %v363
      %v395 = vmul.f32 %v356, %v363
      %v396 = vmul.f32 %v357, %v363
      %v397 = vld [vmem:[%s2] sm:$0x1]
      %v399 = vlaneseq
      %v400 = vshrl.u32 %v399, 7
      %v401 = vsub.s32 0, %v400
      %v402 = vrot.slane %v397, %v401
      %v404 = vadd.f32 %v365, %v402
      %v405 = vadd.f32 %v366, %v402
      %v406 = vadd.f32 %v367, %v402
      %v407 = vadd.f32 %v368, %v402
      %v408 = vadd.f32 %v369, %v402
      %v409 = vadd.f32 %v370, %v402
      %v410 = vadd.f32 %v371, %v402
      %v411 = vadd.f32 %v372, %v402
      %v412 = vadd.f32 %v373, %v402
      %v413 = vadd.f32 %v374, %v402
      %v414 = vadd.f32 %v375, %v402
      %v415 = vadd.f32 %v376, %v402
      %v416 = vadd.f32 %v377, %v402
      %v417 = vadd.f32 %v378, %v402
      %v418 = vadd.f32 %v379, %v402
      %v419 = vadd.f32 %v380, %v402
      %v420 = vadd.f32 %v381, %v402
      %v421 = vadd.f32 %v382, %v402
      %v422 = vadd.f32 %v383, %v402
      %v423 = vadd.f32 %v384, %v402
      %v424 = vadd.f32 %v385, %v402
      %v425 = vadd.f32 %v386, %v402
      %v426 = vadd.f32 %v387, %v402
      %v427 = vadd.f32 %v388, %v402
      %v428 = vadd.f32 %v389, %v402
      %v429 = vadd.f32 %v390, %v402
      %v430 = vadd.f32 %v391, %v402
      %v431 = vadd.f32 %v392, %v402
      %v432 = vadd.f32 %v393, %v402
      %v433 = vadd.f32 %v394, %v402
      %v434 = vadd.f32 %v395, %v402
      %v435 = vadd.f32 %v396, %v402
      %v436 = vmax.f32 %v404, 0.0
      %v437 = vmax.f32 %v405, 0.0
      %v438 = vmax.f32 %v406, 0.0
      %v439 = vmax.f32 %v407, 0.0
      %v440 = vmax.f32 %v408, 0.0
      %v441 = vmax.f32 %v409, 0.0
      %v442 = vmax.f32 %v410, 0.0
      %v443 = vmax.f32 %v411, 0.0
      %v444 = vmax.f32 %v412, 0.0
      %v445 = vmax.f32 %v413, 0.0
      %v446 = vmax.f32 %v414, 0.0
      %v447 = vmax.f32 %v415, 0.0
      %v448 = vmax.f32 %v416, 0.0
      %v449 = vmax.f32 %v417, 0.0
      %v450 = vmax.f32 %v418, 0.0
      %v451 = vmax.f32 %v419, 0.0
      %v452 = vmax.f32 %v420, 0.0
      %v453 = vmax.f32 %v421, 0.0
      %v454 = vmax.f32 %v422, 0.0
      %v455 = vmax.f32 %v423, 0.0
      %v456 = vmax.f32 %v424, 0.0
      %v457 = vmax.f32 %v425, 0.0
      %v458 = vmax.f32 %v426, 0.0
      %v459 = vmax.f32 %v427, 0.0
      %v460 = vmax.f32 %v428, 0.0
      %v461 = vmax.f32 %v429, 0.0
      %v462 = vmax.f32 %v430, 0.0
      %v463 = vmax.f32 %v431, 0.0
      %v464 = vmax.f32 %v432, 0.0
      %v465 = vmax.f32 %v433, 0.0
      %v466 = vmax.f32 %v434, 0.0
      %v467 = vmax.f32 %v435, 0.0
      %vm500 = vcmask 1040384
      %v501 = vrot.slane %v436, 7
      %v502 = vrot.slane %v437, 7
      %v503 = vsel %vm500, %v501, %v502
      %v504 = vrot.slane %v438, 7
      %v505 = vrot.slane %v439, 7
      %v506 = vsel %vm500, %v504, %v505
      %v507 = vrot.slane %v440, 7
      %v508 = vrot.slane %v441, 7
      %v509 = vsel %vm500, %v507, %v508
      %v510 = vrot.slane %v442, 7
      %v511 = vrot.slane %v443, 7
      %v512 = vsel %vm500, %v510, %v511
      %v513 = vrot.slane %v444, 7
      %v514 = vrot.slane %v445, 7
      %v515 = vsel %vm500, %v513, %v514
      %v516 = vrot.slane %v446, 7
      %v517 = vrot.slane %v447, 7
      %v518 = vsel %vm500, %v516, %v517
      %v519 = vrot.slane %v448, 7
      %v520 = vrot.slane %v449, 7
      %v521 = vsel %vm500, %v519, %v520
      %v522 = vrot.slane %v450, 7
      %v523 = vrot.slane %v451, 7
      %v524 = vsel %vm500, %v522, %v523
      %v525 = vrot.slane %v452, 7
      %v526 = vrot.slane %v453, 7
      %v527 = vsel %vm500, %v525, %v526
      %v528 = vrot.slane %v454, 7
      %v529 = vrot.slane %v455, 7
      %v530 = vsel %vm500, %v528, %v529
      %v531 = vrot.slane %v456, 7
      %v532 = vrot.slane %v457, 7
      %v533 = vsel %vm500, %v531, %v532
      %v534 = vrot.slane %v458, 7
      %v535 = vrot.slane %v459, 7
      %v536 = vsel %vm500, %v534, %v535
      %v537 = vrot.slane %v460, 7
      %v538 = vrot.slane %v461, 7
      %v539 = vsel %vm500, %v537, %v538
      %v540 = vrot.slane %v462, 7
      %v541 = vrot.slane %v463, 7
      %v542 = vsel %vm500, %v540, %v541
      %v543 = vrot.slane %v464, 7
      %v544 = vrot.slane %v465, 7
      %v545 = vsel %vm500, %v543, %v544
      %v546 = vrot.slane %v466, 7
      %v547 = vrot.slane %v467, 7
      %v548 = vsel %vm500, %v546, %v547
      %v581 = vsel %vm500, 0.0, %v501
      %v582 = vsel %vm500, 0.0, %v504
      %v583 = vsel %vm500, 0.0, %v507
      %v584 = vsel %vm500, 0.0, %v510
      %v585 = vsel %vm500, 0.0, %v513
      %v586 = vsel %vm500, 0.0, %v516
      %v587 = vsel %vm500, 0.0, %v519
      %v588 = vsel %vm500, 0.0, %v522
      %v589 = vsel %vm500, 0.0, %v525
      %v590 = vsel %vm500, 0.0, %v528
      %v591 = vsel %vm500, 0.0, %v531
      %v592 = vsel %vm500, 0.0, %v534
      %v593 = vsel %vm500, 0.0, %v537
      %v594 = vsel %vm500, 0.0, %v540
      %v595 = vsel %vm500, 0.0, %v543
      %v596 = vsel %vm500, 0.0, %v546
      %vm597 = vcmask 1046528
      %v598 = vrot.slane %v436, 1
      %v599 = vrot.slane %v437, 1
      %v600 = vsel %vm597, %v598, %v599
      %v601 = vrot.slane %v438, 1
      %v602 = vrot.slane %v439, 1
      %v603 = vsel %vm597, %v601, %v602
      %v604 = vrot.slane %v440, 1
      %v605 = vrot.slane %v441, 1
      %v606 = vsel %vm597, %v604, %v605
      %v607 = vrot.slane %v442, 1
      %v608 = vrot.slane %v443, 1
      %v609 = vsel %vm597, %v607, %v608
      %v610 = vrot.slane %v444, 1
      %v611 = vrot.slane %v445, 1
      %v612 = vsel %vm597, %v610, %v611
      %v613 = vrot.slane %v446, 1
      %v614 = vrot.slane %v447, 1
      %v615 = vsel %vm597, %v613, %v614
      %v616 = vrot.slane %v448, 1
      %v617 = vrot.slane %v449, 1
      %v618 = vsel %vm597, %v616, %v617
      %v619 = vrot.slane %v450, 1
      %v620 = vrot.slane %v451, 1
      %v621 = vsel %vm597, %v619, %v620
      %v622 = vrot.slane %v452, 1
      %v623 = vrot.slane %v453, 1
      %v624 = vsel %vm597, %v622, %v623
      %v625 = vrot.slane %v454, 1
      %v626 = vrot.slane %v455, 1
      %v627 = vsel %vm597, %v625, %v626
      %v628 = vrot.slane %v456, 1
      %v629 = vrot.slane %v457, 1
      %v630 = vsel %vm597, %v628, %v629
      %v631 = vrot.slane %v458, 1
      %v632 = vrot.slane %v459, 1
      %v633 = vsel %vm597, %v631, %v632
      %v634 = vrot.slane %v460, 1
      %v635 = vrot.slane %v461, 1
      %v636 = vsel %vm597, %v634, %v635
      %v637 = vrot.slane %v462, 1
      %v638 = vrot.slane %v463, 1
      %v639 = vsel %vm597, %v637, %v638
      %v640 = vrot.slane %v464, 1
      %v641 = vrot.slane %v465, 1
      %v642 = vsel %vm597, %v640, %v641
      %v643 = vrot.slane %v466, 1
      %v644 = vrot.slane %v467, 1
      %v645 = vsel %vm597, %v643, %v644
      %v678 = vsel %vm597, %v599, 0.0
      %v679 = vsel %vm597, %v602, 0.0
      %v680 = vsel %vm597, %v605, 0.0
      %v681 = vsel %vm597, %v608, 0.0
      %v682 = vsel %vm597, %v611, 0.0
      %v683 = vsel %vm597, %v614, 0.0
      %v684 = vsel %vm597, %v617, 0.0
      %v685 = vsel %vm597, %v620, 0.0
      %v686 = vsel %vm597, %v623, 0.0
      %v687 = vsel %vm597, %v626, 0.0
      %v688 = vsel %vm597, %v629, 0.0
      %v689 = vsel %vm597, %v632, 0.0
      %v690 = vsel %vm597, %v635, 0.0
      %v691 = vsel %vm597, %v638, 0.0
      %v692 = vsel %vm597, %v641, 0.0
      %v693 = vsel %vm597, %v644, 0.0
      %v694 = vld [vmem:[%s308] sm:$0xff]
      %v695 = vld [vmem:[%s308 + $0x8] sm:$0xff]
      %v696 = vld [vmem:[%s308 + $0x10] sm:$0xff]
      %v697 = vld [vmem:[%s308 + $0x18] sm:$0xff]
      %v698 = vld [vmem:[%s308 + $0x20] sm:$0xff]
      %v699 = vld [vmem:[%s308 + $0x28] sm:$0xff]
      %v700 = vld [vmem:[%s308 + $0x30] sm:$0xff]
      %v701 = vld [vmem:[%s308 + $0x38] sm:$0xff]
      %v702 = vld [vmem:[%s308 + $0x40] sm:$0xff]
      %v703 = vld [vmem:[%s308 + $0x48] sm:$0xff]
      %v704 = vld [vmem:[%s308 + $0x50] sm:$0xff]
      %v705 = vld [vmem:[%s308 + $0x58] sm:$0xff]
      %v706 = vld [vmem:[%s308 + $0x60] sm:$0xff]
      %v707 = vld [vmem:[%s308 + $0x68] sm:$0xff]
      %v708 = vld [vmem:[%s308 + $0x70] sm:$0xff]
      %v709 = vld [vmem:[%s308 + $0x78] sm:$0xff]
      %v710 = vld [vmem:[%s308 + $0x80] sm:$0xff]
      %v711 = vld [vmem:[%s308 + $0x88] sm:$0xff]
      %v712 = vld [vmem:[%s308 + $0x90] sm:$0xff]
      %v713 = vld [vmem:[%s308 + $0x98] sm:$0xff]
      %v714 = vld [vmem:[%s308 + $0xa0] sm:$0xff]
      %v715 = vld [vmem:[%s308 + $0xa8] sm:$0xff]
      %v716 = vld [vmem:[%s308 + $0xb0] sm:$0xff]
      %v717 = vld [vmem:[%s308 + $0xb8] sm:$0xff]
      %v718 = vld [vmem:[%s308 + $0xc0] sm:$0xff]
      %v719 = vld [vmem:[%s308 + $0xc8] sm:$0xff]
      %v720 = vld [vmem:[%s308 + $0xd0] sm:$0xff]
      %v721 = vld [vmem:[%s308 + $0xd8] sm:$0xff]
      %v722 = vld [vmem:[%s308 + $0xe0] sm:$0xff]
      %v723 = vld [vmem:[%s308 + $0xe8] sm:$0xff]
      %v724 = vld [vmem:[%s308 + $0xf0] sm:$0xff]
      %v725 = vld [vmem:[%s308 + $0xf8] sm:$0xff]
      %v726 = vld [vmem:[%s308 + $0x100] sm:$0xff]
      %v727 = vld [vmem:[%s308 + $0x108] sm:$0xff]
      %v728 = vld [vmem:[%s308 + $0x110] sm:$0xff]
      %v729 = vld [vmem:[%s308 + $0x118] sm:$0xff]
      %v730 = vld [vmem:[%s308 + $0x120] sm:$0xff]
      %v731 = vld [vmem:[%s308 + $0x128] sm:$0xff]
      %v732 = vld [vmem:[%s308 + $0x130] sm:$0xff]
      %v733 = vld [vmem:[%s308 + $0x138] sm:$0xff]
      %v734 = vld [vmem:[%s308 + $0x140] sm:$0xff]
      %v735 = vld [vmem:[%s308 + $0x148] sm:$0xff]
      %v736 = vld [vmem:[%s308 + $0x150] sm:$0xff]
      %v737 = vld [vmem:[%s308 + $0x158] sm:$0xff]
      %v738 = vld [vmem:[%s308 + $0x160] sm:$0xff]
      %v739 = vld [vmem:[%s308 + $0x168] sm:$0xff]
      %v740 = vld [vmem:[%s308 + $0x170] sm:$0xff]
      %v741 = vld [vmem:[%s308 + $0x178] sm:$0xff]
      %s742 = scalar_lea.vmem %s308, 384
      %v743 = vld [vmem:[%s742] sm:$0xff]
      %v744 = vld [vmem:[%s742 + $0x8] sm:$0xff]
      %v745 = vld [vmem:[%s742 + $0x10] sm:$0xff]
      %v746 = vld [vmem:[%s742 + $0x18] sm:$0xff]
      %v747 = vld [vmem:[%s742 + $0x20] sm:$0xff]
      %v748 = vld [vmem:[%s742 + $0x28] sm:$0xff]
      %v749 = vld [vmem:[%s742 + $0x30] sm:$0xff]
      %v750 = vld [vmem:[%s742 + $0x38] sm:$0xff]
      %v751 = vld [vmem:[%s742 + $0x40] sm:$0xff]
      %v752 = vld [vmem:[%s742 + $0x48] sm:$0xff]
      %v753 = vld [vmem:[%s742 + $0x50] sm:$0xff]
      %v754 = vld [vmem:[%s742 + $0x58] sm:$0xff]
      %v755 = vld [vmem:[%s742 + $0x60] sm:$0xff]
      %v756 = vld [vmem:[%s742 + $0x68] sm:$0xff]
      %v757 = vld [vmem:[%s742 + $0x70] sm:$0xff]
      %v758 = vld [vmem:[%s742 + $0x78] sm:$0xff]
      %v759 = vld [vmem:[%s742 + $0x80] sm:$0xff]
      %v760 = vld [vmem:[%s742 + $0x88] sm:$0xff]
      %v761 = vld [vmem:[%s742 + $0x90] sm:$0xff]
      %v762 = vld [vmem:[%s742 + $0x98] sm:$0xff]
      %v763 = vld [vmem:[%s742 + $0xa0] sm:$0xff]
      %v764 = vld [vmem:[%s742 + $0xa8] sm:$0xff]
      %v765 = vld [vmem:[%s742 + $0xb0] sm:$0xff]
      %v766 = vld [vmem:[%s742 + $0xb8] sm:$0xff]
      %v767 = vld [vmem:[%s742 + $0xc0] sm:$0xff]
      %v768 = vld [vmem:[%s742 + $0xc8] sm:$0xff]
      %v769 = vld [vmem:[%s742 + $0xd0] sm:$0xff]
      %v770 = vld [vmem:[%s742 + $0xd8] sm:$0xff]
      %v771 = vld [vmem:[%s742 + $0xe0] sm:$0xff]
      %v772 = vld [vmem:[%s742 + $0xe8] sm:$0xff]
      %v773 = vld [vmem:[%s742 + $0xf0] sm:$0xff]
      %v774 = vld [vmem:[%s742 + $0xf8] sm:$0xff]
      %v775 = vld [vmem:[%s742 + $0x100] sm:$0xff]
      %v776 = vld [vmem:[%s742 + $0x108] sm:$0xff]
      %v777 = vld [vmem:[%s742 + $0x110] sm:$0xff]
      %v778 = vld [vmem:[%s742 + $0x118] sm:$0xff]
      %v779 = vld [vmem:[%s742 + $0x120] sm:$0xff]
      %v780 = vld [vmem:[%s742 + $0x128] sm:$0xff]
      %v781 = vld [vmem:[%s742 + $0x130] sm:$0xff]
      %v782 = vld [vmem:[%s742 + $0x138] sm:$0xff]
      %v783 = vld [vmem:[%s742 + $0x140] sm:$0xff]
      %v784 = vld [vmem:[%s742 + $0x148] sm:$0xff]
      %v785 = vld [vmem:[%s742 + $0x150] sm:$0xff]
      %v786 = vld [vmem:[%s742 + $0x158] sm:$0xff]
      %v787 = vld [vmem:[%s742 + $0x160] sm:$0xff]
      %v788 = vld [vmem:[%s742 + $0x168] sm:$0xff]
      %v789 = vld [vmem:[%s742 + $0x170] sm:$0xff]
      %v790 = vld [vmem:[%s742 + $0x178] sm:$0xff]
      %791 = vmatprep.subr.mxu0 0.0
      %792 = vmatpush1.msra.mxu0 %v743
      %793 = vmatprep.subr.mxu0 0.0
      %794 = vmatpush1.msra.mxu0 %v744
      %795 = vmatprep.subr.mxu0 0.0
      %796 = vmatpush1.msra.mxu0 %v745
      %797 = vmatprep.subr.mxu0 0.0
      %798 = vmatpush1.msra.mxu0 %v746
      %799 = vmatprep.subr.mxu0 0.0
      %800 = vmatpush1.msra.mxu0 %v747
      %801 = vmatprep.subr.mxu0 0.0
      %802 = vmatpush1.msra.mxu0 %v748
      %803 = vmatprep.subr.mxu0 0.0
      %804 = vmatpush1.msra.mxu0 %v749
      %805 = vmatprep.subr.mxu0 0.0
      %806 = vmatpush1.msra.mxu0 %v750
      %807 = vmatprep.subr.mxu0 0.0
      %808 = vmatpush1.msra.mxu0 %v751
      %809 = vmatprep.subr.mxu0 0.0
      %810 = vmatpush1.msra.mxu0 %v752
      %811 = vmatprep.subr.mxu0 0.0
      %812 = vmatpush1.msra.mxu0 %v753
      %813 = vmatprep.subr.mxu0 0.0
      %814 = vmatpush1.msra.mxu0 %v754
      %815 = vmatprep.subr.mxu0 0.0
      %816 = vmatpush1.msra.mxu0 %v755
      %817 = vmatprep.subr.mxu0 0.0
      %818 = vmatpush1.msra.mxu0 %v756
      %819 = vmatprep.subr.mxu0 0.0
      %820 = vmatpush1.msra.mxu0 %v757
      %821 = vmatprep.subr.mxu0 0.0
      %822 = vmatpush1.msra.mxu0 %v758
      %823 = vmatprep.subr.mxu0 0.0
      %824 = vmatpush1.msra.mxu0 %v759
      %825 = vmatprep.subr.mxu0 0.0
      %826 = vmatpush1.msra.mxu0 %v760
      %827 = vmatprep.subr.mxu0 0.0
      %828 = vmatpush1.msra.mxu0 %v761
      %829 = vmatprep.subr.mxu0 0.0
      %830 = vmatpush1.msra.mxu0 %v762
      %831 = vmatprep.subr.mxu0 0.0
      %832 = vmatpush1.msra.mxu0 %v763
      %833 = vmatprep.subr.mxu0 0.0
      %834 = vmatpush1.msra.mxu0 %v764
      %835 = vmatprep.subr.mxu0 0.0
      %836 = vmatpush1.msra.mxu0 %v765
      %837 = vmatprep.subr.mxu0 0.0
      %838 = vmatpush1.msra.mxu0 %v766
      %839 = vmatprep.subr.mxu0 0.0
      %840 = vmatpush1.msra.mxu0 %v767
      %841 = vmatprep.subr.mxu0 0.0
      %842 = vmatpush1.msra.mxu0 %v768
      %843 = vmatprep.subr.mxu0 0.0
      %844 = vmatpush1.msra.mxu0 %v769
      %845 = vmatprep.subr.mxu0 0.0
      %846 = vmatpush1.msra.mxu0 %v770
      %847 = vmatprep.subr.mxu0 0.0
      %848 = vmatpush1.msra.mxu0 %v771
      %849 = vmatprep.subr.mxu0 0.0
      %850 = vmatpush1.msra.mxu0 %v772
      %851 = vmatprep.subr.mxu0 0.0
      %852 = vmatpush1.msra.mxu0 %v773
      %853 = vmatprep.subr.mxu0 0.0
      %854 = vmatpush1.msra.mxu0 %v774
      %855 = vmatprep.mubr.f32.mxu0 %v436
      %856 = vmatmul.mubr.f32.gmra.mrb[0].mxu0 %v581
      %v857 = vpop.f32.mrb[0].mxu0
      %v858 = vadd.f32 0.0, %v857
      %v859 = vpop.f32.mrb[0].mxu0
      %860 = vmatprep.mubr.f32.mxu0 %v437
      %861 = vmatmul.mubr.f32.gmra.mrb[0].mxu0 %v503
      %v862 = vpop.f32.mrb[0].mxu0
      %v863 = vadd.f32 0.0, %v862
      %v864 = vpop.f32.mrb[0].mxu0
      %865 = vmatprep.mubr.f32.mxu0 %v438
      %866 = vmatmul.mubr.f32.gmra.mrb[0].mxu0 %v582
      %v867 = vpop.f32.mrb[0].mxu0
      %v868 = vadd.f32 0.0, %v867
      %v869 = vpop.f32.mrb[0].mxu0
      %870 = vmatprep.mubr.f32.mxu0 %v439
      %871 = vmatmul.mubr.f32.gmra.mrb[0].mxu0 %v506
      %v872 = vpop.f32.mrb[0].mxu0
      %v873 = vadd.f32 0.0, %v872
      %v874 = vpop.f32.mrb[0].mxu0
      %875 = vmatprep.mubr.f32.mxu0 %v440
      %876 = vmatmul.mubr.f32.gmra.mrb[0].mxu0 %v583
      %v877 = vpop.f32.mrb[0].mxu0
      %v878 = vadd.f32 0.0, %v877
      %v879 = vpop.f32.mrb[0].mxu0
      %880 = vmatprep.mubr.f32.mxu0 %v441
      %881 = vmatmul.mubr.f32.gmra.mrb[0].mxu0 %v509
      %v882 = vpop.f32.mrb[0].mxu0
      %v883 = vadd.f32 0.0, %v882
      %v884 = vpop.f32.mrb[0].mxu0
      %885 = vmatprep.mubr.f32.mxu0 %v442
      %886 = vmatmul.mubr.f32.gmra.mrb[0].mxu0 %v584
      %v887 = vpop.f32.mrb[0].mxu0
      %v888 = vadd.f32 0.0, %v887
      %v889 = vpop.f32.mrb[0].mxu0
      %890 = vmatprep.mubr.f32.mxu0 %v443
      %891 = vmatmul.mubr.f32.gmra.mrb[0].mxu0 %v512
      %v892 = vpop.f32.mrb[0].mxu0
      %v893 = vadd.f32 0.0, %v892
      %v894 = vpop.f32.mrb[0].mxu0
      %895 = vmatprep.mubr.f32.mxu0 %v444
      %896 = vmatmul.mubr.f32.gmra.mrb[0].mxu0 %v585
      %v897 = vpop.f32.mrb[0].mxu0
      %v898 = vadd.f32 0.0, %v897
      %v899 = vpop.f32.mrb[0].mxu0
      %900 = vmatprep.mubr.f32.mxu0 %v445
      %901 = vmatmul.mubr.f32.gmra.mrb[0].mxu0 %v515
      %v902 = vpop.f32.mrb[0].mxu0
      %v903 = vadd.f32 0.0, %v902
      %v904 = vpop.f32.mrb[0].mxu0
      %905 = vmatprep.mubr.f32.mxu0 %v446
      %906 = vmatmul.mubr.f32.gmra.mrb[0].mxu0 %v586
      %v907 = vpop.f32.mrb[0].mxu0
      %v908 = vadd.f32 0.0, %v907
      %v909 = vpop.f32.mrb[0].mxu0
      %910 = vmatprep.mubr.f32.mxu0 %v447
      %911 = vmatmul.mubr.f32.gmra.mrb[0].mxu0 %v518
      %v912 = vpop.f32.mrb[0].mxu0
      %v913 = vadd.f32 0.0, %v912
      %v914 = vpop.f32.mrb[0].mxu0
      %915 = vmatprep.mubr.f32.mxu0 %v448
      %916 = vmatmul.mubr.f32.gmra.mrb[0].mxu0 %v587
      %v917 = vpop.f32.mrb[0].mxu0
      %v918 = vadd.f32 0.0, %v917
      %v919 = vpop.f32.mrb[0].mxu0
      %920 = vmatprep.mubr.f32.mxu0 %v449
      %921 = vmatmul.mubr.f32.gmra.mrb[0].mxu0 %v521
      %v922 = vpop.f32.mrb[0].mxu0
      %v923 = vadd.f32 0.0, %v922
      %v924 = vpop.f32.mrb[0].mxu0
      %925 = vmatprep.mubr.f32.mxu0 %v450
      %926 = vmatmul.mubr.f32.gmra.mrb[0].mxu0 %v588
      %v927 = vpop.f32.mrb[0].mxu0
      %v928 = vadd.f32 0.0, %v927
      %v929 = vpop.f32.mrb[0].mxu0
      %930 = vmatprep.mubr.f32.mxu0 %v451
      %931 = vmatmul.mubr.f32.gmra.mrb[0].mxu0 %v524
      %v932 = vpop.f32.mrb[0].mxu0
      %v933 = vadd.f32 0.0, %v932
      %v934 = vpop.f32.mrb[0].mxu0
      %935 = vmatprep.mubr.f32.mxu0 %v452
      %936 = vmatmul.mubr.f32.gmra.mrb[0].mxu0 %v589
      %v937 = vpop.f32.mrb[0].mxu0
      %v938 = vadd.f32 0.0, %v937
      %v939 = vpop.f32.mrb[0].mxu0
      %940 = vmatprep.mubr.f32.mxu0 %v453
      %941 = vmatmul.mubr.f32.gmra.mrb[0].mxu0 %v527
      %v942 = vpop.f32.mrb[0].mxu0
      %v943 = vadd.f32 0.0, %v942
      %v944 = vpop.f32.mrb[0].mxu0
      %945 = vmatprep.mubr.f32.mxu0 %v454
      %946 = vmatmul.mubr.f32.gmra.mrb[0].mxu0 %v590
      %v947 = vpop.f32.mrb[0].mxu0
      %v948 = vadd.f32 0.0, %v947
      %v949 = vpop.f32.mrb[0].mxu0
      %950 = vmatprep.mubr.f32.mxu0 %v455
      %951 = vmatmul.mubr.f32.gmra.mrb[0].mxu0 %v530
      %v952 = vpop.f32.mrb[0].mxu0
      %v953 = vadd.f32 0.0, %v952
      %v954 = vpop.f32.mrb[0].mxu0
      %955 = vmatprep.mubr.f32.mxu0 %v456
      %956 = vmatmul.mubr.f32.gmra.mrb[0].mxu0 %v591
      %v957 = vpop.f32.mrb[0].mxu0
      %v958 = vadd.f32 0.0, %v957
      %v959 = vpop.f32.mrb[0].mxu0
      %960 = vmatprep.mubr.f32.mxu0 %v457
      %961 = vmatmul.mubr.f32.gmra.mrb[0].mxu0 %v533
      %v962 = vpop.f32.mrb[0].mxu0
      %v963 = vadd.f32 0.0, %v962
      %v964 = vpop.f32.mrb[0].mxu0
      %965 = vmatprep.mubr.f32.mxu0 %v458
      %966 = vmatmul.mubr.f32.gmra.mrb[0].mxu0 %v592
      %v967 = vpop.f32.mrb[0].mxu0
      %v968 = vadd.f32 0.0, %v967
      %v969 = vpop.f32.mrb[0].mxu0
      %970 = vmatprep.mubr.f32.mxu0 %v459
      %971 = vmatmul.mubr.f32.gmra.mrb[0].mxu0 %v536
      %v972 = vpop.f32.mrb[0].mxu0
      %v973 = vadd.f32 0.0, %v972
      %v974 = vpop.f32.mrb[0].mxu0
      %975 = vmatprep.mubr.f32.mxu0 %v460
      %976 = vmatmul.mubr.f32.gmra.mrb[0].mxu0 %v593
      %v977 = vpop.f32.mrb[0].mxu0
      %v978 = vadd.f32 0.0, %v977
      %v979 = vpop.f32.mrb[0].mxu0
      %980 = vmatprep.mubr.f32.mxu0 %v461
      %981 = vmatmul.mubr.f32.gmra.mrb[0].mxu0 %v539
      %v982 = vpop.f32.mrb[0].mxu0
      %v983 = vadd.f32 0.0, %v982
      %v984 = vpop.f32.mrb[0].mxu0
      %985 = vmatprep.mubr.f32.mxu0 %v462
      %986 = vmatmul.mubr.f32.gmra.mrb[0].mxu0 %v594
      %v987 = vpop.f32.mrb[0].mxu0
      %v988 = vadd.f32 0.0, %v987
      %v989 = vpop.f32.mrb[0].mxu0
      %990 = vmatprep.mubr.f32.mxu0 %v463
      %991 = vmatmul.mubr.f32.gmra.mrb[0].mxu0 %v542
      %v992 = vpop.f32.mrb[0].mxu0
      %v993 = vadd.f32 0.0, %v992
      %v994 = vpop.f32.mrb[0].mxu0
      %995 = vmatprep.mubr.f32.mxu0 %v464
      %996 = vmatmul.mubr.f32.gmra.mrb[0].mxu0 %v595
      %v997 = vpop.f32.mrb[0].mxu0
      %v998 = vadd.f32 0.0, %v997
      %v999 = vpop.f32.mrb[0].mxu0
      %1000 = vmatprep.mubr.f32.mxu0 %v465
      %1001 = vmatmul.mubr.f32.gmra.mrb[0].mxu0 %v545
      %v1002 = vpop.f32.mrb[0].mxu0
      %v1003 = vadd.f32 0.0, %v1002
      %v1004 = vpop.f32.mrb[0].mxu0
      %1005 = vmatprep.mubr.f32.mxu0 %v466
      %1006 = vmatmul.mubr.f32.gmra.mrb[0].mxu0 %v596
      %v1007 = vpop.f32.mrb[0].mxu0
      %v1008 = vadd.f32 0.0, %v1007
      %v1009 = vpop.f32.mrb[0].mxu0
      %1010 = vmatprep.mubr.f32.mxu0 %v467
      %1011 = vmatmul.mubr.f32.gmra.mrb[0].mxu0 %v548
      %v1012 = vpop.f32.mrb[0].mxu0
      %v1013 = vadd.f32 0.0, %v1012
      %v1014 = vpop.f32.mrb[0].mxu0
      %1015 = vdwg.mxu0
      %1016 = vmatprep.subr.mxu0 0.0
      %1017 = vmatpush1.msra.mxu0 %v775
      %1018 = vmatprep.subr.mxu0 0.0
      %1019 = vmatpush1.msra.mxu0 %v776
      %1020 = vmatprep.subr.mxu0 0.0
      %1021 = vmatpush1.msra.mxu0 %v777
      %1022 = vmatprep.subr.mxu0 0.0
      %1023 = vmatpush1.msra.mxu0 %v778
      %1024 = vmatprep.subr.mxu0 0.0
      %1025 = vmatpush1.msra.mxu0 %v779
      %1026 = vmatprep.subr.mxu0 0.0
      %1027 = vmatpush1.msra.mxu0 %v780
      %1028 = vmatprep.subr.mxu0 0.0
      %1029 = vmatpush1.msra.mxu0 %v781
      %1030 = vmatprep.subr.mxu0 0.0
      %1031 = vmatpush1.msra.mxu0 %v782
      %1032 = vmatprep.subr.mxu0 0.0
      %1033 = vmatpush1.msra.mxu0 %v783
      %1034 = vmatprep.subr.mxu0 0.0
      %1035 = vmatpush1.msra.mxu0 %v784
      %1036 = vmatprep.subr.mxu0 0.0
      %1037 = vmatpush1.msra.mxu0 %v785
      %1038 = vmatprep.subr.mxu0 0.0
      %1039 = vmatpush1.msra.mxu0 %v786
      %1040 = vmatprep.subr.mxu0 0.0
      %1041 = vmatpush1.msra.mxu0 %v787
      %1042 = vmatprep.subr.mxu0 0.0
      %1043 = vmatpush1.msra.mxu0 %v788
      %1044 = vmatprep.subr.mxu0 0.0
      %1045 = vmatpush1.msra.mxu0 %v789
      %1046 = vmatprep.subr.mxu0 0.0
      %1047 = vmatpush1.msra.mxu0 %v790
      %1048 = vmatprep.subr.mxu0 0.0
      %1049 = vmatpush1.msra.mxu0 0.0
      %1050 = vmatprep.subr.mxu0 0.0
      %1051 = vmatpush1.msra.mxu0 0.0
      %1052 = vmatprep.subr.mxu0 0.0
      %1053 = vmatpush1.msra.mxu0 0.0
      %1054 = vmatprep.subr.mxu0 0.0
      %1055 = vmatpush1.msra.mxu0 0.0
      %1056 = vmatprep.subr.mxu0 0.0
      %1057 = vmatpush1.msra.mxu0 0.0
      %1058 = vmatprep.subr.mxu0 0.0
      %1059 = vmatpush1.msra.mxu0 0.0
      %1060 = vmatprep.subr.mxu0 0.0
      %1061 = vmatpush1.msra.mxu0 0.0
      %1062 = vmatprep.subr.mxu0 0.0
      %1063 = vmatpush1.msra.mxu0 0.0
      %1064 = vmatprep.subr.mxu0 0.0
      %1065 = vmatpush1.msra.mxu0 0.0
      %1066 = vmatprep.subr.mxu0 0.0
      %1067 = vmatpush1.msra.mxu0 0.0
      %1068 = vmatprep.subr.mxu0 0.0
      %1069 = vmatpush1.msra.mxu0 0.0
      %1070 = vmatprep.subr.mxu0 0.0
      %1071 = vmatpush1.msra.mxu0 0.0
      %1072 = vmatprep.subr.mxu0 0.0
      %1073 = vmatpush1.msra.mxu0 0.0
      %1074 = vmatprep.subr.mxu0 0.0
      %1075 = vmatpush1.msra.mxu0 0.0
      %1076 = vmatprep.subr.mxu0 0.0
      %1077 = vmatpush1.msra.mxu0 0.0
      %1078 = vmatprep.subr.mxu0 0.0
      %1079 = vmatpush1.msra.mxu0 0.0
      %1080 = vmatprep.mubr.f32.mxu0 0.0
      %1081 = vmatmul.mubr.f32.gmra.mrb[0].mxu0 %v600
      %v1082 = vpop.f32.mrb[0].mxu0
      %v1083 = vadd.f32 %v858, %v1082
      %v1084 = vpop.f32.mrb[0].mxu0
      %1085 = vmatprep.mubr.f32.mxu0 0.0
      %1086 = vmatmul.mubr.f32.gmra.mrb[0].mxu0 %v678
      %v1087 = vpop.f32.mrb[0].mxu0
      %v1088 = vadd.f32 %v863, %v1087
      %v1089 = vpop.f32.mrb[0].mxu0
      %1090 = vmatprep.mubr.f32.mxu0 0.0
      %1091 = vmatmul.mubr.f32.gmra.mrb[0].mxu0 %v603
      %v1092 = vpop.f32.mrb[0].mxu0
      %v1093 = vadd.f32 %v868, %v1092
      %v1094 = vpop.f32.mrb[0].mxu0
      %1095 = vmatprep.mubr.f32.mxu0 0.0
      %1096 = vmatmul.mubr.f32.gmra.mrb[0].mxu0 %v679
      %v1097 = vpop.f32.mrb[0].mxu0
      %v1098 = vadd.f32 %v873, %v1097
      %v1099 = vpop.f32.mrb[0].mxu0
      %1100 = vmatprep.mubr.f32.mxu0 0.0
      %1101 = vmatmul.mubr.f32.gmra.mrb[0].mxu0 %v606
      %v1102 = vpop.f32.mrb[0].mxu0
      %v1103 = vadd.f32 %v878, %v1102
      %v1104 = vpop.f32.mrb[0].mxu0
      %1105 = vmatprep.mubr.f32.mxu0 0.0
      %1106 = vmatmul.mubr.f32.gmra.mrb[0].mxu0 %v680
      %v1107 = vpop.f32.mrb[0].mxu0
      %v1108 = vadd.f32 %v883, %v1107
      %v1109 = vpop.f32.mrb[0].mxu0
      %1110 = vmatprep.mubr.f32.mxu0 0.0
      %1111 = vmatmul.mubr.f32.gmra.mrb[0].mxu0 %v609
      %v1112 = vpop.f32.mrb[0].mxu0
      %v1113 = vadd.f32 %v888, %v1112
      %v1114 = vpop.f32.mrb[0].mxu0
      %1115 = vmatprep.mubr.f32.mxu0 0.0
      %1116 = vmatmul.mubr.f32.gmra.mrb[0].mxu0 %v681
      %v1117 = vpop.f32.mrb[0].mxu0
      %v1118 = vadd.f32 %v893, %v1117
      %v1119 = vpop.f32.mrb[0].mxu0
      %1120 = vmatprep.mubr.f32.mxu0 0.0
      %1121 = vmatmul.mubr.f32.gmra.mrb[0].mxu0 %v612
      %v1122 = vpop.f32.mrb[0].mxu0
      %v1123 = vadd.f32 %v898, %v1122
      %v1124 = vpop.f32.mrb[0].mxu0
      %1125 = vmatprep.mubr.f32.mxu0 0.0
      %1126 = vmatmul.mubr.f32.gmra.mrb[0].mxu0 %v682
      %v1127 = vpop.f32.mrb[0].mxu0
      %v1128 = vadd.f32 %v903, %v1127
      %v1129 = vpop.f32.mrb[0].mxu0
      %1130 = vmatprep.mubr.f32.mxu0 0.0
      %1131 = vmatmul.mubr.f32.gmra.mrb[0].mxu0 %v615
      %v1132 = vpop.f32.mrb[0].mxu0
      %v1133 = vadd.f32 %v908, %v1132
      %v1134 = vpop.f32.mrb[0].mxu0
      %1135 = vmatprep.mubr.f32.mxu0 0.0
      %1136 = vmatmul.mubr.f32.gmra.mrb[0].mxu0 %v683
      %v1137 = vpop.f32.mrb[0].mxu0
      %v1138 = vadd.f32 %v913, %v1137
      %v1139 = vpop.f32.mrb[0].mxu0
      %1140 = vmatprep.mubr.f32.mxu0 0.0
      %1141 = vmatmul.mubr.f32.gmra.mrb[0].mxu0 %v618
      %v1142 = vpop.f32.mrb[0].mxu0
      %v1143 = vadd.f32 %v918, %v1142
      %v1144 = vpop.f32.mrb[0].mxu0
      %1145 = vmatprep.mubr.f32.mxu0 0.0
      %1146 = vmatmul.mubr.f32.gmra.mrb[0].mxu0 %v684
      %v1147 = vpop.f32.mrb[0].mxu0
      %v1148 = vadd.f32 %v923, %v1147
      %v1149 = vpop.f32.mrb[0].mxu0
      %1150 = vmatprep.mubr.f32.mxu0 0.0
      %1151 = vmatmul.mubr.f32.gmra.mrb[0].mxu0 %v621
      %v1152 = vpop.f32.mrb[0].mxu0
      %v1153 = vadd.f32 %v928, %v1152
      %v1154 = vpop.f32.mrb[0].mxu0
      %1155 = vmatprep.mubr.f32.mxu0 0.0
      %1156 = vmatmul.mubr.f32.gmra.mrb[0].mxu0 %v685
      %v1157 = vpop.f32.mrb[0].mxu0
      %v1158 = vadd.f32 %v933, %v1157
      %v1159 = vpop.f32.mrb[0].mxu0
      %1160 = vmatprep.mubr.f32.mxu0 0.0
      %1161 = vmatmul.mubr.f32.gmra.mrb[0].mxu0 %v624
      %v1162 = vpop.f32.mrb[0].mxu0
      %v1163 = vadd.f32 %v938, %v1162
      %v1164 = vpop.f32.mrb[0].mxu0
      %1165 = vmatprep.mubr.f32.mxu0 0.0
      %1166 = vmatmul.mubr.f32.gmra.mrb[0].mxu0 %v686
      %v1167 = vpop.f32.mrb[0].mxu0
      %v1168 = vadd.f32 %v943, %v1167
      %v1169 = vpop.f32.mrb[0].mxu0
      %1170 = vmatprep.mubr.f32.mxu0 0.0
      %1171 = vmatmul.mubr.f32.gmra.mrb[0].mxu0 %v627
      %v1172 = vpop.f32.mrb[0].mxu0
      %v1173 = vadd.f32 %v948, %v1172
      %v1174 = vpop.f32.mrb[0].mxu0
      %1175 = vmatprep.mubr.f32.mxu0 0.0
      %1176 = vmatmul.mubr.f32.gmra.mrb[0].mxu0 %v687
      %v1177 = vpop.f32.mrb[0].mxu0
      %v1178 = vadd.f32 %v953, %v1177
      %v1179 = vpop.f32.mrb[0].mxu0
      %1180 = vmatprep.mubr.f32.mxu0 0.0
      %1181 = vmatmul.mubr.f32.gmra.mrb[0].mxu0 %v630
      %v1182 = vpop.f32.mrb[0].mxu0
      %v1183 = vadd.f32 %v958, %v1182
      %v1184 = vpop.f32.mrb[0].mxu0
      %1185 = vmatprep.mubr.f32.mxu0 0.0
      %1186 = vmatmul.mubr.f32.gmra.mrb[0].mxu0 %v688
      %v1187 = vpop.f32.mrb[0].mxu0
      %v1188 = vadd.f32 %v963, %v1187
      %v1189 = vpop.f32.mrb[0].mxu0
      %1190 = vmatprep.mubr.f32.mxu0 0.0
      %1191 = vmatmul.mubr.f32.gmra.mrb[0].mxu0 %v633
      %v1192 = vpop.f32.mrb[0].mxu0
      %v1193 = vadd.f32 %v968, %v1192
      %v1194 = vpop.f32.mrb[0].mxu0
      %1195 = vmatprep.mubr.f32.mxu0 0.0
      %1196 = vmatmul.mubr.f32.gmra.mrb[0].mxu0 %v689
      %v1197 = vpop.f32.mrb[0].mxu0
      %v1198 = vadd.f32 %v973, %v1197
      %v1199 = vpop.f32.mrb[0].mxu0
      %1200 = vmatprep.mubr.f32.mxu0 0.0
      %1201 = vmatmul.mubr.f32.gmra.mrb[0].mxu0 %v636
      %v1202 = vpop.f32.mrb[0].mxu0
      %v1203 = vadd.f32 %v978, %v1202
      %v1204 = vpop.f32.mrb[0].mxu0
      %1205 = vmatprep.mubr.f32.mxu0 0.0
      %1206 = vmatmul.mubr.f32.gmra.mrb[0].mxu0 %v690
      %v1207 = vpop.f32.mrb[0].mxu0
      %v1208 = vadd.f32 %v983, %v1207
      %v1209 = vpop.f32.mrb[0].mxu0
      %1210 = vmatprep.mubr.f32.mxu0 0.0
      %1211 = vmatmul.mubr.f32.gmra.mrb[0].mxu0 %v639
      %v1212 = vpop.f32.mrb[0].mxu0
      %v1213 = vadd.f32 %v988, %v1212
      %v1214 = vpop.f32.mrb[0].mxu0
      %1215 = vmatprep.mubr.f32.mxu0 0.0
      %1216 = vmatmul.mubr.f32.gmra.mrb[0].mxu0 %v691
      %v1217 = vpop.f32.mrb[0].mxu0
      %v1218 = vadd.f32 %v993, %v1217
      %v1219 = vpop.f32.mrb[0].mxu0
      %1220 = vmatprep.mubr.f32.mxu0 0.0
      %1221 = vmatmul.mubr.f32.gmra.mrb[0].mxu0 %v642
      %v1222 = vpop.f32.mrb[0].mxu0
      %v1223 = vadd.f32 %v998, %v1222
      %v1224 = vpop.f32.mrb[0].mxu0
      %1225 = vmatprep.mubr.f32.mxu0 0.0
      %1226 = vmatmul.mubr.f32.gmra.mrb[0].mxu0 %v692
      %v1227 = vpop.f32.mrb[0].mxu0
      %v1228 = vadd.f32 %v1003, %v1227
      %v1229 = vpop.f32.mrb[0].mxu0
      %1230 = vmatprep.mubr.f32.mxu0 0.0
      %1231 = vmatmul.mubr.f32.gmra.mrb[0].mxu0 %v645
      %v1232 = vpop.f32.mrb[0].mxu0
      %v1233 = vadd.f32 %v1008, %v1232
      %v1234 = vpop.f32.mrb[0].mxu0
      %1235 = vmatprep.mubr.f32.mxu0 0.0
      %1236 = vmatmul.mubr.f32.gmra.mrb[0].mxu0 %v693
      %v1237 = vpop.f32.mrb[0].mxu0
      %v1238 = vadd.f32 %v1013, %v1237
      %v1239 = vpop.f32.mrb[0].mxu0
      %1240 = vdwg.mxu0
      %1241 = vmatprep.subr.mxu0 0.0
      %1242 = vmatpush1.msra.mxu0 %v694
      %1243 = vmatprep.subr.mxu0 0.0
      %1244 = vmatpush1.msra.mxu0 %v695
      %1245 = vmatprep.subr.mxu0 0.0
      %1246 = vmatpush1.msra.mxu0 %v696
      %1247 = vmatprep.subr.mxu0 0.0
      %1248 = vmatpush1.msra.mxu0 %v697
      %1249 = vmatprep.subr.mxu0 0.0
      %1250 = vmatpush1.msra.mxu0 %v698
      %1251 = vmatprep.subr.mxu0 0.0
      %1252 = vmatpush1.msra.mxu0 %v699
      %1253 = vmatprep.subr.mxu0 0.0
      %1254 = vmatpush1.msra.mxu0 %v700
      %1255 = vmatprep.subr.mxu0 0.0
      %1256 = vmatpush1.msra.mxu0 %v701
      %1257 = vmatprep.subr.mxu0 0.0
      %1258 = vmatpush1.msra.mxu0 %v702
      %1259 = vmatprep.subr.mxu0 0.0
      %1260 = vmatpush1.msra.mxu0 %v703
      %1261 = vmatprep.subr.mxu0 0.0
      %1262 = vmatpush1.msra.mxu0 %v704
      %1263 = vmatprep.subr.mxu0 0.0
      %1264 = vmatpush1.msra.mxu0 %v705
      %1265 = vmatprep.subr.mxu0 0.0
      %1266 = vmatpush1.msra.mxu0 %v706
      %1267 = vmatprep.subr.mxu0 0.0
      %1268 = vmatpush1.msra.mxu0 %v707
      %1269 = vmatprep.subr.mxu0 0.0
      %1270 = vmatpush1.msra.mxu0 %v708
      %1271 = vmatprep.subr.mxu0 0.0
      %1272 = vmatpush1.msra.mxu0 %v709
      %1273 = vmatprep.subr.mxu0 0.0
      %1274 = vmatpush1.msra.mxu0 %v710
      %1275 = vmatprep.subr.mxu0 0.0
      %1276 = vmatpush1.msra.mxu0 %v711
      %1277 = vmatprep.subr.mxu0 0.0
      %1278 = vmatpush1.msra.mxu0 %v712
      %1279 = vmatprep.subr.mxu0 0.0
      %1280 = vmatpush1.msra.mxu0 %v713
      %1281 = vmatprep.subr.mxu0 0.0
      %1282 = vmatpush1.msra.mxu0 %v714
      %1283 = vmatprep.subr.mxu0 0.0
      %1284 = vmatpush1.msra.mxu0 %v715
      %1285 = vmatprep.subr.mxu0 0.0
      %1286 = vmatpush1.msra.mxu0 %v716
      %1287 = vmatprep.subr.mxu0 0.0
      %1288 = vmatpush1.msra.mxu0 %v717
      %1289 = vmatprep.subr.mxu0 0.0
      %1290 = vmatpush1.msra.mxu0 %v718
      %1291 = vmatprep.subr.mxu0 0.0
      %1292 = vmatpush1.msra.mxu0 %v719
      %1293 = vmatprep.subr.mxu0 0.0
      %1294 = vmatpush1.msra.mxu0 %v720
      %1295 = vmatprep.subr.mxu0 0.0
      %1296 = vmatpush1.msra.mxu0 %v721
      %1297 = vmatprep.subr.mxu0 0.0
      %1298 = vmatpush1.msra.mxu0 %v722
      %1299 = vmatprep.subr.mxu0 0.0
      %1300 = vmatpush1.msra.mxu0 %v723
      %1301 = vmatprep.subr.mxu0 0.0
      %1302 = vmatpush1.msra.mxu0 %v724
      %1303 = vmatprep.subr.mxu0 0.0
      %1304 = vmatpush1.msra.mxu0 %v725
      %1305 = vmatprep.mubr.f32.mxu0 0.0
      %1306 = vmatmul.mubr.f32.gmra.mrb[0].mxu0 0.0
      %v1307 = vpop.f32.mrb[0].mxu0
      %v1308 = vadd.f32 %v1083, %v1307
      %v1309 = vpop.f32.mrb[0].mxu0
      %1310 = vmatprep.mubr.f32.mxu0 0.0
      %1311 = vmatmul.mubr.f32.gmra.mrb[0].mxu0 0.0
      %v1312 = vpop.f32.mrb[0].mxu0
      %v1313 = vadd.f32 %v1088, %v1312
      %v1314 = vpop.f32.mrb[0].mxu0
      %1315 = vmatprep.mubr.f32.mxu0 %v436
      %1316 = vmatmul.mubr.f32.gmra.mrb[0].mxu0 %v581
      %v1317 = vpop.f32.mrb[0].mxu0
      %v1318 = vadd.f32 %v1093, %v1317
      %v1319 = vpop.f32.mrb[0].mxu0
      %1320 = vmatprep.mubr.f32.mxu0 %v437
      %1321 = vmatmul.mubr.f32.gmra.mrb[0].mxu0 %v503
      %v1322 = vpop.f32.mrb[0].mxu0
      %v1323 = vadd.f32 %v1098, %v1322
      %v1324 = vpop.f32.mrb[0].mxu0
      %1325 = vmatprep.mubr.f32.mxu0 %v438
      %1326 = vmatmul.mubr.f32.gmra.mrb[0].mxu0 %v582
      %v1327 = vpop.f32.mrb[0].mxu0
      %v1328 = vadd.f32 %v1103, %v1327
      %v1329 = vpop.f32.mrb[0].mxu0
      %1330 = vmatprep.mubr.f32.mxu0 %v439
      %1331 = vmatmul.mubr.f32.gmra.mrb[0].mxu0 %v506
      %v1332 = vpop.f32.mrb[0].mxu0
      %v1333 = vadd.f32 %v1108, %v1332
      %v1334 = vpop.f32.mrb[0].mxu0
      %1335 = vmatprep.mubr.f32.mxu0 %v440
      %1336 = vmatmul.mubr.f32.gmra.mrb[0].mxu0 %v583
      %v1337 = vpop.f32.mrb[0].mxu0
      %v1338 = vadd.f32 %v1113, %v1337
      %v1339 = vpop.f32.mrb[0].mxu0
      %1340 = vmatprep.mubr.f32.mxu0 %v441
      %1341 = vmatmul.mubr.f32.gmra.mrb[0].mxu0 %v509
      %v1342 = vpop.f32.mrb[0].mxu0
      %v1343 = vadd.f32 %v1118, %v1342
      %v1344 = vpop.f32.mrb[0].mxu0
      %1345 = vmatprep.mubr.f32.mxu0 %v442
      %1346 = vmatmul.mubr.f32.gmra.mrb[0].mxu0 %v584
      %v1347 = vpop.f32.mrb[0].mxu0
      %v1348 = vadd.f32 %v1123, %v1347
      %v1349 = vpop.f32.mrb[0].mxu0
      %1350 = vmatprep.mubr.f32.mxu0 %v443
      %1351 = vmatmul.mubr.f32.gmra.mrb[0].mxu0 %v512
      %v1352 = vpop.f32.mrb[0].mxu0
      %v1353 = vadd.f32 %v1128, %v1352
      %v1354 = vpop.f32.mrb[0].mxu0
      %1355 = vmatprep.mubr.f32.mxu0 %v444
      %1356 = vmatmul.mubr.f32.gmra.mrb[0].mxu0 %v585
      %v1357 = vpop.f32.mrb[0].mxu0
      %v1358 = vadd.f32 %v1133, %v1357
      %v1359 = vpop.f32.mrb[0].mxu0
      %1360 = vmatprep.mubr.f32.mxu0 %v445
      %1361 = vmatmul.mubr.f32.gmra.mrb[0].mxu0 %v515
      %v1362 = vpop.f32.mrb[0].mxu0
      %v1363 = vadd.f32 %v1138, %v1362
      %v1364 = vpop.f32.mrb[0].mxu0
      %1365 = vmatprep.mubr.f32.mxu0 %v446
      %1366 = vmatmul.mubr.f32.gmra.mrb[0].mxu0 %v586
      %v1367 = vpop.f32.mrb[0].mxu0
      %v1368 = vadd.f32 %v1143, %v1367
      %v1369 = vpop.f32.mrb[0].mxu0
      %1370 = vmatprep.mubr.f32.mxu0 %v447
      %1371 = vmatmul.mubr.f32.gmra.mrb[0].mxu0 %v518
      %v1372 = vpop.f32.mrb[0].mxu0
      %v1373 = vadd.f32 %v1148, %v1372
      %v1374 = vpop.f32.mrb[0].mxu0
      %1375 = vmatprep.mubr.f32.mxu0 %v448
      %1376 = vmatmul.mubr.f32.gmra.mrb[0].mxu0 %v587
      %v1377 = vpop.f32.mrb[0].mxu0
      %v1378 = vadd.f32 %v1153, %v1377
      %v1379 = vpop.f32.mrb[0].mxu0
      %1380 = vmatprep.mubr.f32.mxu0 %v449
      %1381 = vmatmul.mubr.f32.gmra.mrb[0].mxu0 %v521
      %v1382 = vpop.f32.mrb[0].mxu0
      %v1383 = vadd.f32 %v1158, %v1382
      %v1384 = vpop.f32.mrb[0].mxu0
      %1385 = vmatprep.mubr.f32.mxu0 %v450
      %1386 = vmatmul.mubr.f32.gmra.mrb[0].mxu0 %v588
      %v1387 = vpop.f32.mrb[0].mxu0
      %v1388 = vadd.f32 %v1163, %v1387
      %v1389 = vpop.f32.mrb[0].mxu0
      %1390 = vmatprep.mubr.f32.mxu0 %v451
      %1391 = vmatmul.mubr.f32.gmra.mrb[0].mxu0 %v524
      %v1392 = vpop.f32.mrb[0].mxu0
      %v1393 = vadd.f32 %v1168, %v1392
      %v1394 = vpop.f32.mrb[0].mxu0
      %1395 = vmatprep.mubr.f32.mxu0 %v452
      %1396 = vmatmul.mubr.f32.gmra.mrb[0].mxu0 %v589
      %v1397 = vpop.f32.mrb[0].mxu0
      %v1398 = vadd.f32 %v1173, %v1397
      %v1399 = vpop.f32.mrb[0].mxu0
      %1400 = vmatprep.mubr.f32.mxu0 %v453
      %1401 = vmatmul.mubr.f32.gmra.mrb[0].mxu0 %v527
      %v1402 = vpop.f32.mrb[0].mxu0
      %v1403 = vadd.f32 %v1178, %v1402
      %v1404 = vpop.f32.mrb[0].mxu0
      %1405 = vmatprep.mubr.f32.mxu0 %v454
      %1406 = vmatmul.mubr.f32.gmra.mrb[0].mxu0 %v590
      %v1407 = vpop.f32.mrb[0].mxu0
      %v1408 = vadd.f32 %v1183, %v1407
      %v1409 = vpop.f32.mrb[0].mxu0
      %1410 = vmatprep.mubr.f32.mxu0 %v455
      %1411 = vmatmul.mubr.f32.gmra.mrb[0].mxu0 %v530
      %v1412 = vpop.f32.mrb[0].mxu0
      %v1413 = vadd.f32 %v1188, %v1412
      %v1414 = vpop.f32.mrb[0].mxu0
      %1415 = vmatprep.mubr.f32.mxu0 %v456
      %1416 = vmatmul.mubr.f32.gmra.mrb[0].mxu0 %v591
      %v1417 = vpop.f32.mrb[0].mxu0
      %v1418 = vadd.f32 %v1193, %v1417
      %v1419 = vpop.f32.mrb[0].mxu0
      %1420 = vmatprep.mubr.f32.mxu0 %v457
      %1421 = vmatmul.mubr.f32.gmra.mrb[0].mxu0 %v533
      %v1422 = vpop.f32.mrb[0].mxu0
      %v1423 = vadd.f32 %v1198, %v1422
      %v1424 = vpop.f32.mrb[0].mxu0
      %1425 = vmatprep.mubr.f32.mxu0 %v458
      %1426 = vmatmul.mubr.f32.gmra.mrb[0].mxu0 %v592
      %v1427 = vpop.f32.mrb[0].mxu0
      %v1428 = vadd.f32 %v1203, %v1427
      %v1429 = vpop.f32.mrb[0].mxu0
      %1430 = vmatprep.mubr.f32.mxu0 %v459
      %1431 = vmatmul.mubr.f32.gmra.mrb[0].mxu0 %v536
      %v1432 = vpop.f32.mrb[0].mxu0
      %v1433 = vadd.f32 %v1208, %v1432
      %v1434 = vpop.f32.mrb[0].mxu0
      %1435 = vmatprep.mubr.f32.mxu0 %v460
      %1436 = vmatmul.mubr.f32.gmra.mrb[0].mxu0 %v593
      %v1437 = vpop.f32.mrb[0].mxu0
      %v1438 = vadd.f32 %v1213, %v1437
      %v1439 = vpop.f32.mrb[0].mxu0
      %1440 = vmatprep.mubr.f32.mxu0 %v461
      %1441 = vmatmul.mubr.f32.gmra.mrb[0].mxu0 %v539
      %v1442 = vpop.f32.mrb[0].mxu0
      %v1443 = vadd.f32 %v1218, %v1442
      %v1444 = vpop.f32.mrb[0].mxu0
      %1445 = vmatprep.mubr.f32.mxu0 %v462
      %1446 = vmatmul.mubr.f32.gmra.mrb[0].mxu0 %v594
      %v1447 = vpop.f32.mrb[0].mxu0
      %v1448 = vadd.f32 %v1223, %v1447
      %v1449 = vpop.f32.mrb[0].mxu0
      %1450 = vmatprep.mubr.f32.mxu0 %v463
      %1451 = vmatmul.mubr.f32.gmra.mrb[0].mxu0 %v542
      %v1452 = vpop.f32.mrb[0].mxu0
      %v1453 = vadd.f32 %v1228, %v1452
      %v1454 = vpop.f32.mrb[0].mxu0
      %1455 = vmatprep.mubr.f32.mxu0 %v464
      %1456 = vmatmul.mubr.f32.gmra.mrb[0].mxu0 %v595
      %v1457 = vpop.f32.mrb[0].mxu0
      %v1458 = vadd.f32 %v1233, %v1457
      %v1459 = vpop.f32.mrb[0].mxu0
      %1460 = vmatprep.mubr.f32.mxu0 %v465
      %1461 = vmatmul.mubr.f32.gmra.mrb[0].mxu0 %v545
      %v1462 = vpop.f32.mrb[0].mxu0
      %v1463 = vadd.f32 %v1238, %v1462
      %v1464 = vpop.f32.mrb[0].mxu0
      %1465 = vdwg.mxu0
      %1466 = vmatprep.subr.mxu0 0.0
      %1467 = vmatpush1.msra.mxu0 %v726
      %1468 = vmatprep.subr.mxu0 0.0
      %1469 = vmatpush1.msra.mxu0 %v727
      %1470 = vmatprep.subr.mxu0 0.0
      %1471 = vmatpush1.msra.mxu0 %v728
      %1472 = vmatprep.subr.mxu0 0.0
      %1473 = vmatpush1.msra.mxu0 %v729
      %1474 = vmatprep.subr.mxu0 0.0
      %1475 = vmatpush1.msra.mxu0 %v730
      %1476 = vmatprep.subr.mxu0 0.0
      %1477 = vmatpush1.msra.mxu0 %v731
      %1478 = vmatprep.subr.mxu0 0.0
      %1479 = vmatpush1.msra.mxu0 %v732
      %1480 = vmatprep.subr.mxu0 0.0
      %1481 = vmatpush1.msra.mxu0 %v733
      %1482 = vmatprep.subr.mxu0 0.0
      %1483 = vmatpush1.msra.mxu0 %v734
      %1484 = vmatprep.subr.mxu0 0.0
      %1485 = vmatpush1.msra.mxu0 %v735
      %1486 = vmatprep.subr.mxu0 0.0
      %1487 = vmatpush1.msra.mxu0 %v736
      %1488 = vmatprep.subr.mxu0 0.0
      %1489 = vmatpush1.msra.mxu0 %v737
      %1490 = vmatprep.subr.mxu0 0.0
      %1491 = vmatpush1.msra.mxu0 %v738
      %1492 = vmatprep.subr.mxu0 0.0
      %1493 = vmatpush1.msra.mxu0 %v739
      %1494 = vmatprep.subr.mxu0 0.0
      %1495 = vmatpush1.msra.mxu0 %v740
      %1496 = vmatprep.subr.mxu0 0.0
      %1497 = vmatpush1.msra.mxu0 %v741
      %1498 = vmatprep.subr.mxu0 0.0
      %1499 = vmatpush1.msra.mxu0 0.0
      %1500 = vmatprep.subr.mxu0 0.0
      %1501 = vmatpush1.msra.mxu0 0.0
      %1502 = vmatprep.subr.mxu0 0.0
      %1503 = vmatpush1.msra.mxu0 0.0
      %1504 = vmatprep.subr.mxu0 0.0
      %1505 = vmatpush1.msra.mxu0 0.0
      %1506 = vmatprep.subr.mxu0 0.0
      %1507 = vmatpush1.msra.mxu0 0.0
      %1508 = vmatprep.subr.mxu0 0.0
      %1509 = vmatpush1.msra.mxu0 0.0
      %1510 = vmatprep.subr.mxu0 0.0
      %1511 = vmatpush1.msra.mxu0 0.0
      %1512 = vmatprep.subr.mxu0 0.0
      %1513 = vmatpush1.msra.mxu0 0.0
      %1514 = vmatprep.subr.mxu0 0.0
      %1515 = vmatpush1.msra.mxu0 0.0
      %1516 = vmatprep.subr.mxu0 0.0
      %1517 = vmatpush1.msra.mxu0 0.0
      %1518 = vmatprep.subr.mxu0 0.0
      %1519 = vmatpush1.msra.mxu0 0.0
      %1520 = vmatprep.subr.mxu0 0.0
      %1521 = vmatpush1.msra.mxu0 0.0
      %1522 = vmatprep.subr.mxu0 0.0
      %1523 = vmatpush1.msra.mxu0 0.0
      %1524 = vmatprep.subr.mxu0 0.0
      %1525 = vmatpush1.msra.mxu0 0.0
      %1526 = vmatprep.subr.mxu0 0.0
      %1527 = vmatpush1.msra.mxu0 0.0
      %1528 = vmatprep.subr.mxu0 0.0
      %1529 = vmatpush1.msra.mxu0 0.0
      %1530 = vmatprep.mubr.f32.mxu0 0.0
      %1531 = vmatmul.mubr.f32.gmra.mrb[0].mxu0 0.0
      %v1532 = vpop.f32.mrb[0].mxu0
      %v1533 = vadd.f32 %v1308, %v1532
      %v1534 = vpop.f32.mrb[0].mxu0
      %1535 = vmatprep.mubr.f32.mxu0 0.0
      %1536 = vmatmul.mubr.f32.gmra.mrb[0].mxu0 0.0
      %v1537 = vpop.f32.mrb[0].mxu0
      %v1538 = vadd.f32 %v1313, %v1537
      %v1539 = vpop.f32.mrb[0].mxu0
      %1540 = vmatprep.mubr.f32.mxu0 0.0
      %1541 = vmatmul.mubr.f32.gmra.mrb[0].mxu0 %v600
      %v1542 = vpop.f32.mrb[0].mxu0
      %v1543 = vadd.f32 %v1318, %v1542
      %v1544 = vpop.f32.mrb[0].mxu0
      %1545 = vmatprep.mubr.f32.mxu0 0.0
      %1546 = vmatmul.mubr.f32.gmra.mrb[0].mxu0 %v678
      %v1547 = vpop.f32.mrb[0].mxu0
      %v1548 = vadd.f32 %v1323, %v1547
      %v1549 = vpop.f32.mrb[0].mxu0
      %1550 = vmatprep.mubr.f32.mxu0 0.0
      %1551 = vmatmul.mubr.f32.gmra.mrb[0].mxu0 %v603
      %v1552 = vpop.f32.mrb[0].mxu0
      %v1553 = vadd.f32 %v1328, %v1552
      %v1554 = vpop.f32.mrb[0].mxu0
      %1555 = vmatprep.mubr.f32.mxu0 0.0
      %1556 = vmatmul.mubr.f32.gmra.mrb[0].mxu0 %v679
      %v1557 = vpop.f32.mrb[0].mxu0
      %v1558 = vadd.f32 %v1333, %v1557
      %v1559 = vpop.f32.mrb[0].mxu0
      %1560 = vmatprep.mubr.f32.mxu0 0.0
      %1561 = vmatmul.mubr.f32.gmra.mrb[0].mxu0 %v606
      %v1562 = vpop.f32.mrb[0].mxu0
      %v1563 = vadd.f32 %v1338, %v1562
      %v1564 = vpop.f32.mrb[0].mxu0
      %1565 = vmatprep.mubr.f32.mxu0 0.0
      %1566 = vmatmul.mubr.f32.gmra.mrb[0].mxu0 %v680
      %v1567 = vpop.f32.mrb[0].mxu0
      %v1568 = vadd.f32 %v1343, %v1567
      %v1569 = vpop.f32.mrb[0].mxu0
      %1570 = vmatprep.mubr.f32.mxu0 0.0
      %1571 = vmatmul.mubr.f32.gmra.mrb[0].mxu0 %v609
      %v1572 = vpop.f32.mrb[0].mxu0
      %v1573 = vadd.f32 %v1348, %v1572
      %v1574 = vpop.f32.mrb[0].mxu0
      %1575 = vmatprep.mubr.f32.mxu0 0.0
      %1576 = vmatmul.mubr.f32.gmra.mrb[0].mxu0 %v681
      %v1577 = vpop.f32.mrb[0].mxu0
      %v1578 = vadd.f32 %v1353, %v1577
      %v1579 = vpop.f32.mrb[0].mxu0
      %1580 = vmatprep.mubr.f32.mxu0 0.0
      %1581 = vmatmul.mubr.f32.gmra.mrb[0].mxu0 %v612
      %v1582 = vpop.f32.mrb[0].mxu0
      %v1583 = vadd.f32 %v1358, %v1582
      %v1584 = vpop.f32.mrb[0].mxu0
      %1585 = vmatprep.mubr.f32.mxu0 0.0
      %1586 = vmatmul.mubr.f32.gmra.mrb[0].mxu0 %v682
      %v1587 = vpop.f32.mrb[0].mxu0
      %v1588 = vadd.f32 %v1363, %v1587
      %v1589 = vpop.f32.mrb[0].mxu0
      %1590 = vmatprep.mubr.f32.mxu0 0.0
      %1591 = vmatmul.mubr.f32.gmra.mrb[0].mxu0 %v615
      %v1592 = vpop.f32.mrb[0].mxu0
      %v1593 = vadd.f32 %v1368, %v1592
      %v1594 = vpop.f32.mrb[0].mxu0
      %1595 = vmatprep.mubr.f32.mxu0 0.0
      %1596 = vmatmul.mubr.f32.gmra.mrb[0].mxu0 %v683
      %v1597 = vpop.f32.mrb[0].mxu0
      %v1598 = vadd.f32 %v1373, %v1597
      %v1599 = vpop.f32.mrb[0].mxu0
      %1600 = vmatprep.mubr.f32.mxu0 0.0
      %1601 = vmatmul.mubr.f32.gmra.mrb[0].mxu0 %v618
      %v1602 = vpop.f32.mrb[0].mxu0
      %v1603 = vadd.f32 %v1378, %v1602
      %v1604 = vpop.f32.mrb[0].mxu0
      %1605 = vmatprep.mubr.f32.mxu0 0.0
      %1606 = vmatmul.mubr.f32.gmra.mrb[0].mxu0 %v684
      %v1607 = vpop.f32.mrb[0].mxu0
      %v1608 = vadd.f32 %v1383, %v1607
      %v1609 = vpop.f32.mrb[0].mxu0
      %1610 = vmatprep.mubr.f32.mxu0 0.0
      %1611 = vmatmul.mubr.f32.gmra.mrb[0].mxu0 %v621
      %v1612 = vpop.f32.mrb[0].mxu0
      %v1613 = vadd.f32 %v1388, %v1612
      %v1614 = vpop.f32.mrb[0].mxu0
      %1615 = vmatprep.mubr.f32.mxu0 0.0
      %1616 = vmatmul.mubr.f32.gmra.mrb[0].mxu0 %v685
      %v1617 = vpop.f32.mrb[0].mxu0
      %v1618 = vadd.f32 %v1393, %v1617
      %v1619 = vpop.f32.mrb[0].mxu0
      %1620 = vmatprep.mubr.f32.mxu0 0.0
      %1621 = vmatmul.mubr.f32.gmra.mrb[0].mxu0 %v624
      %v1622 = vpop.f32.mrb[0].mxu0
      %v1623 = vadd.f32 %v1398, %v1622
      %v1624 = vpop.f32.mrb[0].mxu0
      %1625 = vmatprep.mubr.f32.mxu0 0.0
      %1626 = vmatmul.mubr.f32.gmra.mrb[0].mxu0 %v686
      %v1627 = vpop.f32.mrb[0].mxu0
      %v1628 = vadd.f32 %v1403, %v1627
      %v1629 = vpop.f32.mrb[0].mxu0
      %1630 = vmatprep.mubr.f32.mxu0 0.0
      %1631 = vmatmul.mubr.f32.gmra.mrb[0].mxu0 %v627
      %v1632 = vpop.f32.mrb[0].mxu0
      %v1633 = vadd.f32 %v1408, %v1632
      %v1634 = vpop.f32.mrb[0].mxu0
      %1635 = vmatprep.mubr.f32.mxu0 0.0
      %1636 = vmatmul.mubr.f32.gmra.mrb[0].mxu0 %v687
      %v1637 = vpop.f32.mrb[0].mxu0
      %v1638 = vadd.f32 %v1413, %v1637
      %v1639 = vpop.f32.mrb[0].mxu0
      %1640 = vmatprep.mubr.f32.mxu0 0.0
      %1641 = vmatmul.mubr.f32.gmra.mrb[0].mxu0 %v630
      %v1642 = vpop.f32.mrb[0].mxu0
      %v1643 = vadd.f32 %v1418, %v1642
      %v1644 = vpop.f32.mrb[0].mxu0
      %1645 = vmatprep.mubr.f32.mxu0 0.0
      %1646 = vmatmul.mubr.f32.gmra.mrb[0].mxu0 %v688
      %v1647 = vpop.f32.mrb[0].mxu0
      %v1648 = vadd.f32 %v1423, %v1647
      %v1649 = vpop.f32.mrb[0].mxu0
      %1650 = vmatprep.mubr.f32.mxu0 0.0
      %1651 = vmatmul.mubr.f32.gmra.mrb[0].mxu0 %v633
      %v1652 = vpop.f32.mrb[0].mxu0
      %v1653 = vadd.f32 %v1428, %v1652
      %v1654 = vpop.f32.mrb[0].mxu0
      %1655 = vmatprep.mubr.f32.mxu0 0.0
      %1656 = vmatmul.mubr.f32.gmra.mrb[0].mxu0 %v689
      %v1657 = vpop.f32.mrb[0].mxu0
      %v1658 = vadd.f32 %v1433, %v1657
      %v1659 = vpop.f32.mrb[0].mxu0
      %1660 = vmatprep.mubr.f32.mxu0 0.0
      %1661 = vmatmul.mubr.f32.gmra.mrb[0].mxu0 %v636
      %v1662 = vpop.f32.mrb[0].mxu0
      %v1663 = vadd.f32 %v1438, %v1662
      %v1664 = vpop.f32.mrb[0].mxu0
      %1665 = vmatprep.mubr.f32.mxu0 0.0
      %1666 = vmatmul.mubr.f32.gmra.mrb[0].mxu0 %v690
      %v1667 = vpop.f32.mrb[0].mxu0
      %v1668 = vadd.f32 %v1443, %v1667
      %v1669 = vpop.f32.mrb[0].mxu0
      %1670 = vmatprep.mubr.f32.mxu0 0.0
      %1671 = vmatmul.mubr.f32.gmra.mrb[0].mxu0 %v639
      %v1672 = vpop.f32.mrb[0].mxu0
      %v1673 = vadd.f32 %v1448, %v1672
      %v1674 = vpop.f32.mrb[0].mxu0
      %1675 = vmatprep.mubr.f32.mxu0 0.0
      %1676 = vmatmul.mubr.f32.gmra.mrb[0].mxu0 %v691
      %v1677 = vpop.f32.mrb[0].mxu0
      %v1678 = vadd.f32 %v1453, %v1677
      %v1679 = vpop.f32.mrb[0].mxu0
      %1680 = vmatprep.mubr.f32.mxu0 0.0
      %1681 = vmatmul.mubr.f32.gmra.mrb[0].mxu0 %v642
      %v1682 = vpop.f32.mrb[0].mxu0
      %v1683 = vadd.f32 %v1458, %v1682
      %v1684 = vpop.f32.mrb[0].mxu0
      %1685 = vmatprep.mubr.f32.mxu0 0.0
      %1686 = vmatmul.mubr.f32.gmra.mrb[0].mxu0 %v692
      %v1687 = vpop.f32.mrb[0].mxu0
      %v1688 = vadd.f32 %v1463, %v1687
      %v1689 = vpop.f32.mrb[0].mxu0
      %1690 = vdwg.mxu0
      %s1691 = scalar_lea.vmem %s308, 768
      %v1692 = vld [vmem:[%s1691] sm:$0xff]
      %v1693 = vld [vmem:[%s1691 + $0x8] sm:$0xff]
      %v1694 = vld [vmem:[%s1691 + $0x10] sm:$0xff]
      %v1695 = vld [vmem:[%s1691 + $0x18] sm:$0xff]
      %v1696 = vld [vmem:[%s1691 + $0x20] sm:$0xff]
      %v1697 = vld [vmem:[%s1691 + $0x28] sm:$0xff]
      %v1698 = vld [vmem:[%s1691 + $0x30] sm:$0xff]
      %v1699 = vld [vmem:[%s1691 + $0x38] sm:$0xff]
      %v1700 = vld [vmem:[%s1691 + $0x40] sm:$0xff]
      %v1701 = vld [vmem:[%s1691 + $0x48] sm:$0xff]
      %v1702 = vld [vmem:[%s1691 + $0x50] sm:$0xff]
      %v1703 = vld [vmem:[%s1691 + $0x58] sm:$0xff]
      %v1704 = vld [vmem:[%s1691 + $0x60] sm:$0xff]
      %v1705 = vld [vmem:[%s1691 + $0x68] sm:$0xff]
      %v1706 = vld [vmem:[%s1691 + $0x70] sm:$0xff]
      %v1707 = vld [vmem:[%s1691 + $0x78] sm:$0xff]
      %v1708 = vld [vmem:[%s1691 + $0x80] sm:$0xff]
      %v1709 = vld [vmem:[%s1691 + $0x88] sm:$0xff]
      %v1710 = vld [vmem:[%s1691 + $0x90] sm:$0xff]
      %v1711 = vld [vmem:[%s1691 + $0x98] sm:$0xff]
      %v1712 = vld [vmem:[%s1691 + $0xa0] sm:$0xff]
      %v1713 = vld [vmem:[%s1691 + $0xa8] sm:$0xff]
      %v1714 = vld [vmem:[%s1691 + $0xb0] sm:$0xff]
      %v1715 = vld [vmem:[%s1691 + $0xb8] sm:$0xff]
      %v1716 = vld [vmem:[%s1691 + $0xc0] sm:$0xff]
      %v1717 = vld [vmem:[%s1691 + $0xc8] sm:$0xff]
      %v1718 = vld [vmem:[%s1691 + $0xd0] sm:$0xff]
      %v1719 = vld [vmem:[%s1691 + $0xd8] sm:$0xff]
      %v1720 = vld [vmem:[%s1691 + $0xe0] sm:$0xff]
      %v1721 = vld [vmem:[%s1691 + $0xe8] sm:$0xff]
      %v1722 = vld [vmem:[%s1691 + $0xf0] sm:$0xff]
      %v1723 = vld [vmem:[%s1691 + $0xf8] sm:$0xff]
      %v1724 = vld [vmem:[%s1691 + $0x100] sm:$0xff]
      %v1725 = vld [vmem:[%s1691 + $0x108] sm:$0xff]
      %v1726 = vld [vmem:[%s1691 + $0x110] sm:$0xff]
      %v1727 = vld [vmem:[%s1691 + $0x118] sm:$0xff]
      %v1728 = vld [vmem:[%s1691 + $0x120] sm:$0xff]
      %v1729 = vld [vmem:[%s1691 + $0x128] sm:$0xff]
      %v1730 = vld [vmem:[%s1691 + $0x130] sm:$0xff]
      %v1731 = vld [vmem:[%s1691 + $0x138] sm:$0xff]
      %v1732 = vld [vmem:[%s1691 + $0x140] sm:$0xff]
      %v1733 = vld [vmem:[%s1691 + $0x148] sm:$0xff]
      %v1734 = vld [vmem:[%s1691 + $0x150] sm:$0xff]
      %v1735 = vld [vmem:[%s1691 + $0x158] sm:$0xff]
      %v1736 = vld [vmem:[%s1691 + $0x160] sm:$0xff]
      %v1737 = vld [vmem:[%s1691 + $0x168] sm:$0xff]
      %v1738 = vld [vmem:[%s1691 + $0x170] sm:$0xff]
      %v1739 = vld [vmem:[%s1691 + $0x178] sm:$0xff]
      %1740 = vmatprep.subr.mxu0 0.0
      %1741 = vmatpush1.msra.mxu0 %v1692
      %1742 = vmatprep.subr.mxu0 0.0
      %1743 = vmatpush1.msra.mxu0 %v1693
      %1744 = vmatprep.subr.mxu0 0.0
      %1745 = vmatpush1.msra.mxu0 %v1694
      %1746 = vmatprep.subr.mxu0 0.0
      %1747 = vmatpush1.msra.mxu0 %v1695
      %1748 = vmatprep.subr.mxu0 0.0
      %1749 = vmatpush1.msra.mxu0 %v1696
      %1750 = vmatprep.subr.mxu0 0.0
      %1751 = vmatpush1.msra.mxu0 %v1697
      %1752 = vmatprep.subr.mxu0 0.0
      %1753 = vmatpush1.msra.mxu0 %v1698
      %1754 = vmatprep.subr.mxu0 0.0
      %1755 = vmatpush1.msra.mxu0 %v1699
      %1756 = vmatprep.subr.mxu0 0.0
      %1757 = vmatpush1.msra.mxu0 %v1700
      %1758 = vmatprep.subr.mxu0 0.0
      %1759 = vmatpush1.msra.mxu0 %v1701
      %1760 = vmatprep.subr.mxu0 0.0
      %1761 = vmatpush1.msra.mxu0 %v1702
      %1762 = vmatprep.subr.mxu0 0.0
      %1763 = vmatpush1.msra.mxu0 %v1703
      %1764 = vmatprep.subr.mxu0 0.0
      %1765 = vmatpush1.msra.mxu0 %v1704
      %1766 = vmatprep.subr.mxu0 0.0
      %1767 = vmatpush1.msra.mxu0 %v1705
      %1768 = vmatprep.subr.mxu0 0.0
      %1769 = vmatpush1.msra.mxu0 %v1706
      %1770 = vmatprep.subr.mxu0 0.0
      %1771 = vmatpush1.msra.mxu0 %v1707
      %1772 = vmatprep.subr.mxu0 0.0
      %1773 = vmatpush1.msra.mxu0 %v1708
      %1774 = vmatprep.subr.mxu0 0.0
      %1775 = vmatpush1.msra.mxu0 %v1709
      %1776 = vmatprep.subr.mxu0 0.0
      %1777 = vmatpush1.msra.mxu0 %v1710
      %1778 = vmatprep.subr.mxu0 0.0
      %1779 = vmatpush1.msra.mxu0 %v1711
      %1780 = vmatprep.subr.mxu0 0.0
      %1781 = vmatpush1.msra.mxu0 %v1712
      %1782 = vmatprep.subr.mxu0 0.0
      %1783 = vmatpush1.msra.mxu0 %v1713
      %1784 = vmatprep.subr.mxu0 0.0
      %1785 = vmatpush1.msra.mxu0 %v1714
      %1786 = vmatprep.subr.mxu0 0.0
      %1787 = vmatpush1.msra.mxu0 %v1715
      %1788 = vmatprep.subr.mxu0 0.0
      %1789 = vmatpush1.msra.mxu0 %v1716
      %1790 = vmatprep.subr.mxu0 0.0
      %1791 = vmatpush1.msra.mxu0 %v1717
      %1792 = vmatprep.subr.mxu0 0.0
      %1793 = vmatpush1.msra.mxu0 %v1718
      %1794 = vmatprep.subr.mxu0 0.0
      %1795 = vmatpush1.msra.mxu0 %v1719
      %1796 = vmatprep.subr.mxu0 0.0
      %1797 = vmatpush1.msra.mxu0 %v1720
      %1798 = vmatprep.subr.mxu0 0.0
      %1799 = vmatpush1.msra.mxu0 %v1721
      %1800 = vmatprep.subr.mxu0 0.0
      %1801 = vmatpush1.msra.mxu0 %v1722
      %1802 = vmatprep.subr.mxu0 0.0
      %1803 = vmatpush1.msra.mxu0 %v1723
      %1804 = vmatprep.mubr.f32.mxu0 %v438
      %1805 = vmatmul.mubr.f32.gmra.mrb[0].mxu0 %v582
      %v1806 = vpop.f32.mrb[0].mxu0
      %v1807 = vadd.f32 0.0, %v1806
      %v1808 = vpop.f32.mrb[0].mxu0
      %1809 = vmatprep.mubr.f32.mxu0 %v439
      %1810 = vmatmul.mubr.f32.gmra.mrb[0].mxu0 %v506
      %v1811 = vpop.f32.mrb[0].mxu0
      %v1812 = vadd.f32 0.0, %v1811
      %v1813 = vpop.f32.mrb[0].mxu0
      %1814 = vmatprep.mubr.f32.mxu0 %v440
      %1815 = vmatmul.mubr.f32.gmra.mrb[0].mxu0 %v583
      %v1816 = vpop.f32.mrb[0].mxu0
      %v1817 = vadd.f32 0.0, %v1816
      %v1818 = vpop.f32.mrb[0].mxu0
      %1819 = vmatprep.mubr.f32.mxu0 %v441
      %1820 = vmatmul.mubr.f32.gmra.mrb[0].mxu0 %v509
      %v1821 = vpop.f32.mrb[0].mxu0
      %v1822 = vadd.f32 0.0, %v1821
      %v1823 = vpop.f32.mrb[0].mxu0
      %1824 = vmatprep.mubr.f32.mxu0 %v442
      %1825 = vmatmul.mubr.f32.gmra.mrb[0].mxu0 %v584
      %v1826 = vpop.f32.mrb[0].mxu0
      %v1827 = vadd.f32 0.0, %v1826
      %v1828 = vpop.f32.mrb[0].mxu0
      %1829 = vmatprep.mubr.f32.mxu0 %v443
      %1830 = vmatmul.mubr.f32.gmra.mrb[0].mxu0 %v512
      %v1831 = vpop.f32.mrb[0].mxu0
      %v1832 = vadd.f32 0.0, %v1831
      %v1833 = vpop.f32.mrb[0].mxu0
      %1834 = vmatprep.mubr.f32.mxu0 %v444
      %1835 = vmatmul.mubr.f32.gmra.mrb[0].mxu0 %v585
      %v1836 = vpop.f32.mrb[0].mxu0
      %v1837 = vadd.f32 0.0, %v1836
      %v1838 = vpop.f32.mrb[0].mxu0
      %1839 = vmatprep.mubr.f32.mxu0 %v445
      %1840 = vmatmul.mubr.f32.gmra.mrb[0].mxu0 %v515
      %v1841 = vpop.f32.mrb[0].mxu0
      %v1842 = vadd.f32 0.0, %v1841
      %v1843 = vpop.f32.mrb[0].mxu0
      %1844 = vmatprep.mubr.f32.mxu0 %v446
      %1845 = vmatmul.mubr.f32.gmra.mrb[0].mxu0 %v586
      %v1846 = vpop.f32.mrb[0].mxu0
      %v1847 = vadd.f32 0.0, %v1846
      %v1848 = vpop.f32.mrb[0].mxu0
      %1849 = vmatprep.mubr.f32.mxu0 %v447
      %1850 = vmatmul.mubr.f32.gmra.mrb[0].mxu0 %v518
      %v1851 = vpop.f32.mrb[0].mxu0
      %v1852 = vadd.f32 0.0, %v1851
      %v1853 = vpop.f32.mrb[0].mxu0
      %1854 = vmatprep.mubr.f32.mxu0 %v448
      %1855 = vmatmul.mubr.f32.gmra.mrb[0].mxu0 %v587
      %v1856 = vpop.f32.mrb[0].mxu0
      %v1857 = vadd.f32 0.0, %v1856
      %v1858 = vpop.f32.mrb[0].mxu0
      %1859 = vmatprep.mubr.f32.mxu0 %v449
      %1860 = vmatmul.mubr.f32.gmra.mrb[0].mxu0 %v521
      %v1861 = vpop.f32.mrb[0].mxu0
      %v1862 = vadd.f32 0.0, %v1861
      %v1863 = vpop.f32.mrb[0].mxu0
      %1864 = vmatprep.mubr.f32.mxu0 %v450
      %1865 = vmatmul.mubr.f32.gmra.mrb[0].mxu0 %v588
      %v1866 = vpop.f32.mrb[0].mxu0
      %v1867 = vadd.f32 0.0, %v1866
      %v1868 = vpop.f32.mrb[0].mxu0
      %1869 = vmatprep.mubr.f32.mxu0 %v451
      %1870 = vmatmul.mubr.f32.gmra.mrb[0].mxu0 %v524
      %v1871 = vpop.f32.mrb[0].mxu0
      %v1872 = vadd.f32 0.0, %v1871
      %v1873 = vpop.f32.mrb[0].mxu0
      %1874 = vmatprep.mubr.f32.mxu0 %v452
      %1875 = vmatmul.mubr.f32.gmra.mrb[0].mxu0 %v589
      %v1876 = vpop.f32.mrb[0].mxu0
      %v1877 = vadd.f32 0.0, %v1876
      %v1878 = vpop.f32.mrb[0].mxu0
      %1879 = vmatprep.mubr.f32.mxu0 %v453
      %1880 = vmatmul.mubr.f32.gmra.mrb[0].mxu0 %v527
      %v1881 = vpop.f32.mrb[0].mxu0
      %v1882 = vadd.f32 0.0, %v1881
      %v1883 = vpop.f32.mrb[0].mxu0
      %1884 = vmatprep.mubr.f32.mxu0 %v454
      %1885 = vmatmul.mubr.f32.gmra.mrb[0].mxu0 %v590
      %v1886 = vpop.f32.mrb[0].mxu0
      %v1887 = vadd.f32 0.0, %v1886
      %v1888 = vpop.f32.mrb[0].mxu0
      %1889 = vmatprep.mubr.f32.mxu0 %v455
      %1890 = vmatmul.mubr.f32.gmra.mrb[0].mxu0 %v530
      %v1891 = vpop.f32.mrb[0].mxu0
      %v1892 = vadd.f32 0.0, %v1891
      %v1893 = vpop.f32.mrb[0].mxu0
      %1894 = vmatprep.mubr.f32.mxu0 %v456
      %1895 = vmatmul.mubr.f32.gmra.mrb[0].mxu0 %v591
      %v1896 = vpop.f32.mrb[0].mxu0
      %v1897 = vadd.f32 0.0, %v1896
      %v1898 = vpop.f32.mrb[0].mxu0
      %1899 = vmatprep.mubr.f32.mxu0 %v457
      %1900 = vmatmul.mubr.f32.gmra.mrb[0].mxu0 %v533
      %v1901 = vpop.f32.mrb[0].mxu0
      %v1902 = vadd.f32 0.0, %v1901
      %v1903 = vpop.f32.mrb[0].mxu0
      %1904 = vmatprep.mubr.f32.mxu0 %v458
      %1905 = vmatmul.mubr.f32.gmra.mrb[0].mxu0 %v592
      %v1906 = vpop.f32.mrb[0].mxu0
      %v1907 = vadd.f32 0.0, %v1906
      %v1908 = vpop.f32.mrb[0].mxu0
      %1909 = vmatprep.mubr.f32.mxu0 %v459
      %1910 = vmatmul.mubr.f32.gmra.mrb[0].mxu0 %v536
      %v1911 = vpop.f32.mrb[0].mxu0
      %v1912 = vadd.f32 0.0, %v1911
      %v1913 = vpop.f32.mrb[0].mxu0
      %1914 = vmatprep.mubr.f32.mxu0 %v460
      %1915 = vmatmul.mubr.f32.gmra.mrb[0].mxu0 %v593
      %v1916 = vpop.f32.mrb[0].mxu0
      %v1917 = vadd.f32 0.0, %v1916
      %v1918 = vpop.f32.mrb[0].mxu0
      %1919 = vmatprep.mubr.f32.mxu0 %v461
      %1920 = vmatmul.mubr.f32.gmra.mrb[0].mxu0 %v539
      %v1921 = vpop.f32.mrb[0].mxu0
      %v1922 = vadd.f32 0.0, %v1921
      %v1923 = vpop.f32.mrb[0].mxu0
      %1924 = vmatprep.mubr.f32.mxu0 %v462
      %1925 = vmatmul.mubr.f32.gmra.mrb[0].mxu0 %v594
      %v1926 = vpop.f32.mrb[0].mxu0
      %v1927 = vadd.f32 0.0, %v1926
      %v1928 = vpop.f32.mrb[0].mxu0
      %1929 = vmatprep.mubr.f32.mxu0 %v463
      %1930 = vmatmul.mubr.f32.gmra.mrb[0].mxu0 %v542
      %v1931 = vpop.f32.mrb[0].mxu0
      %v1932 = vadd.f32 0.0, %v1931
      %v1933 = vpop.f32.mrb[0].mxu0
      %1934 = vmatprep.mubr.f32.mxu0 %v464
      %1935 = vmatmul.mubr.f32.gmra.mrb[0].mxu0 %v595
      %v1936 = vpop.f32.mrb[0].mxu0
      %v1937 = vadd.f32 0.0, %v1936
      %v1938 = vpop.f32.mrb[0].mxu0
      %1939 = vmatprep.mubr.f32.mxu0 %v465
      %1940 = vmatmul.mubr.f32.gmra.mrb[0].mxu0 %v545
      %v1941 = vpop.f32.mrb[0].mxu0
      %v1942 = vadd.f32 0.0, %v1941
      %v1943 = vpop.f32.mrb[0].mxu0
      %1944 = vmatprep.mubr.f32.mxu0 %v466
      %1945 = vmatmul.mubr.f32.gmra.mrb[0].mxu0 %v596
      %v1946 = vpop.f32.mrb[0].mxu0
      %v1947 = vadd.f32 0.0, %v1946
      %v1948 = vpop.f32.mrb[0].mxu0
      %1949 = vmatprep.mubr.f32.mxu0 %v467
      %1950 = vmatmul.mubr.f32.gmra.mrb[0].mxu0 %v548
      %v1951 = vpop.f32.mrb[0].mxu0
      %v1952 = vadd.f32 0.0, %v1951
      %v1953 = vpop.f32.mrb[0].mxu0
      %1954 = vmatprep.mubr.f32.mxu0 0.0
      %1955 = vmatmul.mubr.f32.gmra.mrb[0].mxu0 0.0
      %v1956 = vpop.f32.mrb[0].mxu0
      %v1957 = vadd.f32 0.0, %v1956
      %v1958 = vpop.f32.mrb[0].mxu0
      %1959 = vmatprep.mubr.f32.mxu0 0.0
      %1960 = vmatmul.mubr.f32.gmra.mrb[0].mxu0 0.0
      %v1961 = vpop.f32.mrb[0].mxu0
      %v1962 = vadd.f32 0.0, %v1961
      %v1963 = vpop.f32.mrb[0].mxu0
      %1964 = vdwg.mxu0
      %1965 = vmatprep.subr.mxu0 0.0
      %1966 = vmatpush1.msra.mxu0 %v1724
      %1967 = vmatprep.subr.mxu0 0.0
      %1968 = vmatpush1.msra.mxu0 %v1725
      %1969 = vmatprep.subr.mxu0 0.0
      %1970 = vmatpush1.msra.mxu0 %v1726
      %1971 = vmatprep.subr.mxu0 0.0
      %1972 = vmatpush1.msra.mxu0 %v1727
      %1973 = vmatprep.subr.mxu0 0.0
      %1974 = vmatpush1.msra.mxu0 %v1728
      %1975 = vmatprep.subr.mxu0 0.0
      %1976 = vmatpush1.msra.mxu0 %v1729
      %1977 = vmatprep.subr.mxu0 0.0
      %1978 = vmatpush1.msra.mxu0 %v1730
      %1979 = vmatprep.subr.mxu0 0.0
      %1980 = vmatpush1.msra.mxu0 %v1731
      %1981 = vmatprep.subr.mxu0 0.0
      %1982 = vmatpush1.msra.mxu0 %v1732
      %1983 = vmatprep.subr.mxu0 0.0
      %1984 = vmatpush1.msra.mxu0 %v1733
      %1985 = vmatprep.subr.mxu0 0.0
      %1986 = vmatpush1.msra.mxu0 %v1734
      %1987 = vmatprep.subr.mxu0 0.0
      %1988 = vmatpush1.msra.mxu0 %v1735
      %1989 = vmatprep.subr.mxu0 0.0
      %1990 = vmatpush1.msra.mxu0 %v1736
      %1991 = vmatprep.subr.mxu0 0.0
      %1992 = vmatpush1.msra.mxu0 %v1737
      %1993 = vmatprep.subr.mxu0 0.0
      %1994 = vmatpush1.msra.mxu0 %v1738
      %1995 = vmatprep.subr.mxu0 0.0
      %1996 = vmatpush1.msra.mxu0 %v1739
      %1997 = vmatprep.subr.mxu0 0.0
      %1998 = vmatpush1.msra.mxu0 0.0
      %1999 = vmatprep.subr.mxu0 0.0
      %2000 = vmatpush1.msra.mxu0 0.0
      %2001 = vmatprep.subr.mxu0 0.0
      %2002 = vmatpush1.msra.mxu0 0.0
      %2003 = vmatprep.subr.mxu0 0.0
      %2004 = vmatpush1.msra.mxu0 0.0
      %2005 = vmatprep.subr.mxu0 0.0
      %2006 = vmatpush1.msra.mxu0 0.0
      %2007 = vmatprep.subr.mxu0 0.0
      %2008 = vmatpush1.msra.mxu0 0.0
      %2009 = vmatprep.subr.mxu0 0.0
      %2010 = vmatpush1.msra.mxu0 0.0
      %2011 = vmatprep.subr.mxu0 0.0
      %2012 = vmatpush1.msra.mxu0 0.0
      %2013 = vmatprep.subr.mxu0 0.0
      %2014 = vmatpush1.msra.mxu0 0.0
      %2015 = vmatprep.subr.mxu0 0.0
      %2016 = vmatpush1.msra.mxu0 0.0
      %2017 = vmatprep.subr.mxu0 0.0
      %2018 = vmatpush1.msra.mxu0 0.0
      %2019 = vmatprep.subr.mxu0 0.0
      %2020 = vmatpush1.msra.mxu0 0.0
      %2021 = vmatprep.subr.mxu0 0.0
      %2022 = vmatpush1.msra.mxu0 0.0
      %2023 = vmatprep.subr.mxu0 0.0
      %2024 = vmatpush1.msra.mxu0 0.0
      %2025 = vmatprep.subr.mxu0 0.0
      %2026 = vmatpush1.msra.mxu0 0.0
      %2027 = vmatprep.subr.mxu0 0.0
      %2028 = vmatpush1.msra.mxu0 0.0
      %2029 = vmatprep.mubr.f32.mxu0 0.0
      %2030 = vmatmul.mubr.f32.gmra.mrb[0].mxu0 %v603
      %v2031 = vpop.f32.mrb[0].mxu0
      %v2032 = vadd.f32 %v1807, %v2031
      %v2033 = vpop.f32.mrb[0].mxu0
      %2034 = vmatprep.mubr.f32.mxu0 0.0
      %2035 = vmatmul.mubr.f32.gmra.mrb[0].mxu0 %v679
      %v2036 = vpop.f32.mrb[0].mxu0
      %v2037 = vadd.f32 %v1812, %v2036
      %v2038 = vpop.f32.mrb[0].mxu0
      %2039 = vmatprep.mubr.f32.mxu0 0.0
      %2040 = vmatmul.mubr.f32.gmra.mrb[0].mxu0 %v606
      %v2041 = vpop.f32.mrb[0].mxu0
      %v2042 = vadd.f32 %v1817, %v2041
      %v2043 = vpop.f32.mrb[0].mxu0
      %2044 = vmatprep.mubr.f32.mxu0 0.0
      %2045 = vmatmul.mubr.f32.gmra.mrb[0].mxu0 %v680
      %v2046 = vpop.f32.mrb[0].mxu0
      %v2047 = vadd.f32 %v1822, %v2046
      %v2048 = vpop.f32.mrb[0].mxu0
      %2049 = vmatprep.mubr.f32.mxu0 0.0
      %2050 = vmatmul.mubr.f32.gmra.mrb[0].mxu0 %v609
      %v2051 = vpop.f32.mrb[0].mxu0
      %v2052 = vadd.f32 %v1827, %v2051
      %v2053 = vpop.f32.mrb[0].mxu0
      %2054 = vmatprep.mubr.f32.mxu0 0.0
      %2055 = vmatmul.mubr.f32.gmra.mrb[0].mxu0 %v681
      %v2056 = vpop.f32.mrb[0].mxu0
      %v2057 = vadd.f32 %v1832, %v2056
      %v2058 = vpop.f32.mrb[0].mxu0
      %2059 = vmatprep.mubr.f32.mxu0 0.0
      %2060 = vmatmul.mubr.f32.gmra.mrb[0].mxu0 %v612
      %v2061 = vpop.f32.mrb[0].mxu0
      %v2062 = vadd.f32 %v1837, %v2061
      %v2063 = vpop.f32.mrb[0].mxu0
      %2064 = vmatprep.mubr.f32.mxu0 0.0
      %2065 = vmatmul.mubr.f32.gmra.mrb[0].mxu0 %v682
      %v2066 = vpop.f32.mrb[0].mxu0
      %v2067 = vadd.f32 %v1842, %v2066
      %v2068 = vpop.f32.mrb[0].mxu0
      %2069 = vmatprep.mubr.f32.mxu0 0.0
      %2070 = vmatmul.mubr.f32.gmra.mrb[0].mxu0 %v615
      %v2071 = vpop.f32.mrb[0].mxu0
      %v2072 = vadd.f32 %v1847, %v2071
      %v2073 = vpop.f32.mrb[0].mxu0
      %2074 = vmatprep.mubr.f32.mxu0 0.0
      %2075 = vmatmul.mubr.f32.gmra.mrb[0].mxu0 %v683
      %v2076 = vpop.f32.mrb[0].mxu0
      %v2077 = vadd.f32 %v1852, %v2076
      %v2078 = vpop.f32.mrb[0].mxu0
      %2079 = vmatprep.mubr.f32.mxu0 0.0
      %2080 = vmatmul.mubr.f32.gmra.mrb[0].mxu0 %v618
      %v2081 = vpop.f32.mrb[0].mxu0
      %v2082 = vadd.f32 %v1857, %v2081
      %v2083 = vpop.f32.mrb[0].mxu0
      %2084 = vmatprep.mubr.f32.mxu0 0.0
      %2085 = vmatmul.mubr.f32.gmra.mrb[0].mxu0 %v684
      %v2086 = vpop.f32.mrb[0].mxu0
      %v2087 = vadd.f32 %v1862, %v2086
      %v2088 = vpop.f32.mrb[0].mxu0
      %2089 = vmatprep.mubr.f32.mxu0 0.0
      %2090 = vmatmul.mubr.f32.gmra.mrb[0].mxu0 %v621
      %v2091 = vpop.f32.mrb[0].mxu0
      %v2092 = vadd.f32 %v1867, %v2091
      %v2093 = vpop.f32.mrb[0].mxu0
      %2094 = vmatprep.mubr.f32.mxu0 0.0
      %2095 = vmatmul.mubr.f32.gmra.mrb[0].mxu0 %v685
      %v2096 = vpop.f32.mrb[0].mxu0
      %v2097 = vadd.f32 %v1872, %v2096
      %v2098 = vpop.f32.mrb[0].mxu0
      %2099 = vmatprep.mubr.f32.mxu0 0.0
      %2100 = vmatmul.mubr.f32.gmra.mrb[0].mxu0 %v624
      %v2101 = vpop.f32.mrb[0].mxu0
      %v2102 = vadd.f32 %v1877, %v2101
      %v2103 = vpop.f32.mrb[0].mxu0
      %2104 = vmatprep.mubr.f32.mxu0 0.0
      %2105 = vmatmul.mubr.f32.gmra.mrb[0].mxu0 %v686
      %v2106 = vpop.f32.mrb[0].mxu0
      %v2107 = vadd.f32 %v1882, %v2106
      %v2108 = vpop.f32.mrb[0].mxu0
      %2109 = vmatprep.mubr.f32.mxu0 0.0
      %2110 = vmatmul.mubr.f32.gmra.mrb[0].mxu0 %v627
      %v2111 = vpop.f32.mrb[0].mxu0
      %v2112 = vadd.f32 %v1887, %v2111
      %v2113 = vpop.f32.mrb[0].mxu0
      %2114 = vmatprep.mubr.f32.mxu0 0.0
      %2115 = vmatmul.mubr.f32.gmra.mrb[0].mxu0 %v687
      %v2116 = vpop.f32.mrb[0].mxu0
      %v2117 = vadd.f32 %v1892, %v2116
      %v2118 = vpop.f32.mrb[0].mxu0
      %2119 = vmatprep.mubr.f32.mxu0 0.0
      %2120 = vmatmul.mubr.f32.gmra.mrb[0].mxu0 %v630
      %v2121 = vpop.f32.mrb[0].mxu0
      %v2122 = vadd.f32 %v1897, %v2121
      %v2123 = vpop.f32.mrb[0].mxu0
      %2124 = vmatprep.mubr.f32.mxu0 0.0
      %2125 = vmatmul.mubr.f32.gmra.mrb[0].mxu0 %v688
      %v2126 = vpop.f32.mrb[0].mxu0
      %v2127 = vadd.f32 %v1902, %v2126
      %v2128 = vpop.f32.mrb[0].mxu0
      %2129 = vmatprep.mubr.f32.mxu0 0.0
      %2130 = vmatmul.mubr.f32.gmra.mrb[0].mxu0 %v633
      %v2131 = vpop.f32.mrb[0].mxu0
      %v2132 = vadd.f32 %v1907, %v2131
      %v2133 = vpop.f32.mrb[0].mxu0
      %2134 = vmatprep.mubr.f32.mxu0 0.0
      %2135 = vmatmul.mubr.f32.gmra.mrb[0].mxu0 %v689
      %v2136 = vpop.f32.mrb[0].mxu0
      %v2137 = vadd.f32 %v1912, %v2136
      %v2138 = vpop.f32.mrb[0].mxu0
      %2139 = vmatprep.mubr.f32.mxu0 0.0
      %2140 = vmatmul.mubr.f32.gmra.mrb[0].mxu0 %v636
      %v2141 = vpop.f32.mrb[0].mxu0
      %v2142 = vadd.f32 %v1917, %v2141
      %v2143 = vpop.f32.mrb[0].mxu0
      %2144 = vmatprep.mubr.f32.mxu0 0.0
      %2145 = vmatmul.mubr.f32.gmra.mrb[0].mxu0 %v690
      %v2146 = vpop.f32.mrb[0].mxu0
      %v2147 = vadd.f32 %v1922, %v2146
      %v2148 = vpop.f32.mrb[0].mxu0
      %2149 = vmatprep.mubr.f32.mxu0 0.0
      %2150 = vmatmul.mubr.f32.gmra.mrb[0].mxu0 %v639
      %v2151 = vpop.f32.mrb[0].mxu0
      %v2152 = vadd.f32 %v1927, %v2151
      %v2153 = vpop.f32.mrb[0].mxu0
      %2154 = vmatprep.mubr.f32.mxu0 0.0
      %2155 = vmatmul.mubr.f32.gmra.mrb[0].mxu0 %v691
      %v2156 = vpop.f32.mrb[0].mxu0
      %v2157 = vadd.f32 %v1932, %v2156
      %v2158 = vpop.f32.mrb[0].mxu0
      %2159 = vmatprep.mubr.f32.mxu0 0.0
      %2160 = vmatmul.mubr.f32.gmra.mrb[0].mxu0 %v642
      %v2161 = vpop.f32.mrb[0].mxu0
      %v2162 = vadd.f32 %v1937, %v2161
      %v2163 = vpop.f32.mrb[0].mxu0
      %2164 = vmatprep.mubr.f32.mxu0 0.0
      %2165 = vmatmul.mubr.f32.gmra.mrb[0].mxu0 %v692
      %v2166 = vpop.f32.mrb[0].mxu0
      %v2167 = vadd.f32 %v1942, %v2166
      %v2168 = vpop.f32.mrb[0].mxu0
      %2169 = vmatprep.mubr.f32.mxu0 0.0
      %2170 = vmatmul.mubr.f32.gmra.mrb[0].mxu0 %v645
      %v2171 = vpop.f32.mrb[0].mxu0
      %v2172 = vadd.f32 %v1947, %v2171
      %v2173 = vpop.f32.mrb[0].mxu0
      %2174 = vmatprep.mubr.f32.mxu0 0.0
      %2175 = vmatmul.mubr.f32.gmra.mrb[0].mxu0 %v693
      %v2176 = vpop.f32.mrb[0].mxu0
      %v2177 = vadd.f32 %v1952, %v2176
      %v2178 = vpop.f32.mrb[0].mxu0
      %2179 = vmatprep.mubr.f32.mxu0 0.0
      %2180 = vmatmul.mubr.f32.gmra.mrb[0].mxu0 0.0
      %v2181 = vpop.f32.mrb[0].mxu0
      %v2182 = vadd.f32 %v1957, %v2181
      %v2183 = vpop.f32.mrb[0].mxu0
      %2184 = vmatprep.mubr.f32.mxu0 0.0
      %2185 = vmatmul.mubr.f32.gmra.mrb[0].mxu0 0.0
      %v2186 = vpop.f32.mrb[0].mxu0
      %v2187 = vadd.f32 %v1962, %v2186
      %v2188 = vpop.f32.mrb[0].mxu0
      %2189 = vdwg.mxu0
      %v2190 = vadd.f32 %v1533, %v2032
      %v2191 = vadd.f32 %v1538, %v2037
      %v2192 = vadd.f32 %v1543, %v2042
      %v2193 = vadd.f32 %v1548, %v2047
      %v2194 = vadd.f32 %v1553, %v2052
      %v2195 = vadd.f32 %v1558, %v2057
      %v2196 = vadd.f32 %v1563, %v2062
      %v2197 = vadd.f32 %v1568, %v2067
      %v2198 = vadd.f32 %v1573, %v2072
      %v2199 = vadd.f32 %v1578, %v2077
      %v2200 = vadd.f32 %v1583, %v2082
      %v2201 = vadd.f32 %v1588, %v2087
      %v2202 = vadd.f32 %v1593, %v2092
      %v2203 = vadd.f32 %v1598, %v2097
      %v2204 = vadd.f32 %v1603, %v2102
      %v2205 = vadd.f32 %v1608, %v2107
      %v2206 = vadd.f32 %v1613, %v2112
      %v2207 = vadd.f32 %v1618, %v2117
      %v2208 = vadd.f32 %v1623, %v2122
      %v2209 = vadd.f32 %v1628, %v2127
      %v2210 = vadd.f32 %v1633, %v2132
      %v2211 = vadd.f32 %v1638, %v2137
      %v2212 = vadd.f32 %v1643, %v2142
      %v2213 = vadd.f32 %v1648, %v2147
      %v2214 = vadd.f32 %v1653, %v2152
      %v2215 = vadd.f32 %v1658, %v2157
      %v2216 = vadd.f32 %v1663, %v2162
      %v2217 = vadd.f32 %v1668, %v2167
      %v2218 = vadd.f32 %v1673, %v2172
      %v2219 = vadd.f32 %v1678, %v2177
      %v2220 = vadd.f32 %v1683, %v2182
      %v2221 = vadd.f32 %v1688, %v2187
      %v2222 = vld [vmem:[%s313] sm:$0xff]
      %v2223 = vld [vmem:[%s313 + $0x8] sm:$0xff]
      %v2224 = vld [vmem:[%s313 + $0x10] sm:$0xff]
      %v2225 = vld [vmem:[%s313 + $0x18] sm:$0xff]
      %v2226 = vld [vmem:[%s313 + $0x20] sm:$0xff]
      %v2227 = vld [vmem:[%s313 + $0x28] sm:$0xff]
      %v2228 = vld [vmem:[%s313 + $0x30] sm:$0xff]
      %v2229 = vld [vmem:[%s313 + $0x38] sm:$0xff]
      %v2230 = vld [vmem:[%s313 + $0x40] sm:$0xff]
      %v2231 = vld [vmem:[%s313 + $0x48] sm:$0xff]
      %v2232 = vld [vmem:[%s313 + $0x50] sm:$0xff]
      %v2233 = vld [vmem:[%s313 + $0x58] sm:$0xff]
      %v2234 = vld [vmem:[%s313 + $0x60] sm:$0xff]
      %v2235 = vld [vmem:[%s313 + $0x68] sm:$0xff]
      %v2236 = vld [vmem:[%s313 + $0x70] sm:$0xff]
      %v2237 = vld [vmem:[%s313 + $0x78] sm:$0xff]
      %v2238 = vld [vmem:[%s313 + $0x80] sm:$0xff]
      %v2239 = vld [vmem:[%s313 + $0x88] sm:$0xff]
      %v2240 = vld [vmem:[%s313 + $0x90] sm:$0xff]
      %v2241 = vld [vmem:[%s313 + $0x98] sm:$0xff]
      %v2242 = vld [vmem:[%s313 + $0xa0] sm:$0xff]
      %v2243 = vld [vmem:[%s313 + $0xa8] sm:$0xff]
      %v2244 = vld [vmem:[%s313 + $0xb0] sm:$0xff]
      %v2245 = vld [vmem:[%s313 + $0xb8] sm:$0xff]
      %v2246 = vld [vmem:[%s313 + $0xc0] sm:$0xff]
      %v2247 = vld [vmem:[%s313 + $0xc8] sm:$0xff]
      %v2248 = vld [vmem:[%s313 + $0xd0] sm:$0xff]
      %v2249 = vld [vmem:[%s313 + $0xd8] sm:$0xff]
      %v2250 = vld [vmem:[%s313 + $0xe0] sm:$0xff]
      %v2251 = vld [vmem:[%s313 + $0xe8] sm:$0xff]
      %v2252 = vld [vmem:[%s313 + $0xf0] sm:$0xff]
      %v2253 = vld [vmem:[%s313 + $0xf8] sm:$0xff]
      %v2254 = vld [vmem:[%s317] sm:$0xff]
      %v2255 = vld [vmem:[%s317 + $0x8] sm:$0xff]
      %v2256 = vld [vmem:[%s317 + $0x10] sm:$0xff]
      %v2257 = vld [vmem:[%s317 + $0x18] sm:$0xff]
      %v2258 = vld [vmem:[%s317 + $0x20] sm:$0xff]
      %v2259 = vld [vmem:[%s317 + $0x28] sm:$0xff]
      %v2260 = vld [vmem:[%s317 + $0x30] sm:$0xff]
      %v2261 = vld [vmem:[%s317 + $0x38] sm:$0xff]
      %v2262 = vld [vmem:[%s317 + $0x40] sm:$0xff]
      %v2263 = vld [vmem:[%s317 + $0x48] sm:$0xff]
      %v2264 = vld [vmem:[%s317 + $0x50] sm:$0xff]
      %v2265 = vld [vmem:[%s317 + $0x58] sm:$0xff]
      %v2266 = vld [vmem:[%s317 + $0x60] sm:$0xff]
      %v2267 = vld [vmem:[%s317 + $0x68] sm:$0xff]
      %v2268 = vld [vmem:[%s317 + $0x70] sm:$0xff]
      %v2269 = vld [vmem:[%s317 + $0x78] sm:$0xff]
      %2270 = vmatprep.subr.mxu0 0.0
      %2271 = vmatpush1.msra.mxu0 %v2254
      %2272 = vmatprep.subr.mxu0 0.0
      %2273 = vmatpush1.msra.mxu0 %v2255
      %2274 = vmatprep.subr.mxu0 0.0
      %2275 = vmatpush1.msra.mxu0 %v2256
      %2276 = vmatprep.subr.mxu0 0.0
      %2277 = vmatpush1.msra.mxu0 %v2257
      %2278 = vmatprep.subr.mxu0 0.0
      %2279 = vmatpush1.msra.mxu0 %v2258
      %2280 = vmatprep.subr.mxu0 0.0
      %2281 = vmatpush1.msra.mxu0 %v2259
      %2282 = vmatprep.subr.mxu0 0.0
      %2283 = vmatpush1.msra.mxu0 %v2260
      %2284 = vmatprep.subr.mxu0 0.0
      %2285 = vmatpush1.msra.mxu0 %v2261
      %2286 = vmatprep.subr.mxu0 0.0
      %2287 = vmatpush1.msra.mxu0 %v2262
      %2288 = vmatprep.subr.mxu0 0.0
      %2289 = vmatpush1.msra.mxu0 %v2263
      %2290 = vmatprep.subr.mxu0 0.0
      %2291 = vmatpush1.msra.mxu0 %v2264
      %2292 = vmatprep.subr.mxu0 0.0
      %2293 = vmatpush1.msra.mxu0 %v2265
      %2294 = vmatprep.subr.mxu0 0.0
      %2295 = vmatpush1.msra.mxu0 %v2266
      %2296 = vmatprep.subr.mxu0 0.0
      %2297 = vmatpush1.msra.mxu0 %v2267
      %2298 = vmatprep.subr.mxu0 0.0
      %2299 = vmatpush1.msra.mxu0 %v2268
      %2300 = vmatprep.subr.mxu0 0.0
      %2301 = vmatpush1.msra.mxu0 %v2269
      %2302 = vmatprep.subr.mxu0 0.0
      %2303 = vmatpush1.msra.mxu0 0.0
      %2304 = vmatprep.subr.mxu0 0.0
      %2305 = vmatpush1.msra.mxu0 0.0
      %2306 = vmatprep.subr.mxu0 0.0
      %2307 = vmatpush1.msra.mxu0 0.0
      %2308 = vmatprep.subr.mxu0 0.0
      %2309 = vmatpush1.msra.mxu0 0.0
      %2310 = vmatprep.subr.mxu0 0.0
      %2311 = vmatpush1.msra.mxu0 0.0
      %2312 = vmatprep.subr.mxu0 0.0
      %2313 = vmatpush1.msra.mxu0 0.0
      %2314 = vmatprep.subr.mxu0 0.0
      %2315 = vmatpush1.msra.mxu0 0.0
      %2316 = vmatprep.subr.mxu0 0.0
      %2317 = vmatpush1.msra.mxu0 0.0
      %2318 = vmatprep.subr.mxu0 0.0
      %2319 = vmatpush1.msra.mxu0 0.0
      %2320 = vmatprep.subr.mxu0 0.0
      %2321 = vmatpush1.msra.mxu0 0.0
      %2322 = vmatprep.subr.mxu0 0.0
      %2323 = vmatpush1.msra.mxu0 0.0
      %2324 = vmatprep.subr.mxu0 0.0
      %2325 = vmatpush1.msra.mxu0 0.0
      %2326 = vmatprep.subr.mxu0 0.0
      %2327 = vmatpush1.msra.mxu0 0.0
      %2328 = vmatprep.subr.mxu0 0.0
      %2329 = vmatpush1.msra.mxu0 0.0
      %2330 = vmatprep.subr.mxu0 0.0
      %2331 = vmatpush1.msra.mxu0 0.0
      %2332 = vmatprep.subr.mxu0 0.0
      %2333 = vmatpush1.msra.mxu0 0.0
      %2334 = vmatprep.mubr.f32.mxu0 0.0
      %2335 = vmatmul.mubr.f32.gmra.mrb[0].mxu0 %v2222
      %v2336 = vpop.f32.mrb[0].mxu0
      %v2337 = vadd.f32 0.0, %v2336
      %v2338 = vpop.f32.mrb[0].mxu0
      %2339 = vmatprep.mubr.f32.mxu0 0.0
      %2340 = vmatmul.mubr.f32.gmra.mrb[0].mxu0 %v2223
      %v2341 = vpop.f32.mrb[0].mxu0
      %v2342 = vadd.f32 0.0, %v2341
      %v2343 = vpop.f32.mrb[0].mxu0
      %2344 = vmatprep.mubr.f32.mxu0 0.0
      %2345 = vmatmul.mubr.f32.gmra.mrb[0].mxu0 %v2224
      %v2346 = vpop.f32.mrb[0].mxu0
      %v2347 = vadd.f32 0.0, %v2346
      %v2348 = vpop.f32.mrb[0].mxu0
      %2349 = vmatprep.mubr.f32.mxu0 0.0
      %2350 = vmatmul.mubr.f32.gmra.mrb[0].mxu0 %v2225
      %v2351 = vpop.f32.mrb[0].mxu0
      %v2352 = vadd.f32 0.0, %v2351
      %v2353 = vpop.f32.mrb[0].mxu0
      %2354 = vmatprep.mubr.f32.mxu0 0.0
      %2355 = vmatmul.mubr.f32.gmra.mrb[0].mxu0 %v2226
      %v2356 = vpop.f32.mrb[0].mxu0
      %v2357 = vadd.f32 0.0, %v2356
      %v2358 = vpop.f32.mrb[0].mxu0
      %2359 = vmatprep.mubr.f32.mxu0 0.0
      %2360 = vmatmul.mubr.f32.gmra.mrb[0].mxu0 %v2227
      %v2361 = vpop.f32.mrb[0].mxu0
      %v2362 = vadd.f32 0.0, %v2361
      %v2363 = vpop.f32.mrb[0].mxu0
      %2364 = vmatprep.mubr.f32.mxu0 0.0
      %2365 = vmatmul.mubr.f32.gmra.mrb[0].mxu0 %v2228
      %v2366 = vpop.f32.mrb[0].mxu0
      %v2367 = vadd.f32 0.0, %v2366
      %v2368 = vpop.f32.mrb[0].mxu0
      %2369 = vmatprep.mubr.f32.mxu0 0.0
      %2370 = vmatmul.mubr.f32.gmra.mrb[0].mxu0 %v2229
      %v2371 = vpop.f32.mrb[0].mxu0
      %v2372 = vadd.f32 0.0, %v2371
      %v2373 = vpop.f32.mrb[0].mxu0
      %2374 = vmatprep.mubr.f32.mxu0 0.0
      %2375 = vmatmul.mubr.f32.gmra.mrb[0].mxu0 %v2230
      %v2376 = vpop.f32.mrb[0].mxu0
      %v2377 = vadd.f32 0.0, %v2376
      %v2378 = vpop.f32.mrb[0].mxu0
      %2379 = vmatprep.mubr.f32.mxu0 0.0
      %2380 = vmatmul.mubr.f32.gmra.mrb[0].mxu0 %v2231
      %v2381 = vpop.f32.mrb[0].mxu0
      %v2382 = vadd.f32 0.0, %v2381
      %v2383 = vpop.f32.mrb[0].mxu0
      %2384 = vmatprep.mubr.f32.mxu0 0.0
      %2385 = vmatmul.mubr.f32.gmra.mrb[0].mxu0 %v2232
      %v2386 = vpop.f32.mrb[0].mxu0
      %v2387 = vadd.f32 0.0, %v2386
      %v2388 = vpop.f32.mrb[0].mxu0
      %2389 = vmatprep.mubr.f32.mxu0 0.0
      %2390 = vmatmul.mubr.f32.gmra.mrb[0].mxu0 %v2233
      %v2391 = vpop.f32.mrb[0].mxu0
      %v2392 = vadd.f32 0.0, %v2391
      %v2393 = vpop.f32.mrb[0].mxu0
      %2394 = vmatprep.mubr.f32.mxu0 0.0
      %2395 = vmatmul.mubr.f32.gmra.mrb[0].mxu0 %v2234
      %v2396 = vpop.f32.mrb[0].mxu0
      %v2397 = vadd.f32 0.0, %v2396
      %v2398 = vpop.f32.mrb[0].mxu0
      %2399 = vmatprep.mubr.f32.mxu0 0.0
      %2400 = vmatmul.mubr.f32.gmra.mrb[0].mxu0 %v2235
      %v2401 = vpop.f32.mrb[0].mxu0
      %v2402 = vadd.f32 0.0, %v2401
      %v2403 = vpop.f32.mrb[0].mxu0
      %2404 = vmatprep.mubr.f32.mxu0 0.0
      %2405 = vmatmul.mubr.f32.gmra.mrb[0].mxu0 %v2236
      %v2406 = vpop.f32.mrb[0].mxu0
      %v2407 = vadd.f32 0.0, %v2406
      %v2408 = vpop.f32.mrb[0].mxu0
      %2409 = vmatprep.mubr.f32.mxu0 0.0
      %2410 = vmatmul.mubr.f32.gmra.mrb[0].mxu0 %v2237
      %v2411 = vpop.f32.mrb[0].mxu0
      %v2412 = vadd.f32 0.0, %v2411
      %v2413 = vpop.f32.mrb[0].mxu0
      %2414 = vmatprep.mubr.f32.mxu0 0.0
      %2415 = vmatmul.mubr.f32.gmra.mrb[0].mxu0 %v2238
      %v2416 = vpop.f32.mrb[0].mxu0
      %v2417 = vadd.f32 0.0, %v2416
      %v2418 = vpop.f32.mrb[0].mxu0
      %2419 = vmatprep.mubr.f32.mxu0 0.0
      %2420 = vmatmul.mubr.f32.gmra.mrb[0].mxu0 %v2239
      %v2421 = vpop.f32.mrb[0].mxu0
      %v2422 = vadd.f32 0.0, %v2421
      %v2423 = vpop.f32.mrb[0].mxu0
      %2424 = vmatprep.mubr.f32.mxu0 0.0
      %2425 = vmatmul.mubr.f32.gmra.mrb[0].mxu0 %v2240
      %v2426 = vpop.f32.mrb[0].mxu0
      %v2427 = vadd.f32 0.0, %v2426
      %v2428 = vpop.f32.mrb[0].mxu0
      %2429 = vmatprep.mubr.f32.mxu0 0.0
      %2430 = vmatmul.mubr.f32.gmra.mrb[0].mxu0 %v2241
      %v2431 = vpop.f32.mrb[0].mxu0
      %v2432 = vadd.f32 0.0, %v2431
      %v2433 = vpop.f32.mrb[0].mxu0
      %2434 = vmatprep.mubr.f32.mxu0 0.0
      %2435 = vmatmul.mubr.f32.gmra.mrb[0].mxu0 %v2242
      %v2436 = vpop.f32.mrb[0].mxu0
      %v2437 = vadd.f32 0.0, %v2436
      %v2438 = vpop.f32.mrb[0].mxu0
      %2439 = vmatprep.mubr.f32.mxu0 0.0
      %2440 = vmatmul.mubr.f32.gmra.mrb[0].mxu0 %v2243
      %v2441 = vpop.f32.mrb[0].mxu0
      %v2442 = vadd.f32 0.0, %v2441
      %v2443 = vpop.f32.mrb[0].mxu0
      %2444 = vmatprep.mubr.f32.mxu0 0.0
      %2445 = vmatmul.mubr.f32.gmra.mrb[0].mxu0 %v2244
      %v2446 = vpop.f32.mrb[0].mxu0
      %v2447 = vadd.f32 0.0, %v2446
      %v2448 = vpop.f32.mrb[0].mxu0
      %2449 = vmatprep.mubr.f32.mxu0 0.0
      %2450 = vmatmul.mubr.f32.gmra.mrb[0].mxu0 %v2245
      %v2451 = vpop.f32.mrb[0].mxu0
      %v2452 = vadd.f32 0.0, %v2451
      %v2453 = vpop.f32.mrb[0].mxu0
      %2454 = vmatprep.mubr.f32.mxu0 0.0
      %2455 = vmatmul.mubr.f32.gmra.mrb[0].mxu0 %v2246
      %v2456 = vpop.f32.mrb[0].mxu0
      %v2457 = vadd.f32 0.0, %v2456
      %v2458 = vpop.f32.mrb[0].mxu0
      %2459 = vmatprep.mubr.f32.mxu0 0.0
      %2460 = vmatmul.mubr.f32.gmra.mrb[0].mxu0 %v2247
      %v2461 = vpop.f32.mrb[0].mxu0
      %v2462 = vadd.f32 0.0, %v2461
      %v2463 = vpop.f32.mrb[0].mxu0
      %2464 = vmatprep.mubr.f32.mxu0 0.0
      %2465 = vmatmul.mubr.f32.gmra.mrb[0].mxu0 %v2248
      %v2466 = vpop.f32.mrb[0].mxu0
      %v2467 = vadd.f32 0.0, %v2466
      %v2468 = vpop.f32.mrb[0].mxu0
      %2469 = vmatprep.mubr.f32.mxu0 0.0
      %2470 = vmatmul.mubr.f32.gmra.mrb[0].mxu0 %v2249
      %v2471 = vpop.f32.mrb[0].mxu0
      %v2472 = vadd.f32 0.0, %v2471
      %v2473 = vpop.f32.mrb[0].mxu0
      %2474 = vmatprep.mubr.f32.mxu0 0.0
      %2475 = vmatmul.mubr.f32.gmra.mrb[0].mxu0 %v2250
      %v2476 = vpop.f32.mrb[0].mxu0
      %v2477 = vadd.f32 0.0, %v2476
      %v2478 = vpop.f32.mrb[0].mxu0
      %2479 = vmatprep.mubr.f32.mxu0 0.0
      %2480 = vmatmul.mubr.f32.gmra.mrb[0].mxu0 %v2251
      %v2481 = vpop.f32.mrb[0].mxu0
      %v2482 = vadd.f32 0.0, %v2481
      %v2483 = vpop.f32.mrb[0].mxu0
      %2484 = vmatprep.mubr.f32.mxu0 0.0
      %2485 = vmatmul.mubr.f32.gmra.mrb[0].mxu0 %v2252
      %v2486 = vpop.f32.mrb[0].mxu0
      %v2487 = vadd.f32 0.0, %v2486
      %v2488 = vpop.f32.mrb[0].mxu0
      %2489 = vmatprep.mubr.f32.mxu0 0.0
      %2490 = vmatmul.mubr.f32.gmra.mrb[0].mxu0 %v2253
      %v2491 = vpop.f32.mrb[0].mxu0
      %v2492 = vadd.f32 0.0, %v2491
      %v2493 = vpop.f32.mrb[0].mxu0
      %2494 = vdwg.mxu0
      %v2495 = vadd.f32 %v2190, %v2337
      %v2496 = vadd.f32 %v2191, %v2342
      %v2497 = vadd.f32 %v2192, %v2347
      %v2498 = vadd.f32 %v2193, %v2352
      %v2499 = vadd.f32 %v2194, %v2357
      %v2500 = vadd.f32 %v2195, %v2362
      %v2501 = vadd.f32 %v2196, %v2367
      %v2502 = vadd.f32 %v2197, %v2372
      %v2503 = vadd.f32 %v2198, %v2377
      %v2504 = vadd.f32 %v2199, %v2382
      %v2505 = vadd.f32 %v2200, %v2387
      %v2506 = vadd.f32 %v2201, %v2392
      %v2507 = vadd.f32 %v2202, %v2397
      %v2508 = vadd.f32 %v2203, %v2402
      %v2509 = vadd.f32 %v2204, %v2407
      %v2510 = vadd.f32 %v2205, %v2412
      %v2511 = vadd.f32 %v2206, %v2417
      %v2512 = vadd.f32 %v2207, %v2422
      %v2513 = vadd.f32 %v2208, %v2427
      %v2514 = vadd.f32 %v2209, %v2432
      %v2515 = vadd.f32 %v2210, %v2437
      %v2516 = vadd.f32 %v2211, %v2442
      %v2517 = vadd.f32 %v2212, %v2447
      %v2518 = vadd.f32 %v2213, %v2452
      %v2519 = vadd.f32 %v2214, %v2457
      %v2520 = vadd.f32 %v2215, %v2462
      %v2521 = vadd.f32 %v2216, %v2467
      %v2522 = vadd.f32 %v2217, %v2472
      %v2523 = vadd.f32 %v2218, %v2477
      %v2524 = vadd.f32 %v2219, %v2482
      %v2525 = vadd.f32 %v2220, %v2487
      %v2526 = vadd.f32 %v2221, %v2492
      %2527 = vst [vmem:[%s325] sm:$0xff] %v2495
      %2528 = vst [vmem:[%s325 + $0x8] sm:$0xff] %v2496
      %2529 = vst [vmem:[%s325 + $0x10] sm:$0xff] %v2497
      %2530 = vst [vmem:[%s325 + $0x18] sm:$0xff] %v2498
      %2531 = vst [vmem:[%s325 + $0x20] sm:$0xff] %v2499
      %2532 = vst [vmem:[%s325 + $0x28] sm:$0xff] %v2500
      %2533 = vst [vmem:[%s325 + $0x30] sm:$0xff] %v2501
      %2534 = vst [vmem:[%s325 + $0x38] sm:$0xff] %v2502
      %2535 = vst [vmem:[%s325 + $0x40] sm:$0xff] %v2503
      %2536 = vst [vmem:[%s325 + $0x48] sm:$0xff] %v2504
      %2537 = vst [vmem:[%s325 + $0x50] sm:$0xff] %v2505
      %2538 = vst [vmem:[%s325 + $0x58] sm:$0xff] %v2506
      %2539 = vst [vmem:[%s325 + $0x60] sm:$0xff] %v2507
      %2540 = vst [vmem:[%s325 + $0x68] sm:$0xff] %v2508
      %2541 = vst [vmem:[%s325 + $0x70] sm:$0xff] %v2509
      %2542 = vst [vmem:[%s325 + $0x78] sm:$0xff] %v2510
      %2543 = vst [vmem:[%s325 + $0x80] sm:$0xff] %v2511
      %2544 = vst [vmem:[%s325 + $0x88] sm:$0xff] %v2512
      %2545 = vst [vmem:[%s325 + $0x90] sm:$0xff] %v2513
      %2546 = vst [vmem:[%s325 + $0x98] sm:$0xff] %v2514
      %2547 = vst [vmem:[%s325 + $0xa0] sm:$0xff] %v2515
      %2548 = vst [vmem:[%s325 + $0xa8] sm:$0xff] %v2516
      %2549 = vst [vmem:[%s325 + $0xb0] sm:$0xff] %v2517
      %2550 = vst [vmem:[%s325 + $0xb8] sm:$0xff] %v2518
      %2551 = vst [vmem:[%s325 + $0xc0] sm:$0xff] %v2519
      %2552 = vst [vmem:[%s325 + $0xc8] sm:$0xff] %v2520
      %2553 = vst [vmem:[%s325 + $0xd0] sm:$0xff] %v2521
      %2554 = vst [vmem:[%s325 + $0xd8] sm:$0xff] %v2522
      %2555 = vst [vmem:[%s325 + $0xe0] sm:$0xff] %v2523
      %2556 = vst [vmem:[%s325 + $0xe8] sm:$0xff] %v2524
      %2557 = vst [vmem:[%s325 + $0xf0] sm:$0xff] %v2525
      %2558 = vst [vmem:[%s325 + $0xf8] sm:$0xff] %v2526
      %p2559 = scmp.lt.s32.totalorder %s21, 1
      %s2560 = scalar_select %p2559, %s21, 1
      %p2561 = scmp.lt.s32.totalorder %s22, 0
      %s2562 = scalar_select %p2561, %s22, 0
      %s2563 = smul.addr %s2560, 32
      %s2564 = sadd.s32 %s2562, %s2563
      %s2565 = smul.addr %s2564, 8
      %s2566 = scalar_lea.vmem %s6, %s2565
      // Predicated region
      $region45: #{wide_basic_block.3} parent=43 // pred_check
        %p2567 = pneg %p195
      $region46: #{wide_basic_block.3} parent=43 // pred_check_branch
        %2569 = sbr.rel (%p2567) target = $region48
      $region47: #{wide_basic_block.3} parent=43 // pred_region
        _
      $region48: #{wide_basic_block.3} parent=43 // pred_fallthru
        _
    $region44: #{wide_basic_block.3} parent=5 // pred_fallthru
      _
    %p2570 = scmp.le.s32.totalorder 2, %s12
    // Predicated region
    $region49: #{wide_basic_block.3} parent=5 // pred_check
      %p2571 = pneg %p2570
    $region50: #{wide_basic_block.3} parent=5 // pred_check_branch
      %2573 = sbr.rel (%p2571) target = $region52
    $region51: #{wide_basic_block.3} parent=5 // pred_region
      %s2574 = ssub.s32 %s12, 2
      // Predicated region
      $region53: #{wide_basic_block.3} parent=51 // pred_check
        %p2575 = pneg %p201
      $region54: #{wide_basic_block.3} parent=51 // pred_check_branch
        %2577 = sbr.rel (%p2575) target = $region56
      $region55: #{wide_basic_block.3} parent=51 // pred_region
        %p2578 = scmp.lt.s32.totalorder %s23, 1
        %s2579 = scalar_select %p2578, %s23, 1
        %p2580 = scmp.lt.s32.totalorder %s24, 0
        %s2581 = scalar_select %p2580, %s24, 0
        %s2582 = smul.addr %s2579, 32
        %s2583 = sadd.s32 %s2581, %s2582
        %s2584 = smul.addr %s2583, 8
        %s2585 = scalar_lea.vmem %s6, %s2584
      $region56: #{wide_basic_block.3} parent=51 // pred_fallthru
        _
    $region52: #{wide_basic_block.3} parent=5 // pred_fallthru
      _
  $region6: #{wide_basic_block.3} parent=0 // loop_footer
    %s16 = sadd.s32 1, %s12
  $region7: #{wide_basic_block.3} parent=0 // loop_footer_branch
    %11 = sbr.rel target = $region3
  $region8: #{wide_basic_block.3} parent=0 // loop_exit
    _

</llo_original>
